<compile_context>
chip_gen: v7x
topology: tpu7x:2x2x1
jax: 0.10.0
libtpu: 0.0.40
codegen_flags: <defaults>
</compile_context>

<pallas_src>
import functools

import jax
import jax.numpy as jnp
from jax import lax
from jax.experimental import pallas as pl
from jax.experimental.pallas import tpu as pltpu


def _round_up(x, m):
    return ((x + m - 1) // m) * m


# ----------------------------------------------------------------------------
# Fused Pallas kernel: all LSTM layers, all timesteps, and the FC head.
# ----------------------------------------------------------------------------
def fused_lstm_fc_kernel(x_ref, w_ref, b_ref, wfc_ref, bfc_ref, out_ref):
    """Whole LSTMModel forward in one kernel (no grid).

    x_ref   : (T, B, P)       f32   time-major input, features zero-padded to P
    w_ref   : (L, P+Hp, 4Hp)  bf16  per-layer fused [W_ih; W_hh] (transposed);
                                    gate g occupies lane block [g*Hp, (g+1)*Hp)
    b_ref   : (L, 1, 4Hp)     f32   per-layer combined bias (b_ih + b_hh), padded
    wfc_ref : (L, B, Hp, Op)  f32   effective FC weight implementing the exact
                                    `h_out.view(-1, H*L) @ fc.weight.T` semantics
    bfc_ref : (1, Op)         f32   padded fc bias
    out_ref : (B, Op)         f32   lane-dense output (host slices [:, :O])
    """
    T, B, P = x_ref.shape
    L = w_ref.shape[0]
    Hp = w_ref.shape[1] - P

    def step(t, carry):
        hs, cs = carry
        inp = x_ref[t]                                     # (B, P) f32
        new_hs, new_cs = [], []
        for l in range(L):                                 # layers unrolled
            if inp.shape[-1] < P:                          # only if Hp < P (l > 0)
                inp = jnp.concatenate(
                    [inp, jnp.zeros((B, P - inp.shape[-1]), jnp.float32)],
                    axis=-1)
            # Single fused (B, P+Hp) @ (P+Hp, 4Hp) MXU matmul: bf16 in, f32 acc.
            lhs = jnp.concatenate([inp, hs[l]], axis=-1).astype(jnp.bfloat16)
            gates = (jnp.dot(lhs, w_ref[l], preferred_element_type=jnp.float32)
                     + b_ref[l])                           # (B, 4Hp) f32
            # Gate slices are full 128-lane tiles -> no cross-lane relayouts.
            i_g = jax.nn.sigmoid(gates[:, 0 * Hp:1 * Hp])
            f_g = jax.nn.sigmoid(gates[:, 1 * Hp:2 * Hp])
            g_g = jnp.tanh(gates[:, 2 * Hp:3 * Hp])
            o_g = jax.nn.sigmoid(gates[:, 3 * Hp:4 * Hp])
            c_new = f_g * cs[l] + i_g * g_g                # f32 state
            h_new = o_g * jnp.tanh(c_new)
            new_hs.append(h_new)
            new_cs.append(c_new)
            inp = h_new                                    # feeds next layer
        return tuple(new_hs), tuple(new_cs)

    zero = jnp.zeros((B, Hp), jnp.float32)
    hs, _ = lax.fori_loop(
        0, T, step,
        (tuple(zero for _ in range(L)), tuple(zero for _ in range(L))),
        unroll=True)                                       # short fixed loop

    # FC head on the final per-layer hidden states (h_n), reproducing the exact
    # (batch-mixing) `h_out.view(-1, hidden_size*num_layers)` of the reference:
    # flat row r = (l*B + b) // L receives h_n[l, b, :] at col ((l*B+b)%L)*H.
    rows = [bfc_ref[...] for _ in range(B)]                # each (1, Op)
    for l in range(L):
        for b in range(B):
            r = (l * B + b) // L
            rows[r] = rows[r] + jnp.dot(hs[l][b:b + 1, :], wfc_ref[l, b],
                                        preferred_element_type=jnp.float32)
    out_ref[...] = jnp.concatenate(rows, axis=0)           # one lane-dense store


# ----------------------------------------------------------------------------
# Model wrapper
# ----------------------------------------------------------------------------
class LSTMModelPallas:
    def __init__(self, input_dim, hidden_dim, layer_dim, output_dim=1, *, key):
        self.input_size = input_dim
        self.hidden_size = hidden_dim
        self.num_layers = layer_dim
        self.num_classes = output_dim

        H, L = hidden_dim, layer_dim
        self.Hp = _round_up(max(H, 1), 128)                    # padded hidden
        self.P = max(_round_up(max(input_dim, 1), 128), self.Hp)  # padded input
        self.Op = _round_up(max(output_dim, 1), 128)           # padded fc out
        Hp, P, Op = self.Hp, self.P, self.Op

        # ---- PyTorch-layout parameters (kept for the reference check) -------
        scale = 1.0 / float(H) ** 0.5
        self.raw_params = []
        for layer in range(L):
            in_dim = input_dim if layer == 0 else H
            key, k1, k2, k3, k4 = jax.random.split(key, 5)
            w_ih = jax.random.uniform(k1, (4 * H, in_dim), jnp.float32, -scale, scale)
            w_hh = jax.random.uniform(k2, (4 * H, H), jnp.float32, -scale, scale)
            b_ih = jax.random.uniform(k3, (4 * H,), jnp.float32, -scale, scale)
            b_hh = jax.random.uniform(k4, (4 * H,), jnp.float32, -scale, scale)
            self.raw_params.append((w_ih, w_hh, b_ih, b_hh))

        key, kfw, kfb = jax.random.split(key, 3)
        F = H * L
        fc_scale = 1.0 / float(F) ** 0.5
        self.fc_w = jax.random.uniform(kfw, (output_dim, F), jnp.float32,
                                       -fc_scale, fc_scale)   # (O, H*L)
        self.fc_b = jax.random.uniform(kfb, (output_dim,), jnp.float32,
                                       -fc_scale, fc_scale)   # (O,)

        # ---- Kernel layouts: lane-padded, gate-aligned, fused [W_ih; W_hh] --
        w_cat_layers, bias_layers = [], []
        for layer, (w_ih, w_hh, b_ih, b_hh) in enumerate(self.raw_params):
            in_dim = input_dim if layer == 0 else H
            w_cat = jnp.zeros((P + Hp, 4 * Hp), jnp.float32)
            bias = jnp.zeros((1, 4 * Hp), jnp.float32)
            for g in range(4):                                 # i, f, g, o
                w_cat = w_cat.at[:in_dim, g * Hp:g * Hp + H].set(
                    w_ih[g * H:(g + 1) * H, :].T)
                w_cat = w_cat.at[P:P + H, g * Hp:g * Hp + H].set(
                    w_hh[g * H:(g + 1) * H, :].T)
                bias = bias.at[0, g * Hp:g * Hp + H].set(
                    b_ih[g * H:(g + 1) * H] + b_hh[g * H:(g + 1) * H])
            # bf16 weights, f32 accumulation in the kernel.
            w_cat_layers.append(w_cat.astype(jnp.bfloat16))
            bias_layers.append(bias)
        self.w_cat = jnp.stack(w_cat_layers)     # (L, P+Hp, 4Hp) bf16
        self.bias = jnp.stack(bias_layers)       # (L, 1, 4Hp)    f32
        self.fc_b_pad = jnp.zeros((1, Op), jnp.float32).at[0, :output_dim].set(
            self.fc_b)                           # (1, Op)        f32

    @functools.partial(jax.jit, static_argnums=0)
    def __call__(self, x):
        # x: (B, T, input_dim), batch_first=True (PyTorch convention).
        B, T, D = x.shape
        H, L, O = self.hidden_size, self.num_layers, self.num_classes
        Hp, P, Op = self.Hp, self.P, self.Op

        # One-time pad + time-major layout of the raw input (tiny, fused by XLA).
        x_tbd = jnp.transpose(x, (1, 0, 2)).astype(jnp.float32)   # (T, B, D)
        x_pad = jnp.pad(x_tbd, ((0, 0), (0, 0), (0, P - D)))      # (T, B, P)

        # Effective FC weight reproducing `h_out.view(-1, H*L)` exactly
        # (depends on B; built from constants at trace time, folded by XLA).
        wfc = jnp.zeros((L, B, Hp, Op), jnp.float32)
        for l in range(L):
            for b in range(B):
                c0 = ((l * B + b) % L) * H
                wfc = wfc.at[l, b, :H, :O].set(self.fc_w[:, c0:c0 + H].T)

        vmem = pl.BlockSpec(memory_space=pltpu.MemorySpace.VMEM)
        out_pad = pl.pallas_call(
            fused_lstm_fc_kernel,
            out_shape=jax.ShapeDtypeStruct((B, Op), jnp.float32),
            in_specs=[vmem] * 5,
            out_specs=vmem,
            compiler_params=pltpu.CompilerParams(
                vmem_limit_bytes=32 * 1024 * 1024),
        )(x_pad, self.w_cat, self.bias, wfc, self.fc_b_pad)

        return out_pad[:, :O]                                     # (B, O)


# ----------------------------------------------------------------------------
# Pure-JAX reference (direct port of the PyTorch module, incl. the .view quirk)
# ----------------------------------------------------------------------------
def _reference_forward(x, raw_params, fc_w, fc_b, hidden, layers,
                       matmul_dtype=jnp.float32):
    B, T, _ = x.shape
    H, L = hidden, layers

    def mm(a, b):
        return jnp.dot(a.astype(matmul_dtype), b.astype(matmul_dtype),
                       preferred_element_type=jnp.float32)

    layer_in = x.astype(jnp.float32)
    h_last = []
    for (w_ih, w_hh, b_ih, b_hh) in raw_params:
        h = jnp.zeros((B, H), jnp.float32)
        c = jnp.zeros((B, H), jnp.float32)
        outs = []
        for t in range(T):
            gates = mm(layer_in[:, t, :], w_ih.T) + mm(h, w_hh.T) + b_ih + b_hh
            i = jax.nn.sigmoid(gates[:, 0 * H:1 * H])
            f = jax.nn.sigmoid(gates[:, 1 * H:2 * H])
            g = jnp.tanh(gates[:, 2 * H:3 * H])
            o = jax.nn.sigmoid(gates[:, 3 * H:4 * H])
            c = f * c + i * g
            h = o * jnp.tanh(c)
            outs.append(h)
        layer_in = jnp.stack(outs, axis=1)
        h_last.append(h)
    h_out = jnp.stack(h_last, axis=0)                 # (L, B, H) == torch h_n
    h_flat = h_out.reshape(-1, H * L)                 # the module's .view(...) bug
    return mm(h_flat, fc_w.T) + fc_b


if __name__ == "__main__":
    B, T = 2, 8
    input_dim, hidden_dim, layer_dim, output_dim = 16, 32, 2, 1

    key = jax.random.PRNGKey(0)
    key, kx, kp = jax.random.split(key, 3)
    x = jax.random.normal(kx, (B, T, input_dim), dtype=jnp.float32)

    model = LSTMModelPallas(input_dim, hidden_dim, layer_dim, output_dim, key=kp)
    out = model(x)
    jax.block_until_ready(out)
    assert out.shape == (B, output_dim), out.shape

    # Sanity check against a pure-JAX port of the PyTorch module (reference
    # matmuls run with bf16 inputs to mirror the kernel's bf16 MXU path).
    ref = _reference_forward(x, model.raw_params, model.fc_w, model.fc_b,
                             hidden_dim, layer_dim, matmul_dtype=jnp.bfloat16)
    assert jnp.allclose(out, ref, rtol=2e-2, atol=2e-2)

    print("KERNEL_OK")
</pallas_src>

<mosaic_0001>
module attributes {stable_mosaic.version = 11 : i64} {
  func.func @fused_lstm_fc_kernel(%arg0: memref<8x2x128xf32, #tpu.memory_space<vmem>>, %arg1: memref<2x256x512xbf16, #tpu.memory_space<vmem>>, %arg2: memref<2x1x512xf32, #tpu.memory_space<vmem>>, %arg3: memref<2x2x128x128xf32, #tpu.memory_space<vmem>>, %arg4: memref<1x128xf32, #tpu.memory_space<vmem>>, %arg5: memref<2x128xf32, #tpu.memory_space<vmem>>) attributes {dimension_semantics = [], scalar_prefetch = 0 : i64, scratch_operands = 0 : i64, tpu.core_type = #tpu.core_type<tc>} {
    %cst = arith.constant 0.000000e+00 : f32
    %0 = vector.broadcast %cst : f32 to vector<2x128xf32>
    %c0_i32 = arith.constant 0 : i32
    %1 = arith.index_cast %c0_i32 : i32 to index
    %c0 = arith.constant 0 : index
    %c0_0 = arith.constant 0 : index
    %2 = vector.load %arg0[%1, %c0, %c0_0] : memref<8x2x128xf32, #tpu.memory_space<vmem>>, vector<1x2x128xf32>
    %3 = vector.shape_cast %2 : vector<1x2x128xf32> to vector<2x128xf32>
    %4 = tpu.concatenate %3, %0 in 1 : vector<2x128xf32>, vector<2x128xf32> -> vector<2x256xf32>
    %5 = arith.truncf %4 : vector<2x256xf32> to vector<2x256xbf16>
    %c0_1 = arith.constant 0 : index
    %c0_2 = arith.constant 0 : index
    %c0_3 = arith.constant 0 : index
    %6 = vector.load %arg1[%c0_1, %c0_2, %c0_3] : memref<2x256x512xbf16, #tpu.memory_space<vmem>>, vector<1x256x512xbf16>
    %7 = vector.shape_cast %6 : vector<1x256x512xbf16> to vector<256x512xbf16>
    %cst_4 = arith.constant dense<0.000000e+00> : vector<2x512xf32>
    %8 = tpu.matmul %5, %7, %cst_4 {dimension_numbers = #tpu.dot_dimension_numbers<[1], [0], [0], [1], [0, 0, 1, 1], [], []>} : vector<2x256xbf16>, vector<256x512xbf16>, vector<2x512xf32> -> vector<2x512xf32>
    %c0_5 = arith.constant 0 : index
    %c0_6 = arith.constant 0 : index
    %c0_7 = arith.constant 0 : index
    %9 = vector.load %arg2[%c0_5, %c0_6, %c0_7] : memref<2x1x512xf32, #tpu.memory_space<vmem>>, vector<1x1x512xf32>
    %10 = vector.shape_cast %9 : vector<1x1x512xf32> to vector<1x512xf32>
    %11 = vector.broadcast %10 : vector<1x512xf32> to vector<2x512xf32>
    %12 = arith.addf %8, %11 : vector<2x512xf32>
    %13 = vector.extract_strided_slice %12 {offsets = [0, 0], sizes = [2, 128], strides = [1, 1]} : vector<2x512xf32> to vector<2x128xf32>
    %14 = arith.negf %13 : vector<2x128xf32>
    %15 = math.exp %14 : vector<2x128xf32>
    %cst_8 = arith.constant 1.000000e+00 : f32
    %16 = vector.broadcast %cst_8 : f32 to vector<2x128xf32>
    %17 = arith.addf %16, %15 : vector<2x128xf32>
    %18 = arith.divf %16, %17 : vector<2x128xf32>
    %19 = vector.extract_strided_slice %12 {offsets = [0, 128], sizes = [2, 128], strides = [1, 1]} : vector<2x512xf32> to vector<2x128xf32>
    %20 = arith.negf %19 : vector<2x128xf32>
    %21 = math.exp %20 : vector<2x128xf32>
    %cst_9 = arith.constant 1.000000e+00 : f32
    %22 = vector.broadcast %cst_9 : f32 to vector<2x128xf32>
    %23 = arith.addf %22, %21 : vector<2x128xf32>
    %24 = arith.divf %22, %23 : vector<2x128xf32>
    %25 = vector.extract_strided_slice %12 {offsets = [0, 256], sizes = [2, 128], strides = [1, 1]} : vector<2x512xf32> to vector<2x128xf32>
    %26 = math.tanh %25 : vector<2x128xf32>
    %27 = vector.extract_strided_slice %12 {offsets = [0, 384], sizes = [2, 128], strides = [1, 1]} : vector<2x512xf32> to vector<2x128xf32>
    %28 = arith.negf %27 : vector<2x128xf32>
    %29 = math.exp %28 : vector<2x128xf32>
    %cst_10 = arith.constant 1.000000e+00 : f32
    %30 = vector.broadcast %cst_10 : f32 to vector<2x128xf32>
    %31 = arith.addf %30, %29 : vector<2x128xf32>
    %32 = arith.divf %30, %31 : vector<2x128xf32>
    %33 = arith.mulf %24, %0 : vector<2x128xf32>
    %34 = arith.mulf %18, %26 : vector<2x128xf32>
    %35 = arith.addf %33, %34 : vector<2x128xf32>
    %36 = math.tanh %35 : vector<2x128xf32>
    %37 = arith.mulf %32, %36 : vector<2x128xf32>
    %38 = tpu.concatenate %37, %0 in 1 : vector<2x128xf32>, vector<2x128xf32> -> vector<2x256xf32>
    %39 = arith.truncf %38 : vector<2x256xf32> to vector<2x256xbf16>
    %c1 = arith.constant 1 : index
    %c0_11 = arith.constant 0 : index
    %c0_12 = arith.constant 0 : index
    %40 = vector.load %arg1[%c1, %c0_11, %c0_12] : memref<2x256x512xbf16, #tpu.memory_space<vmem>>, vector<1x256x512xbf16>
    %41 = vector.shape_cast %40 : vector<1x256x512xbf16> to vector<256x512xbf16>
    %cst_13 = arith.constant dense<0.000000e+00> : vector<2x512xf32>
    %42 = tpu.matmul %39, %41, %cst_13 {dimension_numbers = #tpu.dot_dimension_numbers<[1], [0], [0], [1], [0, 0, 1, 1], [], []>} : vector<2x256xbf16>, vector<256x512xbf16>, vector<2x512xf32> -> vector<2x512xf32>
    %c1_14 = arith.constant 1 : index
    %c0_15 = arith.constant 0 : index
    %c0_16 = arith.constant 0 : index
    %43 = vector.load %arg2[%c1_14, %c0_15, %c0_16] : memref<2x1x512xf32, #tpu.memory_space<vmem>>, vector<1x1x512xf32>
    %44 = vector.shape_cast %43 : vector<1x1x512xf32> to vector<1x512xf32>
    %45 = vector.broadcast %44 : vector<1x512xf32> to vector<2x512xf32>
    %46 = arith.addf %42, %45 : vector<2x512xf32>
    %47 = vector.extract_strided_slice %46 {offsets = [0, 0], sizes = [2, 128], strides = [1, 1]} : vector<2x512xf32> to vector<2x128xf32>
    %48 = arith.negf %47 : vector<2x128xf32>
    %49 = math.exp %48 : vector<2x128xf32>
    %cst_17 = arith.constant 1.000000e+00 : f32
    %50 = vector.broadcast %cst_17 : f32 to vector<2x128xf32>
    %51 = arith.addf %50, %49 : vector<2x128xf32>
    %52 = arith.divf %50, %51 : vector<2x128xf32>
    %53 = vector.extract_strided_slice %46 {offsets = [0, 128], sizes = [2, 128], strides = [1, 1]} : vector<2x512xf32> to vector<2x128xf32>
    %54 = arith.negf %53 : vector<2x128xf32>
    %55 = math.exp %54 : vector<2x128xf32>
    %cst_18 = arith.constant 1.000000e+00 : f32
    %56 = vector.broadcast %cst_18 : f32 to vector<2x128xf32>
    %57 = arith.addf %56, %55 : vector<2x128xf32>
    %58 = arith.divf %56, %57 : vector<2x128xf32>
    %59 = vector.extract_strided_slice %46 {offsets = [0, 256], sizes = [2, 128], strides = [1, 1]} : vector<2x512xf32> to vector<2x128xf32>
    %60 = math.tanh %59 : vector<2x128xf32>
    %61 = vector.extract_strided_slice %46 {offsets = [0, 384], sizes = [2, 128], strides = [1, 1]} : vector<2x512xf32> to vector<2x128xf32>
    %62 = arith.negf %61 : vector<2x128xf32>
    %63 = math.exp %62 : vector<2x128xf32>
    %cst_19 = arith.constant 1.000000e+00 : f32
    %64 = vector.broadcast %cst_19 : f32 to vector<2x128xf32>
    %65 = arith.addf %64, %63 : vector<2x128xf32>
    %66 = arith.divf %64, %65 : vector<2x128xf32>
    %67 = arith.mulf %58, %0 : vector<2x128xf32>
    %68 = arith.mulf %52, %60 : vector<2x128xf32>
    %69 = arith.addf %67, %68 : vector<2x128xf32>
    %70 = math.tanh %69 : vector<2x128xf32>
    %71 = arith.mulf %66, %70 : vector<2x128xf32>
    %c1_i32 = arith.constant 1 : i32
    %72 = arith.index_cast %c1_i32 : i32 to index
    %c0_20 = arith.constant 0 : index
    %c0_21 = arith.constant 0 : index
    %73 = vector.load %arg0[%72, %c0_20, %c0_21] : memref<8x2x128xf32, #tpu.memory_space<vmem>>, vector<1x2x128xf32>
    %74 = vector.shape_cast %73 : vector<1x2x128xf32> to vector<2x128xf32>
    %75 = tpu.concatenate %74, %37 in 1 : vector<2x128xf32>, vector<2x128xf32> -> vector<2x256xf32>
    %76 = arith.truncf %75 : vector<2x256xf32> to vector<2x256xbf16>
    %c0_22 = arith.constant 0 : index
    %c0_23 = arith.constant 0 : index
    %c0_24 = arith.constant 0 : index
    %77 = vector.load %arg1[%c0_22, %c0_23, %c0_24] : memref<2x256x512xbf16, #tpu.memory_space<vmem>>, vector<1x256x512xbf16>
    %78 = vector.shape_cast %77 : vector<1x256x512xbf16> to vector<256x512xbf16>
    %cst_25 = arith.constant dense<0.000000e+00> : vector<2x512xf32>
    %79 = tpu.matmul %76, %78, %cst_25 {dimension_numbers = #tpu.dot_dimension_numbers<[1], [0], [0], [1], [0, 0, 1, 1], [], []>} : vector<2x256xbf16>, vector<256x512xbf16>, vector<2x512xf32> -> vector<2x512xf32>
    %c0_26 = arith.constant 0 : index
    %c0_27 = arith.constant 0 : index
    %c0_28 = arith.constant 0 : index
    %80 = vector.load %arg2[%c0_26, %c0_27, %c0_28] : memref<2x1x512xf32, #tpu.memory_space<vmem>>, vector<1x1x512xf32>
    %81 = vector.shape_cast %80 : vector<1x1x512xf32> to vector<1x512xf32>
    %82 = vector.broadcast %81 : vector<1x512xf32> to vector<2x512xf32>
    %83 = arith.addf %79, %82 : vector<2x512xf32>
    %84 = vector.extract_strided_slice %83 {offsets = [0, 0], sizes = [2, 128], strides = [1, 1]} : vector<2x512xf32> to vector<2x128xf32>
    %85 = arith.negf %84 : vector<2x128xf32>
    %86 = math.exp %85 : vector<2x128xf32>
    %cst_29 = arith.constant 1.000000e+00 : f32
    %87 = vector.broadcast %cst_29 : f32 to vector<2x128xf32>
    %88 = arith.addf %87, %86 : vector<2x128xf32>
    %89 = arith.divf %87, %88 : vector<2x128xf32>
    %90 = vector.extract_strided_slice %83 {offsets = [0, 128], sizes = [2, 128], strides = [1, 1]} : vector<2x512xf32> to vector<2x128xf32>
    %91 = arith.negf %90 : vector<2x128xf32>
    %92 = math.exp %91 : vector<2x128xf32>
    %cst_30 = arith.constant 1.000000e+00 : f32
    %93 = vector.broadcast %cst_30 : f32 to vector<2x128xf32>
    %94 = arith.addf %93, %92 : vector<2x128xf32>
    %95 = arith.divf %93, %94 : vector<2x128xf32>
    %96 = vector.extract_strided_slice %83 {offsets = [0, 256], sizes = [2, 128], strides = [1, 1]} : vector<2x512xf32> to vector<2x128xf32>
    %97 = math.tanh %96 : vector<2x128xf32>
    %98 = vector.extract_strided_slice %83 {offsets = [0, 384], sizes = [2, 128], strides = [1, 1]} : vector<2x512xf32> to vector<2x128xf32>
    %99 = arith.negf %98 : vector<2x128xf32>
    %100 = math.exp %99 : vector<2x128xf32>
    %cst_31 = arith.constant 1.000000e+00 : f32
    %101 = vector.broadcast %cst_31 : f32 to vector<2x128xf32>
    %102 = arith.addf %101, %100 : vector<2x128xf32>
    %103 = arith.divf %101, %102 : vector<2x128xf32>
    %104 = arith.mulf %95, %35 : vector<2x128xf32>
    %105 = arith.mulf %89, %97 : vector<2x128xf32>
    %106 = arith.addf %104, %105 : vector<2x128xf32>
    %107 = math.tanh %106 : vector<2x128xf32>
    %108 = arith.mulf %103, %107 : vector<2x128xf32>
    %109 = tpu.concatenate %108, %71 in 1 : vector<2x128xf32>, vector<2x128xf32> -> vector<2x256xf32>
    %110 = arith.truncf %109 : vector<2x256xf32> to vector<2x256xbf16>
    %c1_32 = arith.constant 1 : index
    %c0_33 = arith.constant 0 : index
    %c0_34 = arith.constant 0 : index
    %111 = vector.load %arg1[%c1_32, %c0_33, %c0_34] : memref<2x256x512xbf16, #tpu.memory_space<vmem>>, vector<1x256x512xbf16>
    %112 = vector.shape_cast %111 : vector<1x256x512xbf16> to vector<256x512xbf16>
    %cst_35 = arith.constant dense<0.000000e+00> : vector<2x512xf32>
    %113 = tpu.matmul %110, %112, %cst_35 {dimension_numbers = #tpu.dot_dimension_numbers<[1], [0], [0], [1], [0, 0, 1, 1], [], []>} : vector<2x256xbf16>, vector<256x512xbf16>, vector<2x512xf32> -> vector<2x512xf32>
    %c1_36 = arith.constant 1 : index
    %c0_37 = arith.constant 0 : index
    %c0_38 = arith.constant 0 : index
    %114 = vector.load %arg2[%c1_36, %c0_37, %c0_38] : memref<2x1x512xf32, #tpu.memory_space<vmem>>, vector<1x1x512xf32>
    %115 = vector.shape_cast %114 : vector<1x1x512xf32> to vector<1x512xf32>
    %116 = vector.broadcast %115 : vector<1x512xf32> to vector<2x512xf32>
    %117 = arith.addf %113, %116 : vector<2x512xf32>
    %118 = vector.extract_strided_slice %117 {offsets = [0, 0], sizes = [2, 128], strides = [1, 1]} : vector<2x512xf32> to vector<2x128xf32>
    %119 = arith.negf %118 : vector<2x128xf32>
    %120 = math.exp %119 : vector<2x128xf32>
    %cst_39 = arith.constant 1.000000e+00 : f32
    %121 = vector.broadcast %cst_39 : f32 to vector<2x128xf32>
    %122 = arith.addf %121, %120 : vector<2x128xf32>
    %123 = arith.divf %121, %122 : vector<2x128xf32>
    %124 = vector.extract_strided_slice %117 {offsets = [0, 128], sizes = [2, 128], strides = [1, 1]} : vector<2x512xf32> to vector<2x128xf32>
    %125 = arith.negf %124 : vector<2x128xf32>
    %126 = math.exp %125 : vector<2x128xf32>
    %cst_40 = arith.constant 1.000000e+00 : f32
    %127 = vector.broadcast %cst_40 : f32 to vector<2x128xf32>
    %128 = arith.addf %127, %126 : vector<2x128xf32>
    %129 = arith.divf %127, %128 : vector<2x128xf32>
    %130 = vector.extract_strided_slice %117 {offsets = [0, 256], sizes = [2, 128], strides = [1, 1]} : vector<2x512xf32> to vector<2x128xf32>
    %131 = math.tanh %130 : vector<2x128xf32>
    %132 = vector.extract_strided_slice %117 {offsets = [0, 384], sizes = [2, 128], strides = [1, 1]} : vector<2x512xf32> to vector<2x128xf32>
    %133 = arith.negf %132 : vector<2x128xf32>
    %134 = math.exp %133 : vector<2x128xf32>
    %cst_41 = arith.constant 1.000000e+00 : f32
    %135 = vector.broadcast %cst_41 : f32 to vector<2x128xf32>
    %136 = arith.addf %135, %134 : vector<2x128xf32>
    %137 = arith.divf %135, %136 : vector<2x128xf32>
    %138 = arith.mulf %129, %69 : vector<2x128xf32>
    %139 = arith.mulf %123, %131 : vector<2x128xf32>
    %140 = arith.addf %138, %139 : vector<2x128xf32>
    %141 = math.tanh %140 : vector<2x128xf32>
    %142 = arith.mulf %137, %141 : vector<2x128xf32>
    %c2_i32 = arith.constant 2 : i32
    %143 = arith.index_cast %c2_i32 : i32 to index
    %c0_42 = arith.constant 0 : index
    %c0_43 = arith.constant 0 : index
    %144 = vector.load %arg0[%143, %c0_42, %c0_43] : memref<8x2x128xf32, #tpu.memory_space<vmem>>, vector<1x2x128xf32>
    %145 = vector.shape_cast %144 : vector<1x2x128xf32> to vector<2x128xf32>
    %146 = tpu.concatenate %145, %108 in 1 : vector<2x128xf32>, vector<2x128xf32> -> vector<2x256xf32>
    %147 = arith.truncf %146 : vector<2x256xf32> to vector<2x256xbf16>
    %c0_44 = arith.constant 0 : index
    %c0_45 = arith.constant 0 : index
    %c0_46 = arith.constant 0 : index
    %148 = vector.load %arg1[%c0_44, %c0_45, %c0_46] : memref<2x256x512xbf16, #tpu.memory_space<vmem>>, vector<1x256x512xbf16>
    %149 = vector.shape_cast %148 : vector<1x256x512xbf16> to vector<256x512xbf16>
    %cst_47 = arith.constant dense<0.000000e+00> : vector<2x512xf32>
    %150 = tpu.matmul %147, %149, %cst_47 {dimension_numbers = #tpu.dot_dimension_numbers<[1], [0], [0], [1], [0, 0, 1, 1], [], []>} : vector<2x256xbf16>, vector<256x512xbf16>, vector<2x512xf32> -> vector<2x512xf32>
    %c0_48 = arith.constant 0 : index
    %c0_49 = arith.constant 0 : index
    %c0_50 = arith.constant 0 : index
    %151 = vector.load %arg2[%c0_48, %c0_49, %c0_50] : memref<2x1x512xf32, #tpu.memory_space<vmem>>, vector<1x1x512xf32>
    %152 = vector.shape_cast %151 : vector<1x1x512xf32> to vector<1x512xf32>
    %153 = vector.broadcast %152 : vector<1x512xf32> to vector<2x512xf32>
    %154 = arith.addf %150, %153 : vector<2x512xf32>
    %155 = vector.extract_strided_slice %154 {offsets = [0, 0], sizes = [2, 128], strides = [1, 1]} : vector<2x512xf32> to vector<2x128xf32>
    %156 = arith.negf %155 : vector<2x128xf32>
    %157 = math.exp %156 : vector<2x128xf32>
    %cst_51 = arith.constant 1.000000e+00 : f32
    %158 = vector.broadcast %cst_51 : f32 to vector<2x128xf32>
    %159 = arith.addf %158, %157 : vector<2x128xf32>
    %160 = arith.divf %158, %159 : vector<2x128xf32>
    %161 = vector.extract_strided_slice %154 {offsets = [0, 128], sizes = [2, 128], strides = [1, 1]} : vector<2x512xf32> to vector<2x128xf32>
    %162 = arith.negf %161 : vector<2x128xf32>
    %163 = math.exp %162 : vector<2x128xf32>
    %cst_52 = arith.constant 1.000000e+00 : f32
    %164 = vector.broadcast %cst_52 : f32 to vector<2x128xf32>
    %165 = arith.addf %164, %163 : vector<2x128xf32>
    %166 = arith.divf %164, %165 : vector<2x128xf32>
    %167 = vector.extract_strided_slice %154 {offsets = [0, 256], sizes = [2, 128], strides = [1, 1]} : vector<2x512xf32> to vector<2x128xf32>
    %168 = math.tanh %167 : vector<2x128xf32>
    %169 = vector.extract_strided_slice %154 {offsets = [0, 384], sizes = [2, 128], strides = [1, 1]} : vector<2x512xf32> to vector<2x128xf32>
    %170 = arith.negf %169 : vector<2x128xf32>
    %171 = math.exp %170 : vector<2x128xf32>
    %cst_53 = arith.constant 1.000000e+00 : f32
    %172 = vector.broadcast %cst_53 : f32 to vector<2x128xf32>
    %173 = arith.addf %172, %171 : vector<2x128xf32>
    %174 = arith.divf %172, %173 : vector<2x128xf32>
    %175 = arith.mulf %166, %106 : vector<2x128xf32>
    %176 = arith.mulf %160, %168 : vector<2x128xf32>
    %177 = arith.addf %175, %176 : vector<2x128xf32>
    %178 = math.tanh %177 : vector<2x128xf32>
    %179 = arith.mulf %174, %178 : vector<2x128xf32>
    %180 = tpu.concatenate %179, %142 in 1 : vector<2x128xf32>, vector<2x128xf32> -> vector<2x256xf32>
    %181 = arith.truncf %180 : vector<2x256xf32> to vector<2x256xbf16>
    %c1_54 = arith.constant 1 : index
    %c0_55 = arith.constant 0 : index
    %c0_56 = arith.constant 0 : index
    %182 = vector.load %arg1[%c1_54, %c0_55, %c0_56] : memref<2x256x512xbf16, #tpu.memory_space<vmem>>, vector<1x256x512xbf16>
    %183 = vector.shape_cast %182 : vector<1x256x512xbf16> to vector<256x512xbf16>
    %cst_57 = arith.constant dense<0.000000e+00> : vector<2x512xf32>
    %184 = tpu.matmul %181, %183, %cst_57 {dimension_numbers = #tpu.dot_dimension_numbers<[1], [0], [0], [1], [0, 0, 1, 1], [], []>} : vector<2x256xbf16>, vector<256x512xbf16>, vector<2x512xf32> -> vector<2x512xf32>
    %c1_58 = arith.constant 1 : index
    %c0_59 = arith.constant 0 : index
    %c0_60 = arith.constant 0 : index
    %185 = vector.load %arg2[%c1_58, %c0_59, %c0_60] : memref<2x1x512xf32, #tpu.memory_space<vmem>>, vector<1x1x512xf32>
    %186 = vector.shape_cast %185 : vector<1x1x512xf32> to vector<1x512xf32>
    %187 = vector.broadcast %186 : vector<1x512xf32> to vector<2x512xf32>
    %188 = arith.addf %184, %187 : vector<2x512xf32>
    %189 = vector.extract_strided_slice %188 {offsets = [0, 0], sizes = [2, 128], strides = [1, 1]} : vector<2x512xf32> to vector<2x128xf32>
    %190 = arith.negf %189 : vector<2x128xf32>
    %191 = math.exp %190 : vector<2x128xf32>
    %cst_61 = arith.constant 1.000000e+00 : f32
    %192 = vector.broadcast %cst_61 : f32 to vector<2x128xf32>
    %193 = arith.addf %192, %191 : vector<2x128xf32>
    %194 = arith.divf %192, %193 : vector<2x128xf32>
    %195 = vector.extract_strided_slice %188 {offsets = [0, 128], sizes = [2, 128], strides = [1, 1]} : vector<2x512xf32> to vector<2x128xf32>
    %196 = arith.negf %195 : vector<2x128xf32>
    %197 = math.exp %196 : vector<2x128xf32>
    %cst_62 = arith.constant 1.000000e+00 : f32
    %198 = vector.broadcast %cst_62 : f32 to vector<2x128xf32>
    %199 = arith.addf %198, %197 : vector<2x128xf32>
    %200 = arith.divf %198, %199 : vector<2x128xf32>
    %201 = vector.extract_strided_slice %188 {offsets = [0, 256], sizes = [2, 128], strides = [1, 1]} : vector<2x512xf32> to vector<2x128xf32>
    %202 = math.tanh %201 : vector<2x128xf32>
    %203 = vector.extract_strided_slice %188 {offsets = [0, 384], sizes = [2, 128], strides = [1, 1]} : vector<2x512xf32> to vector<2x128xf32>
    %204 = arith.negf %203 : vector<2x128xf32>
    %205 = math.exp %204 : vector<2x128xf32>
    %cst_63 = arith.constant 1.000000e+00 : f32
    %206 = vector.broadcast %cst_63 : f32 to vector<2x128xf32>
    %207 = arith.addf %206, %205 : vector<2x128xf32>
    %208 = arith.divf %206, %207 : vector<2x128xf32>
    %209 = arith.mulf %200, %140 : vector<2x128xf32>
    %210 = arith.mulf %194, %202 : vector<2x128xf32>
    %211 = arith.addf %209, %210 : vector<2x128xf32>
    %212 = math.tanh %211 : vector<2x128xf32>
    %213 = arith.mulf %208, %212 : vector<2x128xf32>
    %c3_i32 = arith.constant 3 : i32
    %214 = arith.index_cast %c3_i32 : i32 to index
    %c0_64 = arith.constant 0 : index
    %c0_65 = arith.constant 0 : index
    %215 = vector.load %arg0[%214, %c0_64, %c0_65] : memref<8x2x128xf32, #tpu.memory_space<vmem>>, vector<1x2x128xf32>
    %216 = vector.shape_cast %215 : vector<1x2x128xf32> to vector<2x128xf32>
    %217 = tpu.concatenate %216, %179 in 1 : vector<2x128xf32>, vector<2x128xf32> -> vector<2x256xf32>
    %218 = arith.truncf %217 : vector<2x256xf32> to vector<2x256xbf16>
    %c0_66 = arith.constant 0 : index
    %c0_67 = arith.constant 0 : index
    %c0_68 = arith.constant 0 : index
    %219 = vector.load %arg1[%c0_66, %c0_67, %c0_68] : memref<2x256x512xbf16, #tpu.memory_space<vmem>>, vector<1x256x512xbf16>
    %220 = vector.shape_cast %219 : vector<1x256x512xbf16> to vector<256x512xbf16>
    %cst_69 = arith.constant dense<0.000000e+00> : vector<2x512xf32>
    %221 = tpu.matmul %218, %220, %cst_69 {dimension_numbers = #tpu.dot_dimension_numbers<[1], [0], [0], [1], [0, 0, 1, 1], [], []>} : vector<2x256xbf16>, vector<256x512xbf16>, vector<2x512xf32> -> vector<2x512xf32>
    %c0_70 = arith.constant 0 : index
    %c0_71 = arith.constant 0 : index
    %c0_72 = arith.constant 0 : index
    %222 = vector.load %arg2[%c0_70, %c0_71, %c0_72] : memref<2x1x512xf32, #tpu.memory_space<vmem>>, vector<1x1x512xf32>
    %223 = vector.shape_cast %222 : vector<1x1x512xf32> to vector<1x512xf32>
    %224 = vector.broadcast %223 : vector<1x512xf32> to vector<2x512xf32>
    %225 = arith.addf %221, %224 : vector<2x512xf32>
    %226 = vector.extract_strided_slice %225 {offsets = [0, 0], sizes = [2, 128], strides = [1, 1]} : vector<2x512xf32> to vector<2x128xf32>
    %227 = arith.negf %226 : vector<2x128xf32>
    %228 = math.exp %227 : vector<2x128xf32>
    %cst_73 = arith.constant 1.000000e+00 : f32
    %229 = vector.broadcast %cst_73 : f32 to vector<2x128xf32>
    %230 = arith.addf %229, %228 : vector<2x128xf32>
    %231 = arith.divf %229, %230 : vector<2x128xf32>
    %232 = vector.extract_strided_slice %225 {offsets = [0, 128], sizes = [2, 128], strides = [1, 1]} : vector<2x512xf32> to vector<2x128xf32>
    %233 = arith.negf %232 : vector<2x128xf32>
    %234 = math.exp %233 : vector<2x128xf32>
    %cst_74 = arith.constant 1.000000e+00 : f32
    %235 = vector.broadcast %cst_74 : f32 to vector<2x128xf32>
    %236 = arith.addf %235, %234 : vector<2x128xf32>
    %237 = arith.divf %235, %236 : vector<2x128xf32>
    %238 = vector.extract_strided_slice %225 {offsets = [0, 256], sizes = [2, 128], strides = [1, 1]} : vector<2x512xf32> to vector<2x128xf32>
    %239 = math.tanh %238 : vector<2x128xf32>
    %240 = vector.extract_strided_slice %225 {offsets = [0, 384], sizes = [2, 128], strides = [1, 1]} : vector<2x512xf32> to vector<2x128xf32>
    %241 = arith.negf %240 : vector<2x128xf32>
    %242 = math.exp %241 : vector<2x128xf32>
    %cst_75 = arith.constant 1.000000e+00 : f32
    %243 = vector.broadcast %cst_75 : f32 to vector<2x128xf32>
    %244 = arith.addf %243, %242 : vector<2x128xf32>
    %245 = arith.divf %243, %244 : vector<2x128xf32>
    %246 = arith.mulf %237, %177 : vector<2x128xf32>
    %247 = arith.mulf %231, %239 : vector<2x128xf32>
    %248 = arith.addf %246, %247 : vector<2x128xf32>
    %249 = math.tanh %248 : vector<2x128xf32>
    %250 = arith.mulf %245, %249 : vector<2x128xf32>
    %251 = tpu.concatenate %250, %213 in 1 : vector<2x128xf32>, vector<2x128xf32> -> vector<2x256xf32>
    %252 = arith.truncf %251 : vector<2x256xf32> to vector<2x256xbf16>
    %c1_76 = arith.constant 1 : index
    %c0_77 = arith.constant 0 : index
    %c0_78 = arith.constant 0 : index
    %253 = vector.load %arg1[%c1_76, %c0_77, %c0_78] : memref<2x256x512xbf16, #tpu.memory_space<vmem>>, vector<1x256x512xbf16>
    %254 = vector.shape_cast %253 : vector<1x256x512xbf16> to vector<256x512xbf16>
    %cst_79 = arith.constant dense<0.000000e+00> : vector<2x512xf32>
    %255 = tpu.matmul %252, %254, %cst_79 {dimension_numbers = #tpu.dot_dimension_numbers<[1], [0], [0], [1], [0, 0, 1, 1], [], []>} : vector<2x256xbf16>, vector<256x512xbf16>, vector<2x512xf32> -> vector<2x512xf32>
    %c1_80 = arith.constant 1 : index
    %c0_81 = arith.constant 0 : index
    %c0_82 = arith.constant 0 : index
    %256 = vector.load %arg2[%c1_80, %c0_81, %c0_82] : memref<2x1x512xf32, #tpu.memory_space<vmem>>, vector<1x1x512xf32>
    %257 = vector.shape_cast %256 : vector<1x1x512xf32> to vector<1x512xf32>
    %258 = vector.broadcast %257 : vector<1x512xf32> to vector<2x512xf32>
    %259 = arith.addf %255, %258 : vector<2x512xf32>
    %260 = vector.extract_strided_slice %259 {offsets = [0, 0], sizes = [2, 128], strides = [1, 1]} : vector<2x512xf32> to vector<2x128xf32>
    %261 = arith.negf %260 : vector<2x128xf32>
    %262 = math.exp %261 : vector<2x128xf32>
    %cst_83 = arith.constant 1.000000e+00 : f32
    %263 = vector.broadcast %cst_83 : f32 to vector<2x128xf32>
    %264 = arith.addf %263, %262 : vector<2x128xf32>
    %265 = arith.divf %263, %264 : vector<2x128xf32>
    %266 = vector.extract_strided_slice %259 {offsets = [0, 128], sizes = [2, 128], strides = [1, 1]} : vector<2x512xf32> to vector<2x128xf32>
    %267 = arith.negf %266 : vector<2x128xf32>
    %268 = math.exp %267 : vector<2x128xf32>
    %cst_84 = arith.constant 1.000000e+00 : f32
    %269 = vector.broadcast %cst_84 : f32 to vector<2x128xf32>
    %270 = arith.addf %269, %268 : vector<2x128xf32>
    %271 = arith.divf %269, %270 : vector<2x128xf32>
    %272 = vector.extract_strided_slice %259 {offsets = [0, 256], sizes = [2, 128], strides = [1, 1]} : vector<2x512xf32> to vector<2x128xf32>
    %273 = math.tanh %272 : vector<2x128xf32>
    %274 = vector.extract_strided_slice %259 {offsets = [0, 384], sizes = [2, 128], strides = [1, 1]} : vector<2x512xf32> to vector<2x128xf32>
    %275 = arith.negf %274 : vector<2x128xf32>
    %276 = math.exp %275 : vector<2x128xf32>
    %cst_85 = arith.constant 1.000000e+00 : f32
    %277 = vector.broadcast %cst_85 : f32 to vector<2x128xf32>
    %278 = arith.addf %277, %276 : vector<2x128xf32>
    %279 = arith.divf %277, %278 : vector<2x128xf32>
    %280 = arith.mulf %271, %211 : vector<2x128xf32>
    %281 = arith.mulf %265, %273 : vector<2x128xf32>
    %282 = arith.addf %280, %281 : vector<2x128xf32>
    %283 = math.tanh %282 : vector<2x128xf32>
    %284 = arith.mulf %279, %283 : vector<2x128xf32>
    %c4_i32 = arith.constant 4 : i32
    %285 = arith.index_cast %c4_i32 : i32 to index
    %c0_86 = arith.constant 0 : index
    %c0_87 = arith.constant 0 : index
    %286 = vector.load %arg0[%285, %c0_86, %c0_87] : memref<8x2x128xf32, #tpu.memory_space<vmem>>, vector<1x2x128xf32>
    %287 = vector.shape_cast %286 : vector<1x2x128xf32> to vector<2x128xf32>
    %288 = tpu.concatenate %287, %250 in 1 : vector<2x128xf32>, vector<2x128xf32> -> vector<2x256xf32>
    %289 = arith.truncf %288 : vector<2x256xf32> to vector<2x256xbf16>
    %c0_88 = arith.constant 0 : index
    %c0_89 = arith.constant 0 : index
    %c0_90 = arith.constant 0 : index
    %290 = vector.load %arg1[%c0_88, %c0_89, %c0_90] : memref<2x256x512xbf16, #tpu.memory_space<vmem>>, vector<1x256x512xbf16>
    %291 = vector.shape_cast %290 : vector<1x256x512xbf16> to vector<256x512xbf16>
    %cst_91 = arith.constant dense<0.000000e+00> : vector<2x512xf32>
    %292 = tpu.matmul %289, %291, %cst_91 {dimension_numbers = #tpu.dot_dimension_numbers<[1], [0], [0], [1], [0, 0, 1, 1], [], []>} : vector<2x256xbf16>, vector<256x512xbf16>, vector<2x512xf32> -> vector<2x512xf32>
    %c0_92 = arith.constant 0 : index
    %c0_93 = arith.constant 0 : index
    %c0_94 = arith.constant 0 : index
    %293 = vector.load %arg2[%c0_92, %c0_93, %c0_94] : memref<2x1x512xf32, #tpu.memory_space<vmem>>, vector<1x1x512xf32>
    %294 = vector.shape_cast %293 : vector<1x1x512xf32> to vector<1x512xf32>
    %295 = vector.broadcast %294 : vector<1x512xf32> to vector<2x512xf32>
    %296 = arith.addf %292, %295 : vector<2x512xf32>
    %297 = vector.extract_strided_slice %296 {offsets = [0, 0], sizes = [2, 128], strides = [1, 1]} : vector<2x512xf32> to vector<2x128xf32>
    %298 = arith.negf %297 : vector<2x128xf32>
    %299 = math.exp %298 : vector<2x128xf32>
    %cst_95 = arith.constant 1.000000e+00 : f32
    %300 = vector.broadcast %cst_95 : f32 to vector<2x128xf32>
    %301 = arith.addf %300, %299 : vector<2x128xf32>
    %302 = arith.divf %300, %301 : vector<2x128xf32>
    %303 = vector.extract_strided_slice %296 {offsets = [0, 128], sizes = [2, 128], strides = [1, 1]} : vector<2x512xf32> to vector<2x128xf32>
    %304 = arith.negf %303 : vector<2x128xf32>
    %305 = math.exp %304 : vector<2x128xf32>
    %cst_96 = arith.constant 1.000000e+00 : f32
    %306 = vector.broadcast %cst_96 : f32 to vector<2x128xf32>
    %307 = arith.addf %306, %305 : vector<2x128xf32>
    %308 = arith.divf %306, %307 : vector<2x128xf32>
    %309 = vector.extract_strided_slice %296 {offsets = [0, 256], sizes = [2, 128], strides = [1, 1]} : vector<2x512xf32> to vector<2x128xf32>
    %310 = math.tanh %309 : vector<2x128xf32>
    %311 = vector.extract_strided_slice %296 {offsets = [0, 384], sizes = [2, 128], strides = [1, 1]} : vector<2x512xf32> to vector<2x128xf32>
    %312 = arith.negf %311 : vector<2x128xf32>
    %313 = math.exp %312 : vector<2x128xf32>
    %cst_97 = arith.constant 1.000000e+00 : f32
    %314 = vector.broadcast %cst_97 : f32 to vector<2x128xf32>
    %315 = arith.addf %314, %313 : vector<2x128xf32>
    %316 = arith.divf %314, %315 : vector<2x128xf32>
    %317 = arith.mulf %308, %248 : vector<2x128xf32>
    %318 = arith.mulf %302, %310 : vector<2x128xf32>
    %319 = arith.addf %317, %318 : vector<2x128xf32>
    %320 = math.tanh %319 : vector<2x128xf32>
    %321 = arith.mulf %316, %320 : vector<2x128xf32>
    %322 = tpu.concatenate %321, %284 in 1 : vector<2x128xf32>, vector<2x128xf32> -> vector<2x256xf32>
    %323 = arith.truncf %322 : vector<2x256xf32> to vector<2x256xbf16>
    %c1_98 = arith.constant 1 : index
    %c0_99 = arith.constant 0 : index
    %c0_100 = arith.constant 0 : index
    %324 = vector.load %arg1[%c1_98, %c0_99, %c0_100] : memref<2x256x512xbf16, #tpu.memory_space<vmem>>, vector<1x256x512xbf16>
    %325 = vector.shape_cast %324 : vector<1x256x512xbf16> to vector<256x512xbf16>
    %cst_101 = arith.constant dense<0.000000e+00> : vector<2x512xf32>
    %326 = tpu.matmul %323, %325, %cst_101 {dimension_numbers = #tpu.dot_dimension_numbers<[1], [0], [0], [1], [0, 0, 1, 1], [], []>} : vector<2x256xbf16>, vector<256x512xbf16>, vector<2x512xf32> -> vector<2x512xf32>
    %c1_102 = arith.constant 1 : index
    %c0_103 = arith.constant 0 : index
    %c0_104 = arith.constant 0 : index
    %327 = vector.load %arg2[%c1_102, %c0_103, %c0_104] : memref<2x1x512xf32, #tpu.memory_space<vmem>>, vector<1x1x512xf32>
    %328 = vector.shape_cast %327 : vector<1x1x512xf32> to vector<1x512xf32>
    %329 = vector.broadcast %328 : vector<1x512xf32> to vector<2x512xf32>
    %330 = arith.addf %326, %329 : vector<2x512xf32>
    %331 = vector.extract_strided_slice %330 {offsets = [0, 0], sizes = [2, 128], strides = [1, 1]} : vector<2x512xf32> to vector<2x128xf32>
    %332 = arith.negf %331 : vector<2x128xf32>
    %333 = math.exp %332 : vector<2x128xf32>
    %cst_105 = arith.constant 1.000000e+00 : f32
    %334 = vector.broadcast %cst_105 : f32 to vector<2x128xf32>
    %335 = arith.addf %334, %333 : vector<2x128xf32>
    %336 = arith.divf %334, %335 : vector<2x128xf32>
    %337 = vector.extract_strided_slice %330 {offsets = [0, 128], sizes = [2, 128], strides = [1, 1]} : vector<2x512xf32> to vector<2x128xf32>
    %338 = arith.negf %337 : vector<2x128xf32>
    %339 = math.exp %338 : vector<2x128xf32>
    %cst_106 = arith.constant 1.000000e+00 : f32
    %340 = vector.broadcast %cst_106 : f32 to vector<2x128xf32>
    %341 = arith.addf %340, %339 : vector<2x128xf32>
    %342 = arith.divf %340, %341 : vector<2x128xf32>
    %343 = vector.extract_strided_slice %330 {offsets = [0, 256], sizes = [2, 128], strides = [1, 1]} : vector<2x512xf32> to vector<2x128xf32>
    %344 = math.tanh %343 : vector<2x128xf32>
    %345 = vector.extract_strided_slice %330 {offsets = [0, 384], sizes = [2, 128], strides = [1, 1]} : vector<2x512xf32> to vector<2x128xf32>
    %346 = arith.negf %345 : vector<2x128xf32>
    %347 = math.exp %346 : vector<2x128xf32>
    %cst_107 = arith.constant 1.000000e+00 : f32
    %348 = vector.broadcast %cst_107 : f32 to vector<2x128xf32>
    %349 = arith.addf %348, %347 : vector<2x128xf32>
    %350 = arith.divf %348, %349 : vector<2x128xf32>
    %351 = arith.mulf %342, %282 : vector<2x128xf32>
    %352 = arith.mulf %336, %344 : vector<2x128xf32>
    %353 = arith.addf %351, %352 : vector<2x128xf32>
    %354 = math.tanh %353 : vector<2x128xf32>
    %355 = arith.mulf %350, %354 : vector<2x128xf32>
    %c5_i32 = arith.constant 5 : i32
    %356 = arith.index_cast %c5_i32 : i32 to index
    %c0_108 = arith.constant 0 : index
    %c0_109 = arith.constant 0 : index
    %357 = vector.load %arg0[%356, %c0_108, %c0_109] : memref<8x2x128xf32, #tpu.memory_space<vmem>>, vector<1x2x128xf32>
    %358 = vector.shape_cast %357 : vector<1x2x128xf32> to vector<2x128xf32>
    %359 = tpu.concatenate %358, %321 in 1 : vector<2x128xf32>, vector<2x128xf32> -> vector<2x256xf32>
    %360 = arith.truncf %359 : vector<2x256xf32> to vector<2x256xbf16>
    %c0_110 = arith.constant 0 : index
    %c0_111 = arith.constant 0 : index
    %c0_112 = arith.constant 0 : index
    %361 = vector.load %arg1[%c0_110, %c0_111, %c0_112] : memref<2x256x512xbf16, #tpu.memory_space<vmem>>, vector<1x256x512xbf16>
    %362 = vector.shape_cast %361 : vector<1x256x512xbf16> to vector<256x512xbf16>
    %cst_113 = arith.constant dense<0.000000e+00> : vector<2x512xf32>
    %363 = tpu.matmul %360, %362, %cst_113 {dimension_numbers = #tpu.dot_dimension_numbers<[1], [0], [0], [1], [0, 0, 1, 1], [], []>} : vector<2x256xbf16>, vector<256x512xbf16>, vector<2x512xf32> -> vector<2x512xf32>
    %c0_114 = arith.constant 0 : index
    %c0_115 = arith.constant 0 : index
    %c0_116 = arith.constant 0 : index
    %364 = vector.load %arg2[%c0_114, %c0_115, %c0_116] : memref<2x1x512xf32, #tpu.memory_space<vmem>>, vector<1x1x512xf32>
    %365 = vector.shape_cast %364 : vector<1x1x512xf32> to vector<1x512xf32>
    %366 = vector.broadcast %365 : vector<1x512xf32> to vector<2x512xf32>
    %367 = arith.addf %363, %366 : vector<2x512xf32>
    %368 = vector.extract_strided_slice %367 {offsets = [0, 0], sizes = [2, 128], strides = [1, 1]} : vector<2x512xf32> to vector<2x128xf32>
    %369 = arith.negf %368 : vector<2x128xf32>
    %370 = math.exp %369 : vector<2x128xf32>
    %cst_117 = arith.constant 1.000000e+00 : f32
    %371 = vector.broadcast %cst_117 : f32 to vector<2x128xf32>
    %372 = arith.addf %371, %370 : vector<2x128xf32>
    %373 = arith.divf %371, %372 : vector<2x128xf32>
    %374 = vector.extract_strided_slice %367 {offsets = [0, 128], sizes = [2, 128], strides = [1, 1]} : vector<2x512xf32> to vector<2x128xf32>
    %375 = arith.negf %374 : vector<2x128xf32>
    %376 = math.exp %375 : vector<2x128xf32>
    %cst_118 = arith.constant 1.000000e+00 : f32
    %377 = vector.broadcast %cst_118 : f32 to vector<2x128xf32>
    %378 = arith.addf %377, %376 : vector<2x128xf32>
    %379 = arith.divf %377, %378 : vector<2x128xf32>
    %380 = vector.extract_strided_slice %367 {offsets = [0, 256], sizes = [2, 128], strides = [1, 1]} : vector<2x512xf32> to vector<2x128xf32>
    %381 = math.tanh %380 : vector<2x128xf32>
    %382 = vector.extract_strided_slice %367 {offsets = [0, 384], sizes = [2, 128], strides = [1, 1]} : vector<2x512xf32> to vector<2x128xf32>
    %383 = arith.negf %382 : vector<2x128xf32>
    %384 = math.exp %383 : vector<2x128xf32>
    %cst_119 = arith.constant 1.000000e+00 : f32
    %385 = vector.broadcast %cst_119 : f32 to vector<2x128xf32>
    %386 = arith.addf %385, %384 : vector<2x128xf32>
    %387 = arith.divf %385, %386 : vector<2x128xf32>
    %388 = arith.mulf %379, %319 : vector<2x128xf32>
    %389 = arith.mulf %373, %381 : vector<2x128xf32>
    %390 = arith.addf %388, %389 : vector<2x128xf32>
    %391 = math.tanh %390 : vector<2x128xf32>
    %392 = arith.mulf %387, %391 : vector<2x128xf32>
    %393 = tpu.concatenate %392, %355 in 1 : vector<2x128xf32>, vector<2x128xf32> -> vector<2x256xf32>
    %394 = arith.truncf %393 : vector<2x256xf32> to vector<2x256xbf16>
    %c1_120 = arith.constant 1 : index
    %c0_121 = arith.constant 0 : index
    %c0_122 = arith.constant 0 : index
    %395 = vector.load %arg1[%c1_120, %c0_121, %c0_122] : memref<2x256x512xbf16, #tpu.memory_space<vmem>>, vector<1x256x512xbf16>
    %396 = vector.shape_cast %395 : vector<1x256x512xbf16> to vector<256x512xbf16>
    %cst_123 = arith.constant dense<0.000000e+00> : vector<2x512xf32>
    %397 = tpu.matmul %394, %396, %cst_123 {dimension_numbers = #tpu.dot_dimension_numbers<[1], [0], [0], [1], [0, 0, 1, 1], [], []>} : vector<2x256xbf16>, vector<256x512xbf16>, vector<2x512xf32> -> vector<2x512xf32>
    %c1_124 = arith.constant 1 : index
    %c0_125 = arith.constant 0 : index
    %c0_126 = arith.constant 0 : index
    %398 = vector.load %arg2[%c1_124, %c0_125, %c0_126] : memref<2x1x512xf32, #tpu.memory_space<vmem>>, vector<1x1x512xf32>
    %399 = vector.shape_cast %398 : vector<1x1x512xf32> to vector<1x512xf32>
    %400 = vector.broadcast %399 : vector<1x512xf32> to vector<2x512xf32>
    %401 = arith.addf %397, %400 : vector<2x512xf32>
    %402 = vector.extract_strided_slice %401 {offsets = [0, 0], sizes = [2, 128], strides = [1, 1]} : vector<2x512xf32> to vector<2x128xf32>
    %403 = arith.negf %402 : vector<2x128xf32>
    %404 = math.exp %403 : vector<2x128xf32>
    %cst_127 = arith.constant 1.000000e+00 : f32
    %405 = vector.broadcast %cst_127 : f32 to vector<2x128xf32>
    %406 = arith.addf %405, %404 : vector<2x128xf32>
    %407 = arith.divf %405, %406 : vector<2x128xf32>
    %408 = vector.extract_strided_slice %401 {offsets = [0, 128], sizes = [2, 128], strides = [1, 1]} : vector<2x512xf32> to vector<2x128xf32>
    %409 = arith.negf %408 : vector<2x128xf32>
    %410 = math.exp %409 : vector<2x128xf32>
    %cst_128 = arith.constant 1.000000e+00 : f32
    %411 = vector.broadcast %cst_128 : f32 to vector<2x128xf32>
    %412 = arith.addf %411, %410 : vector<2x128xf32>
    %413 = arith.divf %411, %412 : vector<2x128xf32>
    %414 = vector.extract_strided_slice %401 {offsets = [0, 256], sizes = [2, 128], strides = [1, 1]} : vector<2x512xf32> to vector<2x128xf32>
    %415 = math.tanh %414 : vector<2x128xf32>
    %416 = vector.extract_strided_slice %401 {offsets = [0, 384], sizes = [2, 128], strides = [1, 1]} : vector<2x512xf32> to vector<2x128xf32>
    %417 = arith.negf %416 : vector<2x128xf32>
    %418 = math.exp %417 : vector<2x128xf32>
    %cst_129 = arith.constant 1.000000e+00 : f32
    %419 = vector.broadcast %cst_129 : f32 to vector<2x128xf32>
    %420 = arith.addf %419, %418 : vector<2x128xf32>
    %421 = arith.divf %419, %420 : vector<2x128xf32>
    %422 = arith.mulf %413, %353 : vector<2x128xf32>
    %423 = arith.mulf %407, %415 : vector<2x128xf32>
    %424 = arith.addf %422, %423 : vector<2x128xf32>
    %425 = math.tanh %424 : vector<2x128xf32>
    %426 = arith.mulf %421, %425 : vector<2x128xf32>
    %c6_i32 = arith.constant 6 : i32
    %427 = arith.index_cast %c6_i32 : i32 to index
    %c0_130 = arith.constant 0 : index
    %c0_131 = arith.constant 0 : index
    %428 = vector.load %arg0[%427, %c0_130, %c0_131] : memref<8x2x128xf32, #tpu.memory_space<vmem>>, vector<1x2x128xf32>
    %429 = vector.shape_cast %428 : vector<1x2x128xf32> to vector<2x128xf32>
    %430 = tpu.concatenate %429, %392 in 1 : vector<2x128xf32>, vector<2x128xf32> -> vector<2x256xf32>
    %431 = arith.truncf %430 : vector<2x256xf32> to vector<2x256xbf16>
    %c0_132 = arith.constant 0 : index
    %c0_133 = arith.constant 0 : index
    %c0_134 = arith.constant 0 : index
    %432 = vector.load %arg1[%c0_132, %c0_133, %c0_134] : memref<2x256x512xbf16, #tpu.memory_space<vmem>>, vector<1x256x512xbf16>
    %433 = vector.shape_cast %432 : vector<1x256x512xbf16> to vector<256x512xbf16>
    %cst_135 = arith.constant dense<0.000000e+00> : vector<2x512xf32>
    %434 = tpu.matmul %431, %433, %cst_135 {dimension_numbers = #tpu.dot_dimension_numbers<[1], [0], [0], [1], [0, 0, 1, 1], [], []>} : vector<2x256xbf16>, vector<256x512xbf16>, vector<2x512xf32> -> vector<2x512xf32>
    %c0_136 = arith.constant 0 : index
    %c0_137 = arith.constant 0 : index
    %c0_138 = arith.constant 0 : index
    %435 = vector.load %arg2[%c0_136, %c0_137, %c0_138] : memref<2x1x512xf32, #tpu.memory_space<vmem>>, vector<1x1x512xf32>
    %436 = vector.shape_cast %435 : vector<1x1x512xf32> to vector<1x512xf32>
    %437 = vector.broadcast %436 : vector<1x512xf32> to vector<2x512xf32>
    %438 = arith.addf %434, %437 : vector<2x512xf32>
    %439 = vector.extract_strided_slice %438 {offsets = [0, 0], sizes = [2, 128], strides = [1, 1]} : vector<2x512xf32> to vector<2x128xf32>
    %440 = arith.negf %439 : vector<2x128xf32>
    %441 = math.exp %440 : vector<2x128xf32>
    %cst_139 = arith.constant 1.000000e+00 : f32
    %442 = vector.broadcast %cst_139 : f32 to vector<2x128xf32>
    %443 = arith.addf %442, %441 : vector<2x128xf32>
    %444 = arith.divf %442, %443 : vector<2x128xf32>
    %445 = vector.extract_strided_slice %438 {offsets = [0, 128], sizes = [2, 128], strides = [1, 1]} : vector<2x512xf32> to vector<2x128xf32>
    %446 = arith.negf %445 : vector<2x128xf32>
    %447 = math.exp %446 : vector<2x128xf32>
    %cst_140 = arith.constant 1.000000e+00 : f32
    %448 = vector.broadcast %cst_140 : f32 to vector<2x128xf32>
    %449 = arith.addf %448, %447 : vector<2x128xf32>
    %450 = arith.divf %448, %449 : vector<2x128xf32>
    %451 = vector.extract_strided_slice %438 {offsets = [0, 256], sizes = [2, 128], strides = [1, 1]} : vector<2x512xf32> to vector<2x128xf32>
    %452 = math.tanh %451 : vector<2x128xf32>
    %453 = vector.extract_strided_slice %438 {offsets = [0, 384], sizes = [2, 128], strides = [1, 1]} : vector<2x512xf32> to vector<2x128xf32>
    %454 = arith.negf %453 : vector<2x128xf32>
    %455 = math.exp %454 : vector<2x128xf32>
    %cst_141 = arith.constant 1.000000e+00 : f32
    %456 = vector.broadcast %cst_141 : f32 to vector<2x128xf32>
    %457 = arith.addf %456, %455 : vector<2x128xf32>
    %458 = arith.divf %456, %457 : vector<2x128xf32>
    %459 = arith.mulf %450, %390 : vector<2x128xf32>
    %460 = arith.mulf %444, %452 : vector<2x128xf32>
    %461 = arith.addf %459, %460 : vector<2x128xf32>
    %462 = math.tanh %461 : vector<2x128xf32>
    %463 = arith.mulf %458, %462 : vector<2x128xf32>
    %464 = tpu.concatenate %463, %426 in 1 : vector<2x128xf32>, vector<2x128xf32> -> vector<2x256xf32>
    %465 = arith.truncf %464 : vector<2x256xf32> to vector<2x256xbf16>
    %c1_142 = arith.constant 1 : index
    %c0_143 = arith.constant 0 : index
    %c0_144 = arith.constant 0 : index
    %466 = vector.load %arg1[%c1_142, %c0_143, %c0_144] : memref<2x256x512xbf16, #tpu.memory_space<vmem>>, vector<1x256x512xbf16>
    %467 = vector.shape_cast %466 : vector<1x256x512xbf16> to vector<256x512xbf16>
    %cst_145 = arith.constant dense<0.000000e+00> : vector<2x512xf32>
    %468 = tpu.matmul %465, %467, %cst_145 {dimension_numbers = #tpu.dot_dimension_numbers<[1], [0], [0], [1], [0, 0, 1, 1], [], []>} : vector<2x256xbf16>, vector<256x512xbf16>, vector<2x512xf32> -> vector<2x512xf32>
    %c1_146 = arith.constant 1 : index
    %c0_147 = arith.constant 0 : index
    %c0_148 = arith.constant 0 : index
    %469 = vector.load %arg2[%c1_146, %c0_147, %c0_148] : memref<2x1x512xf32, #tpu.memory_space<vmem>>, vector<1x1x512xf32>
    %470 = vector.shape_cast %469 : vector<1x1x512xf32> to vector<1x512xf32>
    %471 = vector.broadcast %470 : vector<1x512xf32> to vector<2x512xf32>
    %472 = arith.addf %468, %471 : vector<2x512xf32>
    %473 = vector.extract_strided_slice %472 {offsets = [0, 0], sizes = [2, 128], strides = [1, 1]} : vector<2x512xf32> to vector<2x128xf32>
    %474 = arith.negf %473 : vector<2x128xf32>
    %475 = math.exp %474 : vector<2x128xf32>
    %cst_149 = arith.constant 1.000000e+00 : f32
    %476 = vector.broadcast %cst_149 : f32 to vector<2x128xf32>
    %477 = arith.addf %476, %475 : vector<2x128xf32>
    %478 = arith.divf %476, %477 : vector<2x128xf32>
    %479 = vector.extract_strided_slice %472 {offsets = [0, 128], sizes = [2, 128], strides = [1, 1]} : vector<2x512xf32> to vector<2x128xf32>
    %480 = arith.negf %479 : vector<2x128xf32>
    %481 = math.exp %480 : vector<2x128xf32>
    %cst_150 = arith.constant 1.000000e+00 : f32
    %482 = vector.broadcast %cst_150 : f32 to vector<2x128xf32>
    %483 = arith.addf %482, %481 : vector<2x128xf32>
    %484 = arith.divf %482, %483 : vector<2x128xf32>
    %485 = vector.extract_strided_slice %472 {offsets = [0, 256], sizes = [2, 128], strides = [1, 1]} : vector<2x512xf32> to vector<2x128xf32>
    %486 = math.tanh %485 : vector<2x128xf32>
    %487 = vector.extract_strided_slice %472 {offsets = [0, 384], sizes = [2, 128], strides = [1, 1]} : vector<2x512xf32> to vector<2x128xf32>
    %488 = arith.negf %487 : vector<2x128xf32>
    %489 = math.exp %488 : vector<2x128xf32>
    %cst_151 = arith.constant 1.000000e+00 : f32
    %490 = vector.broadcast %cst_151 : f32 to vector<2x128xf32>
    %491 = arith.addf %490, %489 : vector<2x128xf32>
    %492 = arith.divf %490, %491 : vector<2x128xf32>
    %493 = arith.mulf %484, %424 : vector<2x128xf32>
    %494 = arith.mulf %478, %486 : vector<2x128xf32>
    %495 = arith.addf %493, %494 : vector<2x128xf32>
    %496 = math.tanh %495 : vector<2x128xf32>
    %497 = arith.mulf %492, %496 : vector<2x128xf32>
    %c7_i32 = arith.constant 7 : i32
    %498 = arith.index_cast %c7_i32 : i32 to index
    %c0_152 = arith.constant 0 : index
    %c0_153 = arith.constant 0 : index
    %499 = vector.load %arg0[%498, %c0_152, %c0_153] : memref<8x2x128xf32, #tpu.memory_space<vmem>>, vector<1x2x128xf32>
    %500 = vector.shape_cast %499 : vector<1x2x128xf32> to vector<2x128xf32>
    %501 = tpu.concatenate %500, %463 in 1 : vector<2x128xf32>, vector<2x128xf32> -> vector<2x256xf32>
    %502 = arith.truncf %501 : vector<2x256xf32> to vector<2x256xbf16>
    %c0_154 = arith.constant 0 : index
    %c0_155 = arith.constant 0 : index
    %c0_156 = arith.constant 0 : index
    %503 = vector.load %arg1[%c0_154, %c0_155, %c0_156] : memref<2x256x512xbf16, #tpu.memory_space<vmem>>, vector<1x256x512xbf16>
    %504 = vector.shape_cast %503 : vector<1x256x512xbf16> to vector<256x512xbf16>
    %cst_157 = arith.constant dense<0.000000e+00> : vector<2x512xf32>
    %505 = tpu.matmul %502, %504, %cst_157 {dimension_numbers = #tpu.dot_dimension_numbers<[1], [0], [0], [1], [0, 0, 1, 1], [], []>} : vector<2x256xbf16>, vector<256x512xbf16>, vector<2x512xf32> -> vector<2x512xf32>
    %c0_158 = arith.constant 0 : index
    %c0_159 = arith.constant 0 : index
    %c0_160 = arith.constant 0 : index
    %506 = vector.load %arg2[%c0_158, %c0_159, %c0_160] : memref<2x1x512xf32, #tpu.memory_space<vmem>>, vector<1x1x512xf32>
    %507 = vector.shape_cast %506 : vector<1x1x512xf32> to vector<1x512xf32>
    %508 = vector.broadcast %507 : vector<1x512xf32> to vector<2x512xf32>
    %509 = arith.addf %505, %508 : vector<2x512xf32>
    %510 = vector.extract_strided_slice %509 {offsets = [0, 0], sizes = [2, 128], strides = [1, 1]} : vector<2x512xf32> to vector<2x128xf32>
    %511 = arith.negf %510 : vector<2x128xf32>
    %512 = math.exp %511 : vector<2x128xf32>
    %cst_161 = arith.constant 1.000000e+00 : f32
    %513 = vector.broadcast %cst_161 : f32 to vector<2x128xf32>
    %514 = arith.addf %513, %512 : vector<2x128xf32>
    %515 = arith.divf %513, %514 : vector<2x128xf32>
    %516 = vector.extract_strided_slice %509 {offsets = [0, 128], sizes = [2, 128], strides = [1, 1]} : vector<2x512xf32> to vector<2x128xf32>
    %517 = arith.negf %516 : vector<2x128xf32>
    %518 = math.exp %517 : vector<2x128xf32>
    %cst_162 = arith.constant 1.000000e+00 : f32
    %519 = vector.broadcast %cst_162 : f32 to vector<2x128xf32>
    %520 = arith.addf %519, %518 : vector<2x128xf32>
    %521 = arith.divf %519, %520 : vector<2x128xf32>
    %522 = vector.extract_strided_slice %509 {offsets = [0, 256], sizes = [2, 128], strides = [1, 1]} : vector<2x512xf32> to vector<2x128xf32>
    %523 = math.tanh %522 : vector<2x128xf32>
    %524 = vector.extract_strided_slice %509 {offsets = [0, 384], sizes = [2, 128], strides = [1, 1]} : vector<2x512xf32> to vector<2x128xf32>
    %525 = arith.negf %524 : vector<2x128xf32>
    %526 = math.exp %525 : vector<2x128xf32>
    %cst_163 = arith.constant 1.000000e+00 : f32
    %527 = vector.broadcast %cst_163 : f32 to vector<2x128xf32>
    %528 = arith.addf %527, %526 : vector<2x128xf32>
    %529 = arith.divf %527, %528 : vector<2x128xf32>
    %530 = arith.mulf %521, %461 : vector<2x128xf32>
    %531 = arith.mulf %515, %523 : vector<2x128xf32>
    %532 = arith.addf %530, %531 : vector<2x128xf32>
    %533 = math.tanh %532 : vector<2x128xf32>
    %534 = arith.mulf %529, %533 : vector<2x128xf32>
    %535 = tpu.concatenate %534, %497 in 1 : vector<2x128xf32>, vector<2x128xf32> -> vector<2x256xf32>
    %536 = arith.truncf %535 : vector<2x256xf32> to vector<2x256xbf16>
    %c1_164 = arith.constant 1 : index
    %c0_165 = arith.constant 0 : index
    %c0_166 = arith.constant 0 : index
    %537 = vector.load %arg1[%c1_164, %c0_165, %c0_166] : memref<2x256x512xbf16, #tpu.memory_space<vmem>>, vector<1x256x512xbf16>
    %538 = vector.shape_cast %537 : vector<1x256x512xbf16> to vector<256x512xbf16>
    %cst_167 = arith.constant dense<0.000000e+00> : vector<2x512xf32>
    %539 = tpu.matmul %536, %538, %cst_167 {dimension_numbers = #tpu.dot_dimension_numbers<[1], [0], [0], [1], [0, 0, 1, 1], [], []>} : vector<2x256xbf16>, vector<256x512xbf16>, vector<2x512xf32> -> vector<2x512xf32>
    %c1_168 = arith.constant 1 : index
    %c0_169 = arith.constant 0 : index
    %c0_170 = arith.constant 0 : index
    %540 = vector.load %arg2[%c1_168, %c0_169, %c0_170] : memref<2x1x512xf32, #tpu.memory_space<vmem>>, vector<1x1x512xf32>
    %541 = vector.shape_cast %540 : vector<1x1x512xf32> to vector<1x512xf32>
    %542 = vector.broadcast %541 : vector<1x512xf32> to vector<2x512xf32>
    %543 = arith.addf %539, %542 : vector<2x512xf32>
    %544 = vector.extract_strided_slice %543 {offsets = [0, 0], sizes = [2, 128], strides = [1, 1]} : vector<2x512xf32> to vector<2x128xf32>
    %545 = arith.negf %544 : vector<2x128xf32>
    %546 = math.exp %545 : vector<2x128xf32>
    %cst_171 = arith.constant 1.000000e+00 : f32
    %547 = vector.broadcast %cst_171 : f32 to vector<2x128xf32>
    %548 = arith.addf %547, %546 : vector<2x128xf32>
    %549 = arith.divf %547, %548 : vector<2x128xf32>
    %550 = vector.extract_strided_slice %543 {offsets = [0, 128], sizes = [2, 128], strides = [1, 1]} : vector<2x512xf32> to vector<2x128xf32>
    %551 = arith.negf %550 : vector<2x128xf32>
    %552 = math.exp %551 : vector<2x128xf32>
    %cst_172 = arith.constant 1.000000e+00 : f32
    %553 = vector.broadcast %cst_172 : f32 to vector<2x128xf32>
    %554 = arith.addf %553, %552 : vector<2x128xf32>
    %555 = arith.divf %553, %554 : vector<2x128xf32>
    %556 = vector.extract_strided_slice %543 {offsets = [0, 256], sizes = [2, 128], strides = [1, 1]} : vector<2x512xf32> to vector<2x128xf32>
    %557 = math.tanh %556 : vector<2x128xf32>
    %558 = vector.extract_strided_slice %543 {offsets = [0, 384], sizes = [2, 128], strides = [1, 1]} : vector<2x512xf32> to vector<2x128xf32>
    %559 = arith.negf %558 : vector<2x128xf32>
    %560 = math.exp %559 : vector<2x128xf32>
    %cst_173 = arith.constant 1.000000e+00 : f32
    %561 = vector.broadcast %cst_173 : f32 to vector<2x128xf32>
    %562 = arith.addf %561, %560 : vector<2x128xf32>
    %563 = arith.divf %561, %562 : vector<2x128xf32>
    %564 = arith.mulf %555, %495 : vector<2x128xf32>
    %565 = arith.mulf %549, %557 : vector<2x128xf32>
    %566 = arith.addf %564, %565 : vector<2x128xf32>
    %567 = math.tanh %566 : vector<2x128xf32>
    %568 = arith.mulf %563, %567 : vector<2x128xf32>
    %c8_i32 = arith.constant 8 : i32
    %c0_174 = arith.constant 0 : index
    %c0_175 = arith.constant 0 : index
    %569 = vector.load %arg4[%c0_174, %c0_175] : memref<1x128xf32, #tpu.memory_space<vmem>>, vector<1x128xf32>
    %c0_176 = arith.constant 0 : index
    %c0_177 = arith.constant 0 : index
    %570 = vector.load %arg4[%c0_176, %c0_177] : memref<1x128xf32, #tpu.memory_space<vmem>>, vector<1x128xf32>
    %571 = vector.extract_strided_slice %534 {offsets = [0, 0], sizes = [1, 128], strides = [1, 1]} : vector<2x128xf32> to vector<1x128xf32>
    %c0_178 = arith.constant 0 : index
    %c0_179 = arith.constant 0 : index
    %c0_180 = arith.constant 0 : index
    %c0_181 = arith.constant 0 : index
    %572 = vector.load %arg3[%c0_178, %c0_179, %c0_180, %c0_181] : memref<2x2x128x128xf32, #tpu.memory_space<vmem>>, vector<1x1x128x128xf32>
    %573 = vector.shape_cast %572 : vector<1x1x128x128xf32> to vector<128x128xf32>
    %cst_182 = arith.constant dense<0.000000e+00> : vector<1x128xf32>
    %574 = tpu.matmul %571, %573, %cst_182 {dimension_numbers = #tpu.dot_dimension_numbers<[1], [0], [0], [1], [0, 0, 1, 1], [], []>} : vector<1x128xf32>, vector<128x128xf32>, vector<1x128xf32> -> vector<1x128xf32>
    %575 = arith.addf %569, %574 : vector<1x128xf32>
    %576 = vector.extract_strided_slice %534 {offsets = [1, 0], sizes = [1, 128], strides = [1, 1]} : vector<2x128xf32> to vector<1x128xf32>
    %c0_183 = arith.constant 0 : index
    %c1_184 = arith.constant 1 : index
    %c0_185 = arith.constant 0 : index
    %c0_186 = arith.constant 0 : index
    %577 = vector.load %arg3[%c0_183, %c1_184, %c0_185, %c0_186] : memref<2x2x128x128xf32, #tpu.memory_space<vmem>>, vector<1x1x128x128xf32>
    %578 = vector.shape_cast %577 : vector<1x1x128x128xf32> to vector<128x128xf32>
    %cst_187 = arith.constant dense<0.000000e+00> : vector<1x128xf32>
    %579 = tpu.matmul %576, %578, %cst_187 {dimension_numbers = #tpu.dot_dimension_numbers<[1], [0], [0], [1], [0, 0, 1, 1], [], []>} : vector<1x128xf32>, vector<128x128xf32>, vector<1x128xf32> -> vector<1x128xf32>
    %580 = arith.addf %575, %579 : vector<1x128xf32>
    %581 = vector.extract_strided_slice %568 {offsets = [0, 0], sizes = [1, 128], strides = [1, 1]} : vector<2x128xf32> to vector<1x128xf32>
    %c1_188 = arith.constant 1 : index
    %c0_189 = arith.constant 0 : index
    %c0_190 = arith.constant 0 : index
    %c0_191 = arith.constant 0 : index
    %582 = vector.load %arg3[%c1_188, %c0_189, %c0_190, %c0_191] : memref<2x2x128x128xf32, #tpu.memory_space<vmem>>, vector<1x1x128x128xf32>
    %583 = vector.shape_cast %582 : vector<1x1x128x128xf32> to vector<128x128xf32>
    %cst_192 = arith.constant dense<0.000000e+00> : vector<1x128xf32>
    %584 = tpu.matmul %581, %583, %cst_192 {dimension_numbers = #tpu.dot_dimension_numbers<[1], [0], [0], [1], [0, 0, 1, 1], [], []>} : vector<1x128xf32>, vector<128x128xf32>, vector<1x128xf32> -> vector<1x128xf32>
    %585 = arith.addf %570, %584 : vector<1x128xf32>
    %586 = vector.extract_strided_slice %568 {offsets = [1, 0], sizes = [1, 128], strides = [1, 1]} : vector<2x128xf32> to vector<1x128xf32>
    %c1_193 = arith.constant 1 : index
    %c1_194 = arith.constant 1 : index
    %c0_195 = arith.constant 0 : index
    %c0_196 = arith.constant 0 : index
    %587 = vector.load %arg3[%c1_193, %c1_194, %c0_195, %c0_196] : memref<2x2x128x128xf32, #tpu.memory_space<vmem>>, vector<1x1x128x128xf32>
    %588 = vector.shape_cast %587 : vector<1x1x128x128xf32> to vector<128x128xf32>
    %cst_197 = arith.constant dense<0.000000e+00> : vector<1x128xf32>
    %589 = tpu.matmul %586, %588, %cst_197 {dimension_numbers = #tpu.dot_dimension_numbers<[1], [0], [0], [1], [0, 0, 1, 1], [], []>} : vector<1x128xf32>, vector<128x128xf32>, vector<1x128xf32> -> vector<1x128xf32>
    %590 = arith.addf %585, %589 : vector<1x128xf32>
    %591 = tpu.concatenate %580, %590 in 0 : vector<1x128xf32>, vector<1x128xf32> -> vector<2x128xf32>
    %c0_198 = arith.constant 0 : index
    %c0_199 = arith.constant 0 : index
    %592 = vector.load %arg5[%c0_198, %c0_199] : memref<2x128xf32, #tpu.memory_space<vmem>>, vector<2x128xf32>
    tpu.vector_store %arg5[%c0_198, %c0_199], %591 {strides = array<i32>} : memref<2x128xf32, #tpu.memory_space<vmem>>, vector<2x128xf32>,
    return
  }
}

</mosaic_0001>

<llo_original>
// kernel: a_call__.1
$region0: #{a_call__.1}
  #allocation0 [shape = 'u32[]', space=smem, size = 0x4, offset = 0x4, fixed_abs, tag = 'smem constant byte address 0x4 - core index']
  #allocation1 [shape = 'u32[144,128]{1,0:T(1,128)}', space=vmem, size = 0x12000, scoped, tag = 'internal scratch']
  %s0 = inlined_call_operand.vmem [shape: f32[8,2,128], index: 0, kind: input, shape index: {}]
  %s1 = inlined_call_operand.vmem [shape: bf16[2,256,512], index: 1, kind: input, shape index: {}]
  %s2 = inlined_call_operand.vmem [shape: f32[2,1,512], index: 2, kind: input, shape index: {}]
  %s3 = inlined_call_operand.vmem [shape: f32[2,2,128,128], index: 3, kind: input, shape index: {}]
  %s4 = inlined_call_operand.vmem [shape: f32[1,128], index: 4, kind: input, shape index: {}]
  %s5 = inlined_call_operand.vmem [shape: f32[2,128], index: 5, kind: output, shape index: {}]
  %s6 = sld [smem:[#allocation0]]
  $region30: #{a_call__.1} parent=0
    _
  %s8 = ssub.s32 1, %s6
  %s9 = scalar_select 0, %s8, %s6
  // Predicated region
  $region2: #{a_call__.1} parent=0 // pred_check
    _
  $region3: #{a_call__.1} parent=0 // pred_check_branch
    %11 = sbr.rel (0) target = $region5
  $region4: #{a_call__.1} parent=0 // pred_region
    _
  $region5: #{a_call__.1} parent=0 // pred_fallthru
    _
  // Predicated region
  $region6: #{a_call__.1} parent=0 // pred_check
    _
  $region7: #{a_call__.1} parent=0 // pred_check_branch
    %13 = sbr.rel (0) target = $region9
  $region8: #{a_call__.1} parent=0 // pred_region
    _
  $region9: #{a_call__.1} parent=0 // pred_fallthru
    _
  // Predicated region
  $region10: #{a_call__.1} parent=0 // pred_check
    _
  $region11: #{a_call__.1} parent=0 // pred_check_branch
    %15 = sbr.rel (0) target = $region13
  $region12: #{a_call__.1} parent=0 // pred_region
    _
  $region13: #{a_call__.1} parent=0 // pred_fallthru
    _
  // Predicated region
  $region14: #{a_call__.1} parent=0 // pred_check
    _
  $region15: #{a_call__.1} parent=0 // pred_check_branch
    %17 = sbr.rel (0) target = $region17
  $region16: #{a_call__.1} parent=0 // pred_region
    _
  $region17: #{a_call__.1} parent=0 // pred_fallthru
    _
  // Predicated region
  $region18: #{a_call__.1} parent=0 // pred_check
    _
  $region19: #{a_call__.1} parent=0 // pred_check_branch
    %19 = sbr.rel (0) target = $region21
  $region20: #{a_call__.1} parent=0 // pred_region
    _
  $region21: #{a_call__.1} parent=0 // pred_fallthru
    _
  %v20 = vld [vmem:[%s0] sm:$0x3]
  %v21 = vpack.c.bf16 %v20, %v20
  %v22 = vpack.c.bf16 0.0, 0.0
  %v23 = vld [vmem:[%s1] sm:$0xff]
  %v24 = vld [vmem:[%s1 + $0x8] sm:$0xff]
  %v25 = vld [vmem:[%s1 + $0x10] sm:$0xff]
  %v26 = vld [vmem:[%s1 + $0x18] sm:$0xff]
  %v27 = vld [vmem:[%s1 + $0x20] sm:$0xff]
  %v28 = vld [vmem:[%s1 + $0x28] sm:$0xff]
  %v29 = vld [vmem:[%s1 + $0x30] sm:$0xff]
  %v30 = vld [vmem:[%s1 + $0x38] sm:$0xff]
  %v31 = vld [vmem:[%s1 + $0x40] sm:$0xff]
  %v32 = vld [vmem:[%s1 + $0x48] sm:$0xff]
  %v33 = vld [vmem:[%s1 + $0x50] sm:$0xff]
  %v34 = vld [vmem:[%s1 + $0x58] sm:$0xff]
  %v35 = vld [vmem:[%s1 + $0x60] sm:$0xff]
  %v36 = vld [vmem:[%s1 + $0x68] sm:$0xff]
  %v37 = vld [vmem:[%s1 + $0x70] sm:$0xff]
  %v38 = vld [vmem:[%s1 + $0x78] sm:$0xff]
  %v39 = vld [vmem:[%s1 + $0x80] sm:$0xff]
  %v40 = vld [vmem:[%s1 + $0x88] sm:$0xff]
  %v41 = vld [vmem:[%s1 + $0x90] sm:$0xff]
  %v42 = vld [vmem:[%s1 + $0x98] sm:$0xff]
  %v43 = vld [vmem:[%s1 + $0xa0] sm:$0xff]
  %v44 = vld [vmem:[%s1 + $0xa8] sm:$0xff]
  %v45 = vld [vmem:[%s1 + $0xb0] sm:$0xff]
  %v46 = vld [vmem:[%s1 + $0xb8] sm:$0xff]
  %v47 = vld [vmem:[%s1 + $0xc0] sm:$0xff]
  %v48 = vld [vmem:[%s1 + $0xc8] sm:$0xff]
  %v49 = vld [vmem:[%s1 + $0xd0] sm:$0xff]
  %v50 = vld [vmem:[%s1 + $0xd8] sm:$0xff]
  %v51 = vld [vmem:[%s1 + $0xe0] sm:$0xff]
  %v52 = vld [vmem:[%s1 + $0xe8] sm:$0xff]
  %v53 = vld [vmem:[%s1 + $0xf0] sm:$0xff]
  %v54 = vld [vmem:[%s1 + $0xf8] sm:$0xff]
  %v55 = vld [vmem:[%s1 + $0x100] sm:$0xff]
  %v56 = vld [vmem:[%s1 + $0x108] sm:$0xff]
  %v57 = vld [vmem:[%s1 + $0x110] sm:$0xff]
  %v58 = vld [vmem:[%s1 + $0x118] sm:$0xff]
  %v59 = vld [vmem:[%s1 + $0x120] sm:$0xff]
  %v60 = vld [vmem:[%s1 + $0x128] sm:$0xff]
  %v61 = vld [vmem:[%s1 + $0x130] sm:$0xff]
  %v62 = vld [vmem:[%s1 + $0x138] sm:$0xff]
  %v63 = vld [vmem:[%s1 + $0x140] sm:$0xff]
  %v64 = vld [vmem:[%s1 + $0x148] sm:$0xff]
  %v65 = vld [vmem:[%s1 + $0x150] sm:$0xff]
  %v66 = vld [vmem:[%s1 + $0x158] sm:$0xff]
  %v67 = vld [vmem:[%s1 + $0x160] sm:$0xff]
  %v68 = vld [vmem:[%s1 + $0x168] sm:$0xff]
  %v69 = vld [vmem:[%s1 + $0x170] sm:$0xff]
  %v70 = vld [vmem:[%s1 + $0x178] sm:$0xff]
  %v71 = vld [vmem:[%s1 + $0x180] sm:$0xff]
  %v72 = vld [vmem:[%s1 + $0x188] sm:$0xff]
  %v73 = vld [vmem:[%s1 + $0x190] sm:$0xff]
  %v74 = vld [vmem:[%s1 + $0x198] sm:$0xff]
  %v75 = vld [vmem:[%s1 + $0x1a0] sm:$0xff]
  %v76 = vld [vmem:[%s1 + $0x1a8] sm:$0xff]
  %v77 = vld [vmem:[%s1 + $0x1b0] sm:$0xff]
  %v78 = vld [vmem:[%s1 + $0x1b8] sm:$0xff]
  %v79 = vld [vmem:[%s1 + $0x1c0] sm:$0xff]
  %v80 = vld [vmem:[%s1 + $0x1c8] sm:$0xff]
  %v81 = vld [vmem:[%s1 + $0x1d0] sm:$0xff]
  %v82 = vld [vmem:[%s1 + $0x1d8] sm:$0xff]
  %v83 = vld [vmem:[%s1 + $0x1e0] sm:$0xff]
  %v84 = vld [vmem:[%s1 + $0x1e8] sm:$0xff]
  %v85 = vld [vmem:[%s1 + $0x1f0] sm:$0xff]
  %v86 = vld [vmem:[%s1 + $0x1f8] sm:$0xff]
  %v87 = vld [vmem:[%s2] sm:$0xf]
  %v89 = vlaneseq
  %v90 = vshrl.u32 %v89, 7
  %v91 = vsub.s32 0, %v90
  %v92 = vrot.slane %v87, %v91
  %v93 = vlaneseq
  %v94 = vshrl.u32 %v93, 7
  %v95 = vsub.s32 1, %v94
  %v96 = vrot.slane %v87, %v95
  %v97 = vlaneseq
  %v98 = vshrl.u32 %v97, 7
  %v99 = vsub.s32 2, %v98
  %v100 = vrot.slane %v87, %v99
  %v101 = vlaneseq
  %v102 = vshrl.u32 %v101, 7
  %v103 = vsub.s32 3, %v102
  %v104 = vrot.slane %v87, %v103
  %v173 = vunpack.c.l.b16 %v23
  %v174 = vunpack.c.h.b16 %v23
  %v175 = vunpack.c.l.b16 %v24
  %v176 = vunpack.c.h.b16 %v24
  %v177 = vunpack.c.l.b16 %v25
  %v178 = vunpack.c.h.b16 %v25
  %v179 = vunpack.c.l.b16 %v26
  %v180 = vunpack.c.h.b16 %v26
  %v181 = vunpack.c.l.b16 %v27
  %v182 = vunpack.c.h.b16 %v27
  %v183 = vunpack.c.l.b16 %v28
  %v184 = vunpack.c.h.b16 %v28
  %v185 = vunpack.c.l.b16 %v29
  %v186 = vunpack.c.h.b16 %v29
  %v187 = vunpack.c.l.b16 %v30
  %v188 = vunpack.c.h.b16 %v30
  %v189 = vunpack.c.l.b16 %v31
  %v190 = vunpack.c.h.b16 %v31
  %v191 = vunpack.c.l.b16 %v32
  %v192 = vunpack.c.h.b16 %v32
  %v193 = vunpack.c.l.b16 %v33
  %v194 = vunpack.c.h.b16 %v33
  %v195 = vunpack.c.l.b16 %v34
  %v196 = vunpack.c.h.b16 %v34
  %v197 = vunpack.c.l.b16 %v35
  %v198 = vunpack.c.h.b16 %v35
  %v199 = vunpack.c.l.b16 %v36
  %v200 = vunpack.c.h.b16 %v36
  %v201 = vunpack.c.l.b16 %v37
  %v202 = vunpack.c.h.b16 %v37
  %v203 = vunpack.c.l.b16 %v38
  %v204 = vunpack.c.h.b16 %v38
  %v205 = vunpack.c.l.b16 %v39
  %v206 = vunpack.c.h.b16 %v39
  %v207 = vunpack.c.l.b16 %v40
  %v208 = vunpack.c.h.b16 %v40
  %v209 = vunpack.c.l.b16 %v41
  %v210 = vunpack.c.h.b16 %v41
  %v211 = vunpack.c.l.b16 %v42
  %v212 = vunpack.c.h.b16 %v42
  %v213 = vunpack.c.l.b16 %v43
  %v214 = vunpack.c.h.b16 %v43
  %v215 = vunpack.c.l.b16 %v44
  %v216 = vunpack.c.h.b16 %v44
  %v217 = vunpack.c.l.b16 %v45
  %v218 = vunpack.c.h.b16 %v45
  %v219 = vunpack.c.l.b16 %v46
  %v220 = vunpack.c.h.b16 %v46
  %v221 = vunpack.c.l.b16 %v47
  %v222 = vunpack.c.h.b16 %v47
  %v223 = vunpack.c.l.b16 %v48
  %v224 = vunpack.c.h.b16 %v48
  %v225 = vunpack.c.l.b16 %v49
  %v226 = vunpack.c.h.b16 %v49
  %v227 = vunpack.c.l.b16 %v50
  %v228 = vunpack.c.h.b16 %v50
  %v229 = vunpack.c.l.b16 %v51
  %v230 = vunpack.c.h.b16 %v51
  %v231 = vunpack.c.l.b16 %v52
  %v232 = vunpack.c.h.b16 %v52
  %v233 = vunpack.c.l.b16 %v53
  %v234 = vunpack.c.h.b16 %v53
  %v235 = vunpack.c.l.b16 %v54
  %v236 = vunpack.c.h.b16 %v54
  %v237 = vunpack.c.l.b16 %v55
  %v238 = vunpack.c.h.b16 %v55
  %v239 = vunpack.c.l.b16 %v56
  %v240 = vunpack.c.h.b16 %v56
  %v241 = vunpack.c.l.b16 %v57
  %v242 = vunpack.c.h.b16 %v57
  %v243 = vunpack.c.l.b16 %v58
  %v244 = vunpack.c.h.b16 %v58
  %v245 = vunpack.c.l.b16 %v59
  %v246 = vunpack.c.h.b16 %v59
  %v247 = vunpack.c.l.b16 %v60
  %v248 = vunpack.c.h.b16 %v60
  %v249 = vunpack.c.l.b16 %v61
  %v250 = vunpack.c.h.b16 %v61
  %v251 = vunpack.c.l.b16 %v62
  %v252 = vunpack.c.h.b16 %v62
  %v253 = vunpack.c.l.b16 %v63
  %v254 = vunpack.c.h.b16 %v63
  %v255 = vunpack.c.l.b16 %v64
  %v256 = vunpack.c.h.b16 %v64
  %v257 = vunpack.c.l.b16 %v65
  %v258 = vunpack.c.h.b16 %v65
  %v259 = vunpack.c.l.b16 %v66
  %v260 = vunpack.c.h.b16 %v66
  %v261 = vunpack.c.l.b16 %v67
  %v262 = vunpack.c.h.b16 %v67
  %v263 = vunpack.c.l.b16 %v68
  %v264 = vunpack.c.h.b16 %v68
  %v265 = vunpack.c.l.b16 %v69
  %v266 = vunpack.c.h.b16 %v69
  %v267 = vunpack.c.l.b16 %v70
  %v268 = vunpack.c.h.b16 %v70
  %v269 = vunpack.c.l.b16 %v71
  %v270 = vunpack.c.h.b16 %v71
  %v271 = vunpack.c.l.b16 %v72
  %v272 = vunpack.c.h.b16 %v72
  %v273 = vunpack.c.l.b16 %v73
  %v274 = vunpack.c.h.b16 %v73
  %v275 = vunpack.c.l.b16 %v74
  %v276 = vunpack.c.h.b16 %v74
  %v277 = vunpack.c.l.b16 %v75
  %v278 = vunpack.c.h.b16 %v75
  %v279 = vunpack.c.l.b16 %v76
  %v280 = vunpack.c.h.b16 %v76
  %v281 = vunpack.c.l.b16 %v77
  %v282 = vunpack.c.h.b16 %v77
  %v283 = vunpack.c.l.b16 %v78
  %v284 = vunpack.c.h.b16 %v78
  %v285 = vunpack.c.l.b16 %v79
  %v286 = vunpack.c.h.b16 %v79
  %v287 = vunpack.c.l.b16 %v80
  %v288 = vunpack.c.h.b16 %v80
  %v289 = vunpack.c.l.b16 %v81
  %v290 = vunpack.c.h.b16 %v81
  %v291 = vunpack.c.l.b16 %v82
  %v292 = vunpack.c.h.b16 %v82
  %v293 = vunpack.c.l.b16 %v83
  %v294 = vunpack.c.h.b16 %v83
  %v295 = vunpack.c.l.b16 %v84
  %v296 = vunpack.c.h.b16 %v84
  %v297 = vunpack.c.l.b16 %v85
  %v298 = vunpack.c.h.b16 %v85
  %v299 = vunpack.c.l.b16 %v86
  %v300 = vunpack.c.h.b16 %v86
  %v301 = vpack.c.b16 %v177, %v173
  %v302 = vpack.c.b16 %v178, %v174
  %v303 = vpack.c.b16 %v179, %v175
  %v304 = vpack.c.b16 %v180, %v176
  %v305 = vpack.c.b16 %v185, %v181
  %v306 = vpack.c.b16 %v186, %v182
  %v307 = vpack.c.b16 %v187, %v183
  %v308 = vpack.c.b16 %v188, %v184
  %v309 = vpack.c.b16 %v193, %v189
  %v310 = vpack.c.b16 %v194, %v190
  %v311 = vpack.c.b16 %v195, %v191
  %v312 = vpack.c.b16 %v196, %v192
  %v313 = vpack.c.b16 %v201, %v197
  %v314 = vpack.c.b16 %v202, %v198
  %v315 = vpack.c.b16 %v203, %v199
  %v316 = vpack.c.b16 %v204, %v200
  %v317 = vpack.c.b16 %v209, %v205
  %v318 = vpack.c.b16 %v210, %v206
  %v319 = vpack.c.b16 %v211, %v207
  %v320 = vpack.c.b16 %v212, %v208
  %v321 = vpack.c.b16 %v217, %v213
  %v322 = vpack.c.b16 %v218, %v214
  %v323 = vpack.c.b16 %v219, %v215
  %v324 = vpack.c.b16 %v220, %v216
  %v325 = vpack.c.b16 %v225, %v221
  %v326 = vpack.c.b16 %v226, %v222
  %v327 = vpack.c.b16 %v227, %v223
  %v328 = vpack.c.b16 %v228, %v224
  %v329 = vpack.c.b16 %v233, %v229
  %v330 = vpack.c.b16 %v234, %v230
  %v331 = vpack.c.b16 %v235, %v231
  %v332 = vpack.c.b16 %v236, %v232
  %v333 = vpack.c.b16 %v241, %v237
  %v334 = vpack.c.b16 %v242, %v238
  %v335 = vpack.c.b16 %v243, %v239
  %v336 = vpack.c.b16 %v244, %v240
  %v337 = vpack.c.b16 %v249, %v245
  %v338 = vpack.c.b16 %v250, %v246
  %v339 = vpack.c.b16 %v251, %v247
  %v340 = vpack.c.b16 %v252, %v248
  %v341 = vpack.c.b16 %v257, %v253
  %v342 = vpack.c.b16 %v258, %v254
  %v343 = vpack.c.b16 %v259, %v255
  %v344 = vpack.c.b16 %v260, %v256
  %v345 = vpack.c.b16 %v265, %v261
  %v346 = vpack.c.b16 %v266, %v262
  %v347 = vpack.c.b16 %v267, %v263
  %v348 = vpack.c.b16 %v268, %v264
  %v349 = vpack.c.b16 %v273, %v269
  %v350 = vpack.c.b16 %v274, %v270
  %v351 = vpack.c.b16 %v275, %v271
  %v352 = vpack.c.b16 %v276, %v272
  %v353 = vpack.c.b16 %v281, %v277
  %v354 = vpack.c.b16 %v282, %v278
  %v355 = vpack.c.b16 %v283, %v279
  %v356 = vpack.c.b16 %v284, %v280
  %v357 = vpack.c.b16 %v289, %v285
  %v358 = vpack.c.b16 %v290, %v286
  %v359 = vpack.c.b16 %v291, %v287
  %v360 = vpack.c.b16 %v292, %v288
  %v361 = vpack.c.b16 %v297, %v293
  %v362 = vpack.c.b16 %v298, %v294
  %v363 = vpack.c.b16 %v299, %v295
  %v364 = vpack.c.b16 %v300, %v296
  %429 = vmatprep.subr.bf16.mxu0 %v302
  %430 = vmatpush1.bf16.msra.mxu0 %v301
  %431 = vmatprep.subr.bf16.mxu0 %v306
  %432 = vmatpush1.bf16.msra.mxu0 %v305
  %433 = vmatprep.subr.bf16.mxu0 %v310
  %434 = vmatpush1.bf16.msra.mxu0 %v309
  %435 = vmatprep.subr.bf16.mxu0 %v314
  %436 = vmatpush1.bf16.msra.mxu0 %v313
  %437 = vmatprep.subr.bf16.mxu0 %v318
  %438 = vmatpush1.bf16.msra.mxu0 %v317
  %439 = vmatprep.subr.bf16.mxu0 %v322
  %440 = vmatpush1.bf16.msra.mxu0 %v321
  %441 = vmatprep.subr.bf16.mxu0 %v326
  %442 = vmatpush1.bf16.msra.mxu0 %v325
  %443 = vmatprep.subr.bf16.mxu0 %v330
  %444 = vmatpush1.bf16.msra.mxu0 %v329
  %445 = vmatprep.subr.bf16.mxu0 %v334
  %446 = vmatpush1.bf16.msra.mxu0 %v333
  %447 = vmatprep.subr.bf16.mxu0 %v338
  %448 = vmatpush1.bf16.msra.mxu0 %v337
  %449 = vmatprep.subr.bf16.mxu0 %v342
  %450 = vmatpush1.bf16.msra.mxu0 %v341
  %451 = vmatprep.subr.bf16.mxu0 %v346
  %452 = vmatpush1.bf16.msra.mxu0 %v345
  %453 = vmatprep.subr.bf16.mxu0 %v350
  %454 = vmatpush1.bf16.msra.mxu0 %v349
  %455 = vmatprep.subr.bf16.mxu0 %v354
  %456 = vmatpush1.bf16.msra.mxu0 %v353
  %457 = vmatprep.subr.bf16.mxu0 %v358
  %458 = vmatpush1.bf16.msra.mxu0 %v357
  %459 = vmatprep.subr.bf16.mxu0 %v362
  %460 = vmatpush1.bf16.msra.mxu0 %v361
  %461 = vmatprep.mubr.bf16.mxu0 %v22
  %462 = vmatmul.mubr.bf16.gmra.mrb[0].mxu0 %v21
  %v463 = vpop.f32.mrb[0].mxu0
  %v464 = vadd.f32 %v92, %v463
  %v465 = vpop.f32.mrb[0].mxu0
  %v466 = vadd.f32 %v96, %v465
  %v467 = vpop.f32.mrb[0].mxu0
  %v468 = vpop.f32.mrb[0].mxu0
  %469 = vdwg.mxu0
  %470 = vmatprep.subr.bf16.mxu0 %v304
  %471 = vmatpush1.bf16.msra.mxu0 %v303
  %472 = vmatprep.subr.bf16.mxu0 %v308
  %473 = vmatpush1.bf16.msra.mxu0 %v307
  %474 = vmatprep.subr.bf16.mxu0 %v312
  %475 = vmatpush1.bf16.msra.mxu0 %v311
  %476 = vmatprep.subr.bf16.mxu0 %v316
  %477 = vmatpush1.bf16.msra.mxu0 %v315
  %478 = vmatprep.subr.bf16.mxu0 %v320
  %479 = vmatpush1.bf16.msra.mxu0 %v319
  %480 = vmatprep.subr.bf16.mxu0 %v324
  %481 = vmatpush1.bf16.msra.mxu0 %v323
  %482 = vmatprep.subr.bf16.mxu0 %v328
  %483 = vmatpush1.bf16.msra.mxu0 %v327
  %484 = vmatprep.subr.bf16.mxu0 %v332
  %485 = vmatpush1.bf16.msra.mxu0 %v331
  %486 = vmatprep.subr.bf16.mxu0 %v336
  %487 = vmatpush1.bf16.msra.mxu0 %v335
  %488 = vmatprep.subr.bf16.mxu0 %v340
  %489 = vmatpush1.bf16.msra.mxu0 %v339
  %490 = vmatprep.subr.bf16.mxu0 %v344
  %491 = vmatpush1.bf16.msra.mxu0 %v343
  %492 = vmatprep.subr.bf16.mxu0 %v348
  %493 = vmatpush1.bf16.msra.mxu0 %v347
  %494 = vmatprep.subr.bf16.mxu0 %v352
  %495 = vmatpush1.bf16.msra.mxu0 %v351
  %496 = vmatprep.subr.bf16.mxu0 %v356
  %497 = vmatpush1.bf16.msra.mxu0 %v355
  %498 = vmatprep.subr.bf16.mxu0 %v360
  %499 = vmatpush1.bf16.msra.mxu0 %v359
  %500 = vmatprep.subr.bf16.mxu0 %v364
  %501 = vmatpush1.bf16.msra.mxu0 %v363
  %502 = vmatprep.mubr.bf16.mxu0 %v22
  %503 = vmatmul.mubr.bf16.gmra.mrb[0].mxu0 %v21
  %v504 = vpop.f32.mrb[0].mxu0
  %v505 = vadd.f32 %v100, %v504
  %v506 = vpop.f32.mrb[0].mxu0
  %v507 = vadd.f32 %v104, %v506
  %v508 = vpop.f32.mrb[0].mxu0
  %v509 = vpop.f32.mrb[0].mxu0
  %510 = vdwg.mxu0
  %v511 = vxor.u32 %v464, 2147483648
  %v512 = vmul.f32 %v511, 1.442695
  %v513 = vpow.pop %v512
  %v514 = vadd.f32 %v513, 1.0
  %v515 = vrcp.pop %v514
  %v516 = vmul.f32 1.0, %v515
  %v517 = vxor.u32 %v466, 2147483648
  %v518 = vmul.f32 %v517, 1.442695
  %v519 = vpow.pop %v518
  %v520 = vadd.f32 %v519, 1.0
  %v521 = vrcp.pop %v520
  %v522 = vmul.f32 1.0, %v521
  %v523 = vtanh.pop %v505
  %v524 = vxor.u32 %v507, 2147483648
  %v525 = vmul.f32 %v524, 1.442695
  %v526 = vpow.pop %v525
  %v527 = vadd.f32 %v526, 1.0
  %v528 = vrcp.pop %v527
  %v529 = vmul.f32 1.0, %v528
  %v530 = vmul.f32 %v522, 0.0
  %v531 = vmul.f32 %v516, %v523
  %v532 = vadd.f32 %v530, %v531
  %v533 = vtanh.pop %v532
  %v534 = vmul.f32 %v529, %v533
  %v535 = vpack.c.bf16 %v534, %v534
  %s536 = scalar_lea.vmem %s1, 512
  %v537 = vld [vmem:[%s536] sm:$0xff]
  %v538 = vld [vmem:[%s536 + $0x8] sm:$0xff]
  %v539 = vld [vmem:[%s536 + $0x10] sm:$0xff]
  %v540 = vld [vmem:[%s536 + $0x18] sm:$0xff]
  %v541 = vld [vmem:[%s536 + $0x20] sm:$0xff]
  %v542 = vld [vmem:[%s536 + $0x28] sm:$0xff]
  %v543 = vld [vmem:[%s536 + $0x30] sm:$0xff]
  %v544 = vld [vmem:[%s536 + $0x38] sm:$0xff]
  %v545 = vld [vmem:[%s536 + $0x40] sm:$0xff]
  %v546 = vld [vmem:[%s536 + $0x48] sm:$0xff]
  %v547 = vld [vmem:[%s536 + $0x50] sm:$0xff]
  %v548 = vld [vmem:[%s536 + $0x58] sm:$0xff]
  %v549 = vld [vmem:[%s536 + $0x60] sm:$0xff]
  %v550 = vld [vmem:[%s536 + $0x68] sm:$0xff]
  %v551 = vld [vmem:[%s536 + $0x70] sm:$0xff]
  %v552 = vld [vmem:[%s536 + $0x78] sm:$0xff]
  %v553 = vld [vmem:[%s536 + $0x80] sm:$0xff]
  %v554 = vld [vmem:[%s536 + $0x88] sm:$0xff]
  %v555 = vld [vmem:[%s536 + $0x90] sm:$0xff]
  %v556 = vld [vmem:[%s536 + $0x98] sm:$0xff]
  %v557 = vld [vmem:[%s536 + $0xa0] sm:$0xff]
  %v558 = vld [vmem:[%s536 + $0xa8] sm:$0xff]
  %v559 = vld [vmem:[%s536 + $0xb0] sm:$0xff]
  %v560 = vld [vmem:[%s536 + $0xb8] sm:$0xff]
  %v561 = vld [vmem:[%s536 + $0xc0] sm:$0xff]
  %v562 = vld [vmem:[%s536 + $0xc8] sm:$0xff]
  %v563 = vld [vmem:[%s536 + $0xd0] sm:$0xff]
  %v564 = vld [vmem:[%s536 + $0xd8] sm:$0xff]
  %v565 = vld [vmem:[%s536 + $0xe0] sm:$0xff]
  %v566 = vld [vmem:[%s536 + $0xe8] sm:$0xff]
  %v567 = vld [vmem:[%s536 + $0xf0] sm:$0xff]
  %v568 = vld [vmem:[%s536 + $0xf8] sm:$0xff]
  %v569 = vld [vmem:[%s536 + $0x100] sm:$0xff]
  %v570 = vld [vmem:[%s536 + $0x108] sm:$0xff]
  %v571 = vld [vmem:[%s536 + $0x110] sm:$0xff]
  %v572 = vld [vmem:[%s536 + $0x118] sm:$0xff]
  %v573 = vld [vmem:[%s536 + $0x120] sm:$0xff]
  %v574 = vld [vmem:[%s536 + $0x128] sm:$0xff]
  %v575 = vld [vmem:[%s536 + $0x130] sm:$0xff]
  %v576 = vld [vmem:[%s536 + $0x138] sm:$0xff]
  %v577 = vld [vmem:[%s536 + $0x140] sm:$0xff]
  %v578 = vld [vmem:[%s536 + $0x148] sm:$0xff]
  %v579 = vld [vmem:[%s536 + $0x150] sm:$0xff]
  %v580 = vld [vmem:[%s536 + $0x158] sm:$0xff]
  %v581 = vld [vmem:[%s536 + $0x160] sm:$0xff]
  %v582 = vld [vmem:[%s536 + $0x168] sm:$0xff]
  %v583 = vld [vmem:[%s536 + $0x170] sm:$0xff]
  %v584 = vld [vmem:[%s536 + $0x178] sm:$0xff]
  %v585 = vld [vmem:[%s536 + $0x180] sm:$0xff]
  %v586 = vld [vmem:[%s536 + $0x188] sm:$0xff]
  %v587 = vld [vmem:[%s536 + $0x190] sm:$0xff]
  %v588 = vld [vmem:[%s536 + $0x198] sm:$0xff]
  %v589 = vld [vmem:[%s536 + $0x1a0] sm:$0xff]
  %v590 = vld [vmem:[%s536 + $0x1a8] sm:$0xff]
  %v591 = vld [vmem:[%s536 + $0x1b0] sm:$0xff]
  %v592 = vld [vmem:[%s536 + $0x1b8] sm:$0xff]
  %v593 = vld [vmem:[%s536 + $0x1c0] sm:$0xff]
  %v594 = vld [vmem:[%s536 + $0x1c8] sm:$0xff]
  %v595 = vld [vmem:[%s536 + $0x1d0] sm:$0xff]
  %v596 = vld [vmem:[%s536 + $0x1d8] sm:$0xff]
  %v597 = vld [vmem:[%s536 + $0x1e0] sm:$0xff]
  %v598 = vld [vmem:[%s536 + $0x1e8] sm:$0xff]
  %v599 = vld [vmem:[%s536 + $0x1f0] sm:$0xff]
  %v600 = vld [vmem:[%s536 + $0x1f8] sm:$0xff]
  %s601 = scalar_lea.vmem %s2, 4
  %v602 = vld [vmem:[%s601] sm:$0xf]
  %v604 = vlaneseq
  %v605 = vshrl.u32 %v604, 7
  %v606 = vsub.s32 0, %v605
  %v607 = vrot.slane %v602, %v606
  %v608 = vlaneseq
  %v609 = vshrl.u32 %v608, 7
  %v610 = vsub.s32 1, %v609
  %v611 = vrot.slane %v602, %v610
  %v612 = vlaneseq
  %v613 = vshrl.u32 %v612, 7
  %v614 = vsub.s32 2, %v613
  %v615 = vrot.slane %v602, %v614
  %v616 = vlaneseq
  %v617 = vshrl.u32 %v616, 7
  %v618 = vsub.s32 3, %v617
  %v619 = vrot.slane %v602, %v618
  %v688 = vunpack.c.l.b16 %v537
  %v689 = vunpack.c.h.b16 %v537
  %v690 = vunpack.c.l.b16 %v538
  %v691 = vunpack.c.h.b16 %v538
  %v692 = vunpack.c.l.b16 %v539
  %v693 = vunpack.c.h.b16 %v539
  %v694 = vunpack.c.l.b16 %v540
  %v695 = vunpack.c.h.b16 %v540
  %v696 = vunpack.c.l.b16 %v541
  %v697 = vunpack.c.h.b16 %v541
  %v698 = vunpack.c.l.b16 %v542
  %v699 = vunpack.c.h.b16 %v542
  %v700 = vunpack.c.l.b16 %v543
  %v701 = vunpack.c.h.b16 %v543
  %v702 = vunpack.c.l.b16 %v544
  %v703 = vunpack.c.h.b16 %v544
  %v704 = vunpack.c.l.b16 %v545
  %v705 = vunpack.c.h.b16 %v545
  %v706 = vunpack.c.l.b16 %v546
  %v707 = vunpack.c.h.b16 %v546
  %v708 = vunpack.c.l.b16 %v547
  %v709 = vunpack.c.h.b16 %v547
  %v710 = vunpack.c.l.b16 %v548
  %v711 = vunpack.c.h.b16 %v548
  %v712 = vunpack.c.l.b16 %v549
  %v713 = vunpack.c.h.b16 %v549
  %v714 = vunpack.c.l.b16 %v550
  %v715 = vunpack.c.h.b16 %v550
  %v716 = vunpack.c.l.b16 %v551
  %v717 = vunpack.c.h.b16 %v551
  %v718 = vunpack.c.l.b16 %v552
  %v719 = vunpack.c.h.b16 %v552
  %v720 = vunpack.c.l.b16 %v553
  %v721 = vunpack.c.h.b16 %v553
  %v722 = vunpack.c.l.b16 %v554
  %v723 = vunpack.c.h.b16 %v554
  %v724 = vunpack.c.l.b16 %v555
  %v725 = vunpack.c.h.b16 %v555
  %v726 = vunpack.c.l.b16 %v556
  %v727 = vunpack.c.h.b16 %v556
  %v728 = vunpack.c.l.b16 %v557
  %v729 = vunpack.c.h.b16 %v557
  %v730 = vunpack.c.l.b16 %v558
  %v731 = vunpack.c.h.b16 %v558
  %v732 = vunpack.c.l.b16 %v559
  %v733 = vunpack.c.h.b16 %v559
  %v734 = vunpack.c.l.b16 %v560
  %v735 = vunpack.c.h.b16 %v560
  %v736 = vunpack.c.l.b16 %v561
  %v737 = vunpack.c.h.b16 %v561
  %v738 = vunpack.c.l.b16 %v562
  %v739 = vunpack.c.h.b16 %v562
  %v740 = vunpack.c.l.b16 %v563
  %v741 = vunpack.c.h.b16 %v563
  %v742 = vunpack.c.l.b16 %v564
  %v743 = vunpack.c.h.b16 %v564
  %v744 = vunpack.c.l.b16 %v565
  %v745 = vunpack.c.h.b16 %v565
  %v746 = vunpack.c.l.b16 %v566
  %v747 = vunpack.c.h.b16 %v566
  %v748 = vunpack.c.l.b16 %v567
  %v749 = vunpack.c.h.b16 %v567
  %v750 = vunpack.c.l.b16 %v568
  %v751 = vunpack.c.h.b16 %v568
  %v752 = vunpack.c.l.b16 %v569
  %v753 = vunpack.c.h.b16 %v569
  %v754 = vunpack.c.l.b16 %v570
  %v755 = vunpack.c.h.b16 %v570
  %v756 = vunpack.c.l.b16 %v571
  %v757 = vunpack.c.h.b16 %v571
  %v758 = vunpack.c.l.b16 %v572
  %v759 = vunpack.c.h.b16 %v572
  %v760 = vunpack.c.l.b16 %v573
  %v761 = vunpack.c.h.b16 %v573
  %v762 = vunpack.c.l.b16 %v574
  %v763 = vunpack.c.h.b16 %v574
  %v764 = vunpack.c.l.b16 %v575
  %v765 = vunpack.c.h.b16 %v575
  %v766 = vunpack.c.l.b16 %v576
  %v767 = vunpack.c.h.b16 %v576
  %v768 = vunpack.c.l.b16 %v577
  %v769 = vunpack.c.h.b16 %v577
  %v770 = vunpack.c.l.b16 %v578
  %v771 = vunpack.c.h.b16 %v578
  %v772 = vunpack.c.l.b16 %v579
  %v773 = vunpack.c.h.b16 %v579
  %v774 = vunpack.c.l.b16 %v580
  %v775 = vunpack.c.h.b16 %v580
  %v776 = vunpack.c.l.b16 %v581
  %v777 = vunpack.c.h.b16 %v581
  %v778 = vunpack.c.l.b16 %v582
  %v779 = vunpack.c.h.b16 %v582
  %v780 = vunpack.c.l.b16 %v583
  %v781 = vunpack.c.h.b16 %v583
  %v782 = vunpack.c.l.b16 %v584
  %v783 = vunpack.c.h.b16 %v584
  %v784 = vunpack.c.l.b16 %v585
  %v785 = vunpack.c.h.b16 %v585
  %v786 = vunpack.c.l.b16 %v586
  %v787 = vunpack.c.h.b16 %v586
  %v788 = vunpack.c.l.b16 %v587
  %v789 = vunpack.c.h.b16 %v587
  %v790 = vunpack.c.l.b16 %v588
  %v791 = vunpack.c.h.b16 %v588
  %v792 = vunpack.c.l.b16 %v589
  %v793 = vunpack.c.h.b16 %v589
  %v794 = vunpack.c.l.b16 %v590
  %v795 = vunpack.c.h.b16 %v590
  %v796 = vunpack.c.l.b16 %v591
  %v797 = vunpack.c.h.b16 %v591
  %v798 = vunpack.c.l.b16 %v592
  %v799 = vunpack.c.h.b16 %v592
  %v800 = vunpack.c.l.b16 %v593
  %v801 = vunpack.c.h.b16 %v593
  %v802 = vunpack.c.l.b16 %v594
  %v803 = vunpack.c.h.b16 %v594
  %v804 = vunpack.c.l.b16 %v595
  %v805 = vunpack.c.h.b16 %v595
  %v806 = vunpack.c.l.b16 %v596
  %v807 = vunpack.c.h.b16 %v596
  %v808 = vunpack.c.l.b16 %v597
  %v809 = vunpack.c.h.b16 %v597
  %v810 = vunpack.c.l.b16 %v598
  %v811 = vunpack.c.h.b16 %v598
  %v812 = vunpack.c.l.b16 %v599
  %v813 = vunpack.c.h.b16 %v599
  %v814 = vunpack.c.l.b16 %v600
  %v815 = vunpack.c.h.b16 %v600
  %v816 = vpack.c.b16 %v692, %v688
  %v817 = vpack.c.b16 %v693, %v689
  %v818 = vpack.c.b16 %v694, %v690
  %v819 = vpack.c.b16 %v695, %v691
  %v820 = vpack.c.b16 %v700, %v696
  %v821 = vpack.c.b16 %v701, %v697
  %v822 = vpack.c.b16 %v702, %v698
  %v823 = vpack.c.b16 %v703, %v699
  %v824 = vpack.c.b16 %v708, %v704
  %v825 = vpack.c.b16 %v709, %v705
  %v826 = vpack.c.b16 %v710, %v706
  %v827 = vpack.c.b16 %v711, %v707
  %v828 = vpack.c.b16 %v716, %v712
  %v829 = vpack.c.b16 %v717, %v713
  %v830 = vpack.c.b16 %v718, %v714
  %v831 = vpack.c.b16 %v719, %v715
  %v832 = vpack.c.b16 %v724, %v720
  %v833 = vpack.c.b16 %v725, %v721
  %v834 = vpack.c.b16 %v726, %v722
  %v835 = vpack.c.b16 %v727, %v723
  %v836 = vpack.c.b16 %v732, %v728
  %v837 = vpack.c.b16 %v733, %v729
  %v838 = vpack.c.b16 %v734, %v730
  %v839 = vpack.c.b16 %v735, %v731
  %v840 = vpack.c.b16 %v740, %v736
  %v841 = vpack.c.b16 %v741, %v737
  %v842 = vpack.c.b16 %v742, %v738
  %v843 = vpack.c.b16 %v743, %v739
  %v844 = vpack.c.b16 %v748, %v744
  %v845 = vpack.c.b16 %v749, %v745
  %v846 = vpack.c.b16 %v750, %v746
  %v847 = vpack.c.b16 %v751, %v747
  %v848 = vpack.c.b16 %v756, %v752
  %v849 = vpack.c.b16 %v757, %v753
  %v850 = vpack.c.b16 %v758, %v754
  %v851 = vpack.c.b16 %v759, %v755
  %v852 = vpack.c.b16 %v764, %v760
  %v853 = vpack.c.b16 %v765, %v761
  %v854 = vpack.c.b16 %v766, %v762
  %v855 = vpack.c.b16 %v767, %v763
  %v856 = vpack.c.b16 %v772, %v768
  %v857 = vpack.c.b16 %v773, %v769
  %v858 = vpack.c.b16 %v774, %v770
  %v859 = vpack.c.b16 %v775, %v771
  %v860 = vpack.c.b16 %v780, %v776
  %v861 = vpack.c.b16 %v781, %v777
  %v862 = vpack.c.b16 %v782, %v778
  %v863 = vpack.c.b16 %v783, %v779
  %v864 = vpack.c.b16 %v788, %v784
  %v865 = vpack.c.b16 %v789, %v785
  %v866 = vpack.c.b16 %v790, %v786
  %v867 = vpack.c.b16 %v791, %v787
  %v868 = vpack.c.b16 %v796, %v792
  %v869 = vpack.c.b16 %v797, %v793
  %v870 = vpack.c.b16 %v798, %v794
  %v871 = vpack.c.b16 %v799, %v795
  %v872 = vpack.c.b16 %v804, %v800
  %v873 = vpack.c.b16 %v805, %v801
  %v874 = vpack.c.b16 %v806, %v802
  %v875 = vpack.c.b16 %v807, %v803
  %v876 = vpack.c.b16 %v812, %v808
  %v877 = vpack.c.b16 %v813, %v809
  %v878 = vpack.c.b16 %v814, %v810
  %v879 = vpack.c.b16 %v815, %v811
  %944 = vmatprep.subr.bf16.mxu0 %v817
  %945 = vmatpush1.bf16.msra.mxu0 %v816
  %946 = vmatprep.subr.bf16.mxu0 %v821
  %947 = vmatpush1.bf16.msra.mxu0 %v820
  %948 = vmatprep.subr.bf16.mxu0 %v825
  %949 = vmatpush1.bf16.msra.mxu0 %v824
  %950 = vmatprep.subr.bf16.mxu0 %v829
  %951 = vmatpush1.bf16.msra.mxu0 %v828
  %952 = vmatprep.subr.bf16.mxu0 %v833
  %953 = vmatpush1.bf16.msra.mxu0 %v832
  %954 = vmatprep.subr.bf16.mxu0 %v837
  %955 = vmatpush1.bf16.msra.mxu0 %v836
  %956 = vmatprep.subr.bf16.mxu0 %v841
  %957 = vmatpush1.bf16.msra.mxu0 %v840
  %958 = vmatprep.subr.bf16.mxu0 %v845
  %959 = vmatpush1.bf16.msra.mxu0 %v844
  %960 = vmatprep.subr.bf16.mxu0 %v849
  %961 = vmatpush1.bf16.msra.mxu0 %v848
  %962 = vmatprep.subr.bf16.mxu0 %v853
  %963 = vmatpush1.bf16.msra.mxu0 %v852
  %964 = vmatprep.subr.bf16.mxu0 %v857
  %965 = vmatpush1.bf16.msra.mxu0 %v856
  %966 = vmatprep.subr.bf16.mxu0 %v861
  %967 = vmatpush1.bf16.msra.mxu0 %v860
  %968 = vmatprep.subr.bf16.mxu0 %v865
  %969 = vmatpush1.bf16.msra.mxu0 %v864
  %970 = vmatprep.subr.bf16.mxu0 %v869
  %971 = vmatpush1.bf16.msra.mxu0 %v868
  %972 = vmatprep.subr.bf16.mxu0 %v873
  %973 = vmatpush1.bf16.msra.mxu0 %v872
  %974 = vmatprep.subr.bf16.mxu0 %v877
  %975 = vmatpush1.bf16.msra.mxu0 %v876
  %976 = vmatprep.mubr.bf16.mxu0 %v22
  %977 = vmatmul.mubr.bf16.gmra.mrb[0].mxu0 %v535
  %v978 = vpop.f32.mrb[0].mxu0
  %v979 = vadd.f32 %v607, %v978
  %v980 = vpop.f32.mrb[0].mxu0
  %v981 = vadd.f32 %v611, %v980
  %v982 = vpop.f32.mrb[0].mxu0
  %v983 = vpop.f32.mrb[0].mxu0
  %984 = vdwg.mxu0
  %985 = vmatprep.subr.bf16.mxu0 %v819
  %986 = vmatpush1.bf16.msra.mxu0 %v818
  %987 = vmatprep.subr.bf16.mxu0 %v823
  %988 = vmatpush1.bf16.msra.mxu0 %v822
  %989 = vmatprep.subr.bf16.mxu0 %v827
  %990 = vmatpush1.bf16.msra.mxu0 %v826
  %991 = vmatprep.subr.bf16.mxu0 %v831
  %992 = vmatpush1.bf16.msra.mxu0 %v830
  %993 = vmatprep.subr.bf16.mxu0 %v835
  %994 = vmatpush1.bf16.msra.mxu0 %v834
  %995 = vmatprep.subr.bf16.mxu0 %v839
  %996 = vmatpush1.bf16.msra.mxu0 %v838
  %997 = vmatprep.subr.bf16.mxu0 %v843
  %998 = vmatpush1.bf16.msra.mxu0 %v842
  %999 = vmatprep.subr.bf16.mxu0 %v847
  %1000 = vmatpush1.bf16.msra.mxu0 %v846
  %1001 = vmatprep.subr.bf16.mxu0 %v851
  %1002 = vmatpush1.bf16.msra.mxu0 %v850
  %1003 = vmatprep.subr.bf16.mxu0 %v855
  %1004 = vmatpush1.bf16.msra.mxu0 %v854
  %1005 = vmatprep.subr.bf16.mxu0 %v859
  %1006 = vmatpush1.bf16.msra.mxu0 %v858
  %1007 = vmatprep.subr.bf16.mxu0 %v863
  %1008 = vmatpush1.bf16.msra.mxu0 %v862
  %1009 = vmatprep.subr.bf16.mxu0 %v867
  %1010 = vmatpush1.bf16.msra.mxu0 %v866
  %1011 = vmatprep.subr.bf16.mxu0 %v871
  %1012 = vmatpush1.bf16.msra.mxu0 %v870
  %1013 = vmatprep.subr.bf16.mxu0 %v875
  %1014 = vmatpush1.bf16.msra.mxu0 %v874
  %1015 = vmatprep.subr.bf16.mxu0 %v879
  %1016 = vmatpush1.bf16.msra.mxu0 %v878
  %1017 = vmatprep.mubr.bf16.mxu0 %v22
  %1018 = vmatmul.mubr.bf16.gmra.mrb[0].mxu0 %v535
  %v1019 = vpop.f32.mrb[0].mxu0
  %v1020 = vadd.f32 %v615, %v1019
  %v1021 = vpop.f32.mrb[0].mxu0
  %v1022 = vadd.f32 %v619, %v1021
  %v1023 = vpop.f32.mrb[0].mxu0
  %v1024 = vpop.f32.mrb[0].mxu0
  %1025 = vdwg.mxu0
  %v1026 = vxor.u32 %v979, 2147483648
  %v1027 = vmul.f32 %v1026, 1.442695
  %v1028 = vpow.pop %v1027
  %v1029 = vadd.f32 %v1028, 1.0
  %v1030 = vrcp.pop %v1029
  %v1031 = vmul.f32 1.0, %v1030
  %v1032 = vxor.u32 %v981, 2147483648
  %v1033 = vmul.f32 %v1032, 1.442695
  %v1034 = vpow.pop %v1033
  %v1035 = vadd.f32 %v1034, 1.0
  %v1036 = vrcp.pop %v1035
  %v1037 = vmul.f32 1.0, %v1036
  %v1038 = vtanh.pop %v1020
  %v1039 = vxor.u32 %v1022, 2147483648
  %v1040 = vmul.f32 %v1039, 1.442695
  %v1041 = vpow.pop %v1040
  %v1042 = vadd.f32 %v1041, 1.0
  %v1043 = vrcp.pop %v1042
  %v1044 = vmul.f32 1.0, %v1043
  %v1045 = vmul.f32 %v1037, 0.0
  %v1046 = vmul.f32 %v1031, %v1038
  %v1047 = vadd.f32 %v1045, %v1046
  %v1048 = vtanh.pop %v1047
  %v1049 = vmul.f32 %v1044, %v1048
  %s1050 = scalar_lea.vmem %s0, 2
  %v1051 = vld [vmem:[%s1050] sm:$0x3]
  %v1052 = vpack.c.bf16 %v1051, %v1051
  %1053 = vmatprep.subr.bf16.mxu0 %v302
  %1054 = vmatpush1.bf16.msra.mxu0 %v301
  %1055 = vmatprep.subr.bf16.mxu0 %v306
  %1056 = vmatpush1.bf16.msra.mxu0 %v305
  %1057 = vmatprep.subr.bf16.mxu0 %v310
  %1058 = vmatpush1.bf16.msra.mxu0 %v309
  %1059 = vmatprep.subr.bf16.mxu0 %v314
  %1060 = vmatpush1.bf16.msra.mxu0 %v313
  %1061 = vmatprep.subr.bf16.mxu0 %v318
  %1062 = vmatpush1.bf16.msra.mxu0 %v317
  %1063 = vmatprep.subr.bf16.mxu0 %v322
  %1064 = vmatpush1.bf16.msra.mxu0 %v321
  %1065 = vmatprep.subr.bf16.mxu0 %v326
  %1066 = vmatpush1.bf16.msra.mxu0 %v325
  %1067 = vmatprep.subr.bf16.mxu0 %v330
  %1068 = vmatpush1.bf16.msra.mxu0 %v329
  %1069 = vmatprep.subr.bf16.mxu0 %v334
  %1070 = vmatpush1.bf16.msra.mxu0 %v333
  %1071 = vmatprep.subr.bf16.mxu0 %v338
  %1072 = vmatpush1.bf16.msra.mxu0 %v337
  %1073 = vmatprep.subr.bf16.mxu0 %v342
  %1074 = vmatpush1.bf16.msra.mxu0 %v341
  %1075 = vmatprep.subr.bf16.mxu0 %v346
  %1076 = vmatpush1.bf16.msra.mxu0 %v345
  %1077 = vmatprep.subr.bf16.mxu0 %v350
  %1078 = vmatpush1.bf16.msra.mxu0 %v349
  %1079 = vmatprep.subr.bf16.mxu0 %v354
  %1080 = vmatpush1.bf16.msra.mxu0 %v353
  %1081 = vmatprep.subr.bf16.mxu0 %v358
  %1082 = vmatpush1.bf16.msra.mxu0 %v357
  %1083 = vmatprep.subr.bf16.mxu0 %v362
  %1084 = vmatpush1.bf16.msra.mxu0 %v361
  %1085 = vmatprep.mubr.bf16.mxu0 %v535
  %1086 = vmatmul.mubr.bf16.gmra.mrb[0].mxu0 %v1052
  %v1087 = vpop.f32.mrb[0].mxu0
  %v1088 = vadd.f32 %v92, %v1087
  %v1089 = vpop.f32.mrb[0].mxu0
  %v1090 = vadd.f32 %v96, %v1089
  %v1091 = vpop.f32.mrb[0].mxu0
  %v1092 = vpop.f32.mrb[0].mxu0
  %1093 = vdwg.mxu0
  %1094 = vmatprep.subr.bf16.mxu0 %v304
  %1095 = vmatpush1.bf16.msra.mxu0 %v303
  %1096 = vmatprep.subr.bf16.mxu0 %v308
  %1097 = vmatpush1.bf16.msra.mxu0 %v307
  %1098 = vmatprep.subr.bf16.mxu0 %v312
  %1099 = vmatpush1.bf16.msra.mxu0 %v311
  %1100 = vmatprep.subr.bf16.mxu0 %v316
  %1101 = vmatpush1.bf16.msra.mxu0 %v315
  %1102 = vmatprep.subr.bf16.mxu0 %v320
  %1103 = vmatpush1.bf16.msra.mxu0 %v319
  %1104 = vmatprep.subr.bf16.mxu0 %v324
  %1105 = vmatpush1.bf16.msra.mxu0 %v323
  %1106 = vmatprep.subr.bf16.mxu0 %v328
  %1107 = vmatpush1.bf16.msra.mxu0 %v327
  %1108 = vmatprep.subr.bf16.mxu0 %v332
  %1109 = vmatpush1.bf16.msra.mxu0 %v331
  %1110 = vmatprep.subr.bf16.mxu0 %v336
  %1111 = vmatpush1.bf16.msra.mxu0 %v335
  %1112 = vmatprep.subr.bf16.mxu0 %v340
  %1113 = vmatpush1.bf16.msra.mxu0 %v339
  %1114 = vmatprep.subr.bf16.mxu0 %v344
  %1115 = vmatpush1.bf16.msra.mxu0 %v343
  %1116 = vmatprep.subr.bf16.mxu0 %v348
  %1117 = vmatpush1.bf16.msra.mxu0 %v347
  %1118 = vmatprep.subr.bf16.mxu0 %v352
  %1119 = vmatpush1.bf16.msra.mxu0 %v351
  %1120 = vmatprep.subr.bf16.mxu0 %v356
  %1121 = vmatpush1.bf16.msra.mxu0 %v355
  %1122 = vmatprep.subr.bf16.mxu0 %v360
  %1123 = vmatpush1.bf16.msra.mxu0 %v359
  %1124 = vmatprep.subr.bf16.mxu0 %v364
  %1125 = vmatpush1.bf16.msra.mxu0 %v363
  %1126 = vmatprep.mubr.bf16.mxu0 %v535
  %1127 = vmatmul.mubr.bf16.gmra.mrb[0].mxu0 %v1052
  %v1128 = vpop.f32.mrb[0].mxu0
  %v1129 = vadd.f32 %v100, %v1128
  %v1130 = vpop.f32.mrb[0].mxu0
  %v1131 = vadd.f32 %v104, %v1130
  %v1132 = vpop.f32.mrb[0].mxu0
  %v1133 = vpop.f32.mrb[0].mxu0
  %1134 = vdwg.mxu0
  %v1135 = vxor.u32 %v1088, 2147483648
  %v1136 = vmul.f32 %v1135, 1.442695
  %v1137 = vpow.pop %v1136
  %v1138 = vadd.f32 %v1137, 1.0
  %v1139 = vrcp.pop %v1138
  %v1140 = vmul.f32 1.0, %v1139
  %v1141 = vxor.u32 %v1090, 2147483648
  %v1142 = vmul.f32 %v1141, 1.442695
  %v1143 = vpow.pop %v1142
  %v1144 = vadd.f32 %v1143, 1.0
  %v1145 = vrcp.pop %v1144
  %v1146 = vmul.f32 1.0, %v1145
  %v1147 = vtanh.pop %v1129
  %v1148 = vxor.u32 %v1131, 2147483648
  %v1149 = vmul.f32 %v1148, 1.442695
  %v1150 = vpow.pop %v1149
  %v1151 = vadd.f32 %v1150, 1.0
  %v1152 = vrcp.pop %v1151
  %v1153 = vmul.f32 1.0, %v1152
  %v1154 = vmul.f32 %v1146, %v532
  %v1155 = vmul.f32 %v1140, %v1147
  %v1156 = vadd.f32 %v1154, %v1155
  %v1157 = vtanh.pop %v1156
  %v1158 = vmul.f32 %v1153, %v1157
  %v1159 = vpack.c.bf16 %v1158, %v1158
  %v1160 = vpack.c.bf16 %v1049, %v1049
  %1161 = vmatprep.subr.bf16.mxu0 %v817
  %1162 = vmatpush1.bf16.msra.mxu0 %v816
  %1163 = vmatprep.subr.bf16.mxu0 %v821
  %1164 = vmatpush1.bf16.msra.mxu0 %v820
  %1165 = vmatprep.subr.bf16.mxu0 %v825
  %1166 = vmatpush1.bf16.msra.mxu0 %v824
  %1167 = vmatprep.subr.bf16.mxu0 %v829
  %1168 = vmatpush1.bf16.msra.mxu0 %v828
  %1169 = vmatprep.subr.bf16.mxu0 %v833
  %1170 = vmatpush1.bf16.msra.mxu0 %v832
  %1171 = vmatprep.subr.bf16.mxu0 %v837
  %1172 = vmatpush1.bf16.msra.mxu0 %v836
  %1173 = vmatprep.subr.bf16.mxu0 %v841
  %1174 = vmatpush1.bf16.msra.mxu0 %v840
  %1175 = vmatprep.subr.bf16.mxu0 %v845
  %1176 = vmatpush1.bf16.msra.mxu0 %v844
  %1177 = vmatprep.subr.bf16.mxu0 %v849
  %1178 = vmatpush1.bf16.msra.mxu0 %v848
  %1179 = vmatprep.subr.bf16.mxu0 %v853
  %1180 = vmatpush1.bf16.msra.mxu0 %v852
  %1181 = vmatprep.subr.bf16.mxu0 %v857
  %1182 = vmatpush1.bf16.msra.mxu0 %v856
  %1183 = vmatprep.subr.bf16.mxu0 %v861
  %1184 = vmatpush1.bf16.msra.mxu0 %v860
  %1185 = vmatprep.subr.bf16.mxu0 %v865
  %1186 = vmatpush1.bf16.msra.mxu0 %v864
  %1187 = vmatprep.subr.bf16.mxu0 %v869
  %1188 = vmatpush1.bf16.msra.mxu0 %v868
  %1189 = vmatprep.subr.bf16.mxu0 %v873
  %1190 = vmatpush1.bf16.msra.mxu0 %v872
  %1191 = vmatprep.subr.bf16.mxu0 %v877
  %1192 = vmatpush1.bf16.msra.mxu0 %v876
  %1193 = vmatprep.mubr.bf16.mxu0 %v1160
  %1194 = vmatmul.mubr.bf16.gmra.mrb[0].mxu0 %v1159
  %v1195 = vpop.f32.mrb[0].mxu0
  %v1196 = vadd.f32 %v607, %v1195
  %v1197 = vpop.f32.mrb[0].mxu0
  %v1198 = vadd.f32 %v611, %v1197
  %v1199 = vpop.f32.mrb[0].mxu0
  %v1200 = vpop.f32.mrb[0].mxu0
  %1201 = vdwg.mxu0
  %1202 = vmatprep.subr.bf16.mxu0 %v819
  %1203 = vmatpush1.bf16.msra.mxu0 %v818
  %1204 = vmatprep.subr.bf16.mxu0 %v823
  %1205 = vmatpush1.bf16.msra.mxu0 %v822
  %1206 = vmatprep.subr.bf16.mxu0 %v827
  %1207 = vmatpush1.bf16.msra.mxu0 %v826
  %1208 = vmatprep.subr.bf16.mxu0 %v831
  %1209 = vmatpush1.bf16.msra.mxu0 %v830
  %1210 = vmatprep.subr.bf16.mxu0 %v835
  %1211 = vmatpush1.bf16.msra.mxu0 %v834
  %1212 = vmatprep.subr.bf16.mxu0 %v839
  %1213 = vmatpush1.bf16.msra.mxu0 %v838
  %1214 = vmatprep.subr.bf16.mxu0 %v843
  %1215 = vmatpush1.bf16.msra.mxu0 %v842
  %1216 = vmatprep.subr.bf16.mxu0 %v847
  %1217 = vmatpush1.bf16.msra.mxu0 %v846
  %1218 = vmatprep.subr.bf16.mxu0 %v851
  %1219 = vmatpush1.bf16.msra.mxu0 %v850
  %1220 = vmatprep.subr.bf16.mxu0 %v855
  %1221 = vmatpush1.bf16.msra.mxu0 %v854
  %1222 = vmatprep.subr.bf16.mxu0 %v859
  %1223 = vmatpush1.bf16.msra.mxu0 %v858
  %1224 = vmatprep.subr.bf16.mxu0 %v863
  %1225 = vmatpush1.bf16.msra.mxu0 %v862
  %1226 = vmatprep.subr.bf16.mxu0 %v867
  %1227 = vmatpush1.bf16.msra.mxu0 %v866
  %1228 = vmatprep.subr.bf16.mxu0 %v871
  %1229 = vmatpush1.bf16.msra.mxu0 %v870
  %1230 = vmatprep.subr.bf16.mxu0 %v875
  %1231 = vmatpush1.bf16.msra.mxu0 %v874
  %1232 = vmatprep.subr.bf16.mxu0 %v879
  %1233 = vmatpush1.bf16.msra.mxu0 %v878
  %1234 = vmatprep.mubr.bf16.mxu0 %v1160
  %1235 = vmatmul.mubr.bf16.gmra.mrb[0].mxu0 %v1159
  %v1236 = vpop.f32.mrb[0].mxu0
  %v1237 = vadd.f32 %v615, %v1236
  %v1238 = vpop.f32.mrb[0].mxu0
  %v1239 = vadd.f32 %v619, %v1238
  %v1240 = vpop.f32.mrb[0].mxu0
  %v1241 = vpop.f32.mrb[0].mxu0
  %1242 = vdwg.mxu0
  %v1243 = vxor.u32 %v1196, 2147483648
  %v1244 = vmul.f32 %v1243, 1.442695
  %v1245 = vpow.pop %v1244
  %v1246 = vadd.f32 %v1245, 1.0
  %v1247 = vrcp.pop %v1246
  %v1248 = vmul.f32 1.0, %v1247
  %v1249 = vxor.u32 %v1198, 2147483648
  %v1250 = vmul.f32 %v1249, 1.442695
  %v1251 = vpow.pop %v1250
  %v1252 = vadd.f32 %v1251, 1.0
  %v1253 = vrcp.pop %v1252
  %v1254 = vmul.f32 1.0, %v1253
  %v1255 = vtanh.pop %v1237
  %v1256 = vxor.u32 %v1239, 2147483648
  %v1257 = vmul.f32 %v1256, 1.442695
  %v1258 = vpow.pop %v1257
  %v1259 = vadd.f32 %v1258, 1.0
  %v1260 = vrcp.pop %v1259
  %v1261 = vmul.f32 1.0, %v1260
  %v1262 = vmul.f32 %v1254, %v1047
  %v1263 = vmul.f32 %v1248, %v1255
  %v1264 = vadd.f32 %v1262, %v1263
  %v1265 = vtanh.pop %v1264
  %v1266 = vmul.f32 %v1261, %v1265
  %s1267 = scalar_lea.vmem %s0, 4
  %v1268 = vld [vmem:[%s1267] sm:$0x3]
  %v1269 = vpack.c.bf16 %v1268, %v1268
  %1270 = vmatprep.subr.bf16.mxu0 %v302
  %1271 = vmatpush1.bf16.msra.mxu0 %v301
  %1272 = vmatprep.subr.bf16.mxu0 %v306
  %1273 = vmatpush1.bf16.msra.mxu0 %v305
  %1274 = vmatprep.subr.bf16.mxu0 %v310
  %1275 = vmatpush1.bf16.msra.mxu0 %v309
  %1276 = vmatprep.subr.bf16.mxu0 %v314
  %1277 = vmatpush1.bf16.msra.mxu0 %v313
  %1278 = vmatprep.subr.bf16.mxu0 %v318
  %1279 = vmatpush1.bf16.msra.mxu0 %v317
  %1280 = vmatprep.subr.bf16.mxu0 %v322
  %1281 = vmatpush1.bf16.msra.mxu0 %v321
  %1282 = vmatprep.subr.bf16.mxu0 %v326
  %1283 = vmatpush1.bf16.msra.mxu0 %v325
  %1284 = vmatprep.subr.bf16.mxu0 %v330
  %1285 = vmatpush1.bf16.msra.mxu0 %v329
  %1286 = vmatprep.subr.bf16.mxu0 %v334
  %1287 = vmatpush1.bf16.msra.mxu0 %v333
  %1288 = vmatprep.subr.bf16.mxu0 %v338
  %1289 = vmatpush1.bf16.msra.mxu0 %v337
  %1290 = vmatprep.subr.bf16.mxu0 %v342
  %1291 = vmatpush1.bf16.msra.mxu0 %v341
  %1292 = vmatprep.subr.bf16.mxu0 %v346
  %1293 = vmatpush1.bf16.msra.mxu0 %v345
  %1294 = vmatprep.subr.bf16.mxu0 %v350
  %1295 = vmatpush1.bf16.msra.mxu0 %v349
  %1296 = vmatprep.subr.bf16.mxu0 %v354
  %1297 = vmatpush1.bf16.msra.mxu0 %v353
  %1298 = vmatprep.subr.bf16.mxu0 %v358
  %1299 = vmatpush1.bf16.msra.mxu0 %v357
  %1300 = vmatprep.subr.bf16.mxu0 %v362
  %1301 = vmatpush1.bf16.msra.mxu0 %v361
  %1302 = vmatprep.mubr.bf16.mxu0 %v1159
  %1303 = vmatmul.mubr.bf16.gmra.mrb[0].mxu0 %v1269
  %v1304 = vpop.f32.mrb[0].mxu0
  %v1305 = vadd.f32 %v92, %v1304
  %v1306 = vpop.f32.mrb[0].mxu0
  %v1307 = vadd.f32 %v96, %v1306
  %v1308 = vpop.f32.mrb[0].mxu0
  %v1309 = vpop.f32.mrb[0].mxu0
  %1310 = vdwg.mxu0
  %1311 = vmatprep.subr.bf16.mxu0 %v304
  %1312 = vmatpush1.bf16.msra.mxu0 %v303
  %1313 = vmatprep.subr.bf16.mxu0 %v308
  %1314 = vmatpush1.bf16.msra.mxu0 %v307
  %1315 = vmatprep.subr.bf16.mxu0 %v312
  %1316 = vmatpush1.bf16.msra.mxu0 %v311
  %1317 = vmatprep.subr.bf16.mxu0 %v316
  %1318 = vmatpush1.bf16.msra.mxu0 %v315
  %1319 = vmatprep.subr.bf16.mxu0 %v320
  %1320 = vmatpush1.bf16.msra.mxu0 %v319
  %1321 = vmatprep.subr.bf16.mxu0 %v324
  %1322 = vmatpush1.bf16.msra.mxu0 %v323
  %1323 = vmatprep.subr.bf16.mxu0 %v328
  %1324 = vmatpush1.bf16.msra.mxu0 %v327
  %1325 = vmatprep.subr.bf16.mxu0 %v332
  %1326 = vmatpush1.bf16.msra.mxu0 %v331
  %1327 = vmatprep.subr.bf16.mxu0 %v336
  %1328 = vmatpush1.bf16.msra.mxu0 %v335
  %1329 = vmatprep.subr.bf16.mxu0 %v340
  %1330 = vmatpush1.bf16.msra.mxu0 %v339
  %1331 = vmatprep.subr.bf16.mxu0 %v344
  %1332 = vmatpush1.bf16.msra.mxu0 %v343
  %1333 = vmatprep.subr.bf16.mxu0 %v348
  %1334 = vmatpush1.bf16.msra.mxu0 %v347
  %1335 = vmatprep.subr.bf16.mxu0 %v352
  %1336 = vmatpush1.bf16.msra.mxu0 %v351
  %1337 = vmatprep.subr.bf16.mxu0 %v356
  %1338 = vmatpush1.bf16.msra.mxu0 %v355
  %1339 = vmatprep.subr.bf16.mxu0 %v360
  %1340 = vmatpush1.bf16.msra.mxu0 %v359
  %1341 = vmatprep.subr.bf16.mxu0 %v364
  %1342 = vmatpush1.bf16.msra.mxu0 %v363
  %1343 = vmatprep.mubr.bf16.mxu0 %v1159
  %1344 = vmatmul.mubr.bf16.gmra.mrb[0].mxu0 %v1269
  %v1345 = vpop.f32.mrb[0].mxu0
  %v1346 = vadd.f32 %v100, %v1345
  %v1347 = vpop.f32.mrb[0].mxu0
  %v1348 = vadd.f32 %v104, %v1347
  %v1349 = vpop.f32.mrb[0].mxu0
  %v1350 = vpop.f32.mrb[0].mxu0
  %1351 = vdwg.mxu0
  %v1352 = vxor.u32 %v1305, 2147483648
  %v1353 = vmul.f32 %v1352, 1.442695
  %v1354 = vpow.pop %v1353
  %v1355 = vadd.f32 %v1354, 1.0
  %v1356 = vrcp.pop %v1355
  %v1357 = vmul.f32 1.0, %v1356
  %v1358 = vxor.u32 %v1307, 2147483648
  %v1359 = vmul.f32 %v1358, 1.442695
  %v1360 = vpow.pop %v1359
  %v1361 = vadd.f32 %v1360, 1.0
  %v1362 = vrcp.pop %v1361
  %v1363 = vmul.f32 1.0, %v1362
  %v1364 = vtanh.pop %v1346
  %v1365 = vxor.u32 %v1348, 2147483648
  %v1366 = vmul.f32 %v1365, 1.442695
  %v1367 = vpow.pop %v1366
  %v1368 = vadd.f32 %v1367, 1.0
  %v1369 = vrcp.pop %v1368
  %v1370 = vmul.f32 1.0, %v1369
  %v1371 = vmul.f32 %v1363, %v1156
  %v1372 = vmul.f32 %v1357, %v1364
  %v1373 = vadd.f32 %v1371, %v1372
  %v1374 = vtanh.pop %v1373
  %v1375 = vmul.f32 %v1370, %v1374
  %v1376 = vpack.c.bf16 %v1375, %v1375
  %v1377 = vpack.c.bf16 %v1266, %v1266
  %1378 = vmatprep.subr.bf16.mxu0 %v817
  %1379 = vmatpush1.bf16.msra.mxu0 %v816
  %1380 = vmatprep.subr.bf16.mxu0 %v821
  %1381 = vmatpush1.bf16.msra.mxu0 %v820
  %1382 = vmatprep.subr.bf16.mxu0 %v825
  %1383 = vmatpush1.bf16.msra.mxu0 %v824
  %1384 = vmatprep.subr.bf16.mxu0 %v829
  %1385 = vmatpush1.bf16.msra.mxu0 %v828
  %1386 = vmatprep.subr.bf16.mxu0 %v833
  %1387 = vmatpush1.bf16.msra.mxu0 %v832
  %1388 = vmatprep.subr.bf16.mxu0 %v837
  %1389 = vmatpush1.bf16.msra.mxu0 %v836
  %1390 = vmatprep.subr.bf16.mxu0 %v841
  %1391 = vmatpush1.bf16.msra.mxu0 %v840
  %1392 = vmatprep.subr.bf16.mxu0 %v845
  %1393 = vmatpush1.bf16.msra.mxu0 %v844
  %1394 = vmatprep.subr.bf16.mxu0 %v849
  %1395 = vmatpush1.bf16.msra.mxu0 %v848
  %1396 = vmatprep.subr.bf16.mxu0 %v853
  %1397 = vmatpush1.bf16.msra.mxu0 %v852
  %1398 = vmatprep.subr.bf16.mxu0 %v857
  %1399 = vmatpush1.bf16.msra.mxu0 %v856
  %1400 = vmatprep.subr.bf16.mxu0 %v861
  %1401 = vmatpush1.bf16.msra.mxu0 %v860
  %1402 = vmatprep.subr.bf16.mxu0 %v865
  %1403 = vmatpush1.bf16.msra.mxu0 %v864
  %1404 = vmatprep.subr.bf16.mxu0 %v869
  %1405 = vmatpush1.bf16.msra.mxu0 %v868
  %1406 = vmatprep.subr.bf16.mxu0 %v873
  %1407 = vmatpush1.bf16.msra.mxu0 %v872
  %1408 = vmatprep.subr.bf16.mxu0 %v877
  %1409 = vmatpush1.bf16.msra.mxu0 %v876
  %1410 = vmatprep.mubr.bf16.mxu0 %v1377
  %1411 = vmatmul.mubr.bf16.gmra.mrb[0].mxu0 %v1376
  %v1412 = vpop.f32.mrb[0].mxu0
  %v1413 = vadd.f32 %v607, %v1412
  %v1414 = vpop.f32.mrb[0].mxu0
  %v1415 = vadd.f32 %v611, %v1414
  %v1416 = vpop.f32.mrb[0].mxu0
  %v1417 = vpop.f32.mrb[0].mxu0
  %1418 = vdwg.mxu0
  %1419 = vmatprep.subr.bf16.mxu0 %v819
  %1420 = vmatpush1.bf16.msra.mxu0 %v818
  %1421 = vmatprep.subr.bf16.mxu0 %v823
  %1422 = vmatpush1.bf16.msra.mxu0 %v822
  %1423 = vmatprep.subr.bf16.mxu0 %v827
  %1424 = vmatpush1.bf16.msra.mxu0 %v826
  %1425 = vmatprep.subr.bf16.mxu0 %v831
  %1426 = vmatpush1.bf16.msra.mxu0 %v830
  %1427 = vmatprep.subr.bf16.mxu0 %v835
  %1428 = vmatpush1.bf16.msra.mxu0 %v834
  %1429 = vmatprep.subr.bf16.mxu0 %v839
  %1430 = vmatpush1.bf16.msra.mxu0 %v838
  %1431 = vmatprep.subr.bf16.mxu0 %v843
  %1432 = vmatpush1.bf16.msra.mxu0 %v842
  %1433 = vmatprep.subr.bf16.mxu0 %v847
  %1434 = vmatpush1.bf16.msra.mxu0 %v846
  %1435 = vmatprep.subr.bf16.mxu0 %v851
  %1436 = vmatpush1.bf16.msra.mxu0 %v850
  %1437 = vmatprep.subr.bf16.mxu0 %v855
  %1438 = vmatpush1.bf16.msra.mxu0 %v854
  %1439 = vmatprep.subr.bf16.mxu0 %v859
  %1440 = vmatpush1.bf16.msra.mxu0 %v858
  %1441 = vmatprep.subr.bf16.mxu0 %v863
  %1442 = vmatpush1.bf16.msra.mxu0 %v862
  %1443 = vmatprep.subr.bf16.mxu0 %v867
  %1444 = vmatpush1.bf16.msra.mxu0 %v866
  %1445 = vmatprep.subr.bf16.mxu0 %v871
  %1446 = vmatpush1.bf16.msra.mxu0 %v870
  %1447 = vmatprep.subr.bf16.mxu0 %v875
  %1448 = vmatpush1.bf16.msra.mxu0 %v874
  %1449 = vmatprep.subr.bf16.mxu0 %v879
  %1450 = vmatpush1.bf16.msra.mxu0 %v878
  %1451 = vmatprep.mubr.bf16.mxu0 %v1377
  %1452 = vmatmul.mubr.bf16.gmra.mrb[0].mxu0 %v1376
  %v1453 = vpop.f32.mrb[0].mxu0
  %v1454 = vadd.f32 %v615, %v1453
  %v1455 = vpop.f32.mrb[0].mxu0
  %v1456 = vadd.f32 %v619, %v1455
  %v1457 = vpop.f32.mrb[0].mxu0
  %v1458 = vpop.f32.mrb[0].mxu0
  %1459 = vdwg.mxu0
  %v1460 = vxor.u32 %v1413, 2147483648
  %v1461 = vmul.f32 %v1460, 1.442695
  %v1462 = vpow.pop %v1461
  %v1463 = vadd.f32 %v1462, 1.0
  %v1464 = vrcp.pop %v1463
  %v1465 = vmul.f32 1.0, %v1464
  %v1466 = vxor.u32 %v1415, 2147483648
  %v1467 = vmul.f32 %v1466, 1.442695
  %v1468 = vpow.pop %v1467
  %v1469 = vadd.f32 %v1468, 1.0
  %v1470 = vrcp.pop %v1469
  %v1471 = vmul.f32 1.0, %v1470
  %v1472 = vtanh.pop %v1454
  %v1473 = vxor.u32 %v1456, 2147483648
  %v1474 = vmul.f32 %v1473, 1.442695
  %v1475 = vpow.pop %v1474
  %v1476 = vadd.f32 %v1475, 1.0
  %v1477 = vrcp.pop %v1476
  %v1478 = vmul.f32 1.0, %v1477
  %v1479 = vmul.f32 %v1471, %v1264
  %v1480 = vmul.f32 %v1465, %v1472
  %v1481 = vadd.f32 %v1479, %v1480
  %v1482 = vtanh.pop %v1481
  %v1483 = vmul.f32 %v1478, %v1482
  %s1484 = scalar_lea.vmem %s0, 6
  %v1485 = vld [vmem:[%s1484] sm:$0x3]
  %v1486 = vpack.c.bf16 %v1485, %v1485
  %1487 = vmatprep.subr.bf16.mxu0 %v302
  %1488 = vmatpush1.bf16.msra.mxu0 %v301
  %1489 = vmatprep.subr.bf16.mxu0 %v306
  %1490 = vmatpush1.bf16.msra.mxu0 %v305
  %1491 = vmatprep.subr.bf16.mxu0 %v310
  %1492 = vmatpush1.bf16.msra.mxu0 %v309
  %1493 = vmatprep.subr.bf16.mxu0 %v314
  %1494 = vmatpush1.bf16.msra.mxu0 %v313
  %1495 = vmatprep.subr.bf16.mxu0 %v318
  %1496 = vmatpush1.bf16.msra.mxu0 %v317
  %1497 = vmatprep.subr.bf16.mxu0 %v322
  %1498 = vmatpush1.bf16.msra.mxu0 %v321
  %1499 = vmatprep.subr.bf16.mxu0 %v326
  %1500 = vmatpush1.bf16.msra.mxu0 %v325
  %1501 = vmatprep.subr.bf16.mxu0 %v330
  %1502 = vmatpush1.bf16.msra.mxu0 %v329
  %1503 = vmatprep.subr.bf16.mxu0 %v334
  %1504 = vmatpush1.bf16.msra.mxu0 %v333
  %1505 = vmatprep.subr.bf16.mxu0 %v338
  %1506 = vmatpush1.bf16.msra.mxu0 %v337
  %1507 = vmatprep.subr.bf16.mxu0 %v342
  %1508 = vmatpush1.bf16.msra.mxu0 %v341
  %1509 = vmatprep.subr.bf16.mxu0 %v346
  %1510 = vmatpush1.bf16.msra.mxu0 %v345
  %1511 = vmatprep.subr.bf16.mxu0 %v350
  %1512 = vmatpush1.bf16.msra.mxu0 %v349
  %1513 = vmatprep.subr.bf16.mxu0 %v354
  %1514 = vmatpush1.bf16.msra.mxu0 %v353
  %1515 = vmatprep.subr.bf16.mxu0 %v358
  %1516 = vmatpush1.bf16.msra.mxu0 %v357
  %1517 = vmatprep.subr.bf16.mxu0 %v362
  %1518 = vmatpush1.bf16.msra.mxu0 %v361
  %1519 = vmatprep.mubr.bf16.mxu0 %v1376
  %1520 = vmatmul.mubr.bf16.gmra.mrb[0].mxu0 %v1486
  %v1521 = vpop.f32.mrb[0].mxu0
  %v1522 = vadd.f32 %v92, %v1521
  %v1523 = vpop.f32.mrb[0].mxu0
  %v1524 = vadd.f32 %v96, %v1523
  %v1525 = vpop.f32.mrb[0].mxu0
  %v1526 = vpop.f32.mrb[0].mxu0
  %1527 = vdwg.mxu0
  %1528 = vmatprep.subr.bf16.mxu0 %v304
  %1529 = vmatpush1.bf16.msra.mxu0 %v303
  %1530 = vmatprep.subr.bf16.mxu0 %v308
  %1531 = vmatpush1.bf16.msra.mxu0 %v307
  %1532 = vmatprep.subr.bf16.mxu0 %v312
  %1533 = vmatpush1.bf16.msra.mxu0 %v311
  %1534 = vmatprep.subr.bf16.mxu0 %v316
  %1535 = vmatpush1.bf16.msra.mxu0 %v315
  %1536 = vmatprep.subr.bf16.mxu0 %v320
  %1537 = vmatpush1.bf16.msra.mxu0 %v319
  %1538 = vmatprep.subr.bf16.mxu0 %v324
  %1539 = vmatpush1.bf16.msra.mxu0 %v323
  %1540 = vmatprep.subr.bf16.mxu0 %v328
  %1541 = vmatpush1.bf16.msra.mxu0 %v327
  %1542 = vmatprep.subr.bf16.mxu0 %v332
  %1543 = vmatpush1.bf16.msra.mxu0 %v331
  %1544 = vmatprep.subr.bf16.mxu0 %v336
  %1545 = vmatpush1.bf16.msra.mxu0 %v335
  %1546 = vmatprep.subr.bf16.mxu0 %v340
  %1547 = vmatpush1.bf16.msra.mxu0 %v339
  %1548 = vmatprep.subr.bf16.mxu0 %v344
  %1549 = vmatpush1.bf16.msra.mxu0 %v343
  %1550 = vmatprep.subr.bf16.mxu0 %v348
  %1551 = vmatpush1.bf16.msra.mxu0 %v347
  %1552 = vmatprep.subr.bf16.mxu0 %v352
  %1553 = vmatpush1.bf16.msra.mxu0 %v351
  %1554 = vmatprep.subr.bf16.mxu0 %v356
  %1555 = vmatpush1.bf16.msra.mxu0 %v355
  %1556 = vmatprep.subr.bf16.mxu0 %v360
  %1557 = vmatpush1.bf16.msra.mxu0 %v359
  %1558 = vmatprep.subr.bf16.mxu0 %v364
  %1559 = vmatpush1.bf16.msra.mxu0 %v363
  %1560 = vmatprep.mubr.bf16.mxu0 %v1376
  %1561 = vmatmul.mubr.bf16.gmra.mrb[0].mxu0 %v1486
  %v1562 = vpop.f32.mrb[0].mxu0
  %v1563 = vadd.f32 %v100, %v1562
  %v1564 = vpop.f32.mrb[0].mxu0
  %v1565 = vadd.f32 %v104, %v1564
  %v1566 = vpop.f32.mrb[0].mxu0
  %v1567 = vpop.f32.mrb[0].mxu0
  %1568 = vdwg.mxu0
  %v1569 = vxor.u32 %v1522, 2147483648
  %v1570 = vmul.f32 %v1569, 1.442695
  %v1571 = vpow.pop %v1570
  %v1572 = vadd.f32 %v1571, 1.0
  %v1573 = vrcp.pop %v1572
  %v1574 = vmul.f32 1.0, %v1573
  %v1575 = vxor.u32 %v1524, 2147483648
  %v1576 = vmul.f32 %v1575, 1.442695
  %v1577 = vpow.pop %v1576
  %v1578 = vadd.f32 %v1577, 1.0
  %v1579 = vrcp.pop %v1578
  %v1580 = vmul.f32 1.0, %v1579
  %v1581 = vtanh.pop %v1563
  %v1582 = vxor.u32 %v1565, 2147483648
  %v1583 = vmul.f32 %v1582, 1.442695
  %v1584 = vpow.pop %v1583
  %v1585 = vadd.f32 %v1584, 1.0
  %v1586 = vrcp.pop %v1585
  %v1587 = vmul.f32 1.0, %v1586
  %v1588 = vmul.f32 %v1580, %v1373
  %v1589 = vmul.f32 %v1574, %v1581
  %v1590 = vadd.f32 %v1588, %v1589
  %v1591 = vtanh.pop %v1590
  %v1592 = vmul.f32 %v1587, %v1591
  %v1593 = vpack.c.bf16 %v1592, %v1592
  %v1594 = vpack.c.bf16 %v1483, %v1483
  %1595 = vmatprep.subr.bf16.mxu0 %v817
  %1596 = vmatpush1.bf16.msra.mxu0 %v816
  %1597 = vmatprep.subr.bf16.mxu0 %v821
  %1598 = vmatpush1.bf16.msra.mxu0 %v820
  %1599 = vmatprep.subr.bf16.mxu0 %v825
  %1600 = vmatpush1.bf16.msra.mxu0 %v824
  %1601 = vmatprep.subr.bf16.mxu0 %v829
  %1602 = vmatpush1.bf16.msra.mxu0 %v828
  %1603 = vmatprep.subr.bf16.mxu0 %v833
  %1604 = vmatpush1.bf16.msra.mxu0 %v832
  %1605 = vmatprep.subr.bf16.mxu0 %v837
  %1606 = vmatpush1.bf16.msra.mxu0 %v836
  %1607 = vmatprep.subr.bf16.mxu0 %v841
  %1608 = vmatpush1.bf16.msra.mxu0 %v840
  %1609 = vmatprep.subr.bf16.mxu0 %v845
  %1610 = vmatpush1.bf16.msra.mxu0 %v844
  %1611 = vmatprep.subr.bf16.mxu0 %v849
  %1612 = vmatpush1.bf16.msra.mxu0 %v848
  %1613 = vmatprep.subr.bf16.mxu0 %v853
  %1614 = vmatpush1.bf16.msra.mxu0 %v852
  %1615 = vmatprep.subr.bf16.mxu0 %v857
  %1616 = vmatpush1.bf16.msra.mxu0 %v856
  %1617 = vmatprep.subr.bf16.mxu0 %v861
  %1618 = vmatpush1.bf16.msra.mxu0 %v860
  %1619 = vmatprep.subr.bf16.mxu0 %v865
  %1620 = vmatpush1.bf16.msra.mxu0 %v864
  %1621 = vmatprep.subr.bf16.mxu0 %v869
  %1622 = vmatpush1.bf16.msra.mxu0 %v868
  %1623 = vmatprep.subr.bf16.mxu0 %v873
  %1624 = vmatpush1.bf16.msra.mxu0 %v872
  %1625 = vmatprep.subr.bf16.mxu0 %v877
  %1626 = vmatpush1.bf16.msra.mxu0 %v876
  %1627 = vmatprep.mubr.bf16.mxu0 %v1594
  %1628 = vmatmul.mubr.bf16.gmra.mrb[0].mxu0 %v1593
  %v1629 = vpop.f32.mrb[0].mxu0
  %v1630 = vadd.f32 %v607, %v1629
  %v1631 = vpop.f32.mrb[0].mxu0
  %v1632 = vadd.f32 %v611, %v1631
  %v1633 = vpop.f32.mrb[0].mxu0
  %v1634 = vpop.f32.mrb[0].mxu0
  %1635 = vdwg.mxu0
  %1636 = vmatprep.subr.bf16.mxu0 %v819
  %1637 = vmatpush1.bf16.msra.mxu0 %v818
  %1638 = vmatprep.subr.bf16.mxu0 %v823
  %1639 = vmatpush1.bf16.msra.mxu0 %v822
  %1640 = vmatprep.subr.bf16.mxu0 %v827
  %1641 = vmatpush1.bf16.msra.mxu0 %v826
  %1642 = vmatprep.subr.bf16.mxu0 %v831
  %1643 = vmatpush1.bf16.msra.mxu0 %v830
  %1644 = vmatprep.subr.bf16.mxu0 %v835
  %1645 = vmatpush1.bf16.msra.mxu0 %v834
  %1646 = vmatprep.subr.bf16.mxu0 %v839
  %1647 = vmatpush1.bf16.msra.mxu0 %v838
  %1648 = vmatprep.subr.bf16.mxu0 %v843
  %1649 = vmatpush1.bf16.msra.mxu0 %v842
  %1650 = vmatprep.subr.bf16.mxu0 %v847
  %1651 = vmatpush1.bf16.msra.mxu0 %v846
  %1652 = vmatprep.subr.bf16.mxu0 %v851
  %1653 = vmatpush1.bf16.msra.mxu0 %v850
  %1654 = vmatprep.subr.bf16.mxu0 %v855
  %1655 = vmatpush1.bf16.msra.mxu0 %v854
  %1656 = vmatprep.subr.bf16.mxu0 %v859
  %1657 = vmatpush1.bf16.msra.mxu0 %v858
  %1658 = vmatprep.subr.bf16.mxu0 %v863
  %1659 = vmatpush1.bf16.msra.mxu0 %v862
  %1660 = vmatprep.subr.bf16.mxu0 %v867
  %1661 = vmatpush1.bf16.msra.mxu0 %v866
  %1662 = vmatprep.subr.bf16.mxu0 %v871
  %1663 = vmatpush1.bf16.msra.mxu0 %v870
  %1664 = vmatprep.subr.bf16.mxu0 %v875
  %1665 = vmatpush1.bf16.msra.mxu0 %v874
  %1666 = vmatprep.subr.bf16.mxu0 %v879
  %1667 = vmatpush1.bf16.msra.mxu0 %v878
  %1668 = vmatprep.mubr.bf16.mxu0 %v1594
  %1669 = vmatmul.mubr.bf16.gmra.mrb[0].mxu0 %v1593
  %v1670 = vpop.f32.mrb[0].mxu0
  %v1671 = vadd.f32 %v615, %v1670
  %v1672 = vpop.f32.mrb[0].mxu0
  %v1673 = vadd.f32 %v619, %v1672
  %v1674 = vpop.f32.mrb[0].mxu0
  %v1675 = vpop.f32.mrb[0].mxu0
  %1676 = vdwg.mxu0
  %v1677 = vxor.u32 %v1630, 2147483648
  %v1678 = vmul.f32 %v1677, 1.442695
  %v1679 = vpow.pop %v1678
  %v1680 = vadd.f32 %v1679, 1.0
  %v1681 = vrcp.pop %v1680
  %v1682 = vmul.f32 1.0, %v1681
  %v1683 = vxor.u32 %v1632, 2147483648
  %v1684 = vmul.f32 %v1683, 1.442695
  %v1685 = vpow.pop %v1684
  %v1686 = vadd.f32 %v1685, 1.0
  %v1687 = vrcp.pop %v1686
  %v1688 = vmul.f32 1.0, %v1687
  %v1689 = vtanh.pop %v1671
  %v1690 = vxor.u32 %v1673, 2147483648
  %v1691 = vmul.f32 %v1690, 1.442695
  %v1692 = vpow.pop %v1691
  %v1693 = vadd.f32 %v1692, 1.0
  %v1694 = vrcp.pop %v1693
  %v1695 = vmul.f32 1.0, %v1694
  %v1696 = vmul.f32 %v1688, %v1481
  %v1697 = vmul.f32 %v1682, %v1689
  %v1698 = vadd.f32 %v1696, %v1697
  %v1699 = vtanh.pop %v1698
  %v1700 = vmul.f32 %v1695, %v1699
  %s1701 = scalar_lea.vmem %s0, 8
  %v1702 = vld [vmem:[%s1701] sm:$0x3]
  %v1703 = vpack.c.bf16 %v1702, %v1702
  %1704 = vmatprep.subr.bf16.mxu0 %v302
  %1705 = vmatpush1.bf16.msra.mxu0 %v301
  %1706 = vmatprep.subr.bf16.mxu0 %v306
  %1707 = vmatpush1.bf16.msra.mxu0 %v305
  %1708 = vmatprep.subr.bf16.mxu0 %v310
  %1709 = vmatpush1.bf16.msra.mxu0 %v309
  %1710 = vmatprep.subr.bf16.mxu0 %v314
  %1711 = vmatpush1.bf16.msra.mxu0 %v313
  %1712 = vmatprep.subr.bf16.mxu0 %v318
  %1713 = vmatpush1.bf16.msra.mxu0 %v317
  %1714 = vmatprep.subr.bf16.mxu0 %v322
  %1715 = vmatpush1.bf16.msra.mxu0 %v321
  %1716 = vmatprep.subr.bf16.mxu0 %v326
  %1717 = vmatpush1.bf16.msra.mxu0 %v325
  %1718 = vmatprep.subr.bf16.mxu0 %v330
  %1719 = vmatpush1.bf16.msra.mxu0 %v329
  %1720 = vmatprep.subr.bf16.mxu0 %v334
  %1721 = vmatpush1.bf16.msra.mxu0 %v333
  %1722 = vmatprep.subr.bf16.mxu0 %v338
  %1723 = vmatpush1.bf16.msra.mxu0 %v337
  %1724 = vmatprep.subr.bf16.mxu0 %v342
  %1725 = vmatpush1.bf16.msra.mxu0 %v341
  %1726 = vmatprep.subr.bf16.mxu0 %v346
  %1727 = vmatpush1.bf16.msra.mxu0 %v345
  %1728 = vmatprep.subr.bf16.mxu0 %v350
  %1729 = vmatpush1.bf16.msra.mxu0 %v349
  %1730 = vmatprep.subr.bf16.mxu0 %v354
  %1731 = vmatpush1.bf16.msra.mxu0 %v353
  %1732 = vmatprep.subr.bf16.mxu0 %v358
  %1733 = vmatpush1.bf16.msra.mxu0 %v357
  %1734 = vmatprep.subr.bf16.mxu0 %v362
  %1735 = vmatpush1.bf16.msra.mxu0 %v361
  %1736 = vmatprep.mubr.bf16.mxu0 %v1593
  %1737 = vmatmul.mubr.bf16.gmra.mrb[0].mxu0 %v1703
  %v1738 = vpop.f32.mrb[0].mxu0
  %v1739 = vadd.f32 %v92, %v1738
  %v1740 = vpop.f32.mrb[0].mxu0
  %v1741 = vadd.f32 %v96, %v1740
  %v1742 = vpop.f32.mrb[0].mxu0
  %v1743 = vpop.f32.mrb[0].mxu0
  %1744 = vdwg.mxu0
  %1745 = vmatprep.subr.bf16.mxu0 %v304
  %1746 = vmatpush1.bf16.msra.mxu0 %v303
  %1747 = vmatprep.subr.bf16.mxu0 %v308
  %1748 = vmatpush1.bf16.msra.mxu0 %v307
  %1749 = vmatprep.subr.bf16.mxu0 %v312
  %1750 = vmatpush1.bf16.msra.mxu0 %v311
  %1751 = vmatprep.subr.bf16.mxu0 %v316
  %1752 = vmatpush1.bf16.msra.mxu0 %v315
  %1753 = vmatprep.subr.bf16.mxu0 %v320
  %1754 = vmatpush1.bf16.msra.mxu0 %v319
  %1755 = vmatprep.subr.bf16.mxu0 %v324
  %1756 = vmatpush1.bf16.msra.mxu0 %v323
  %1757 = vmatprep.subr.bf16.mxu0 %v328
  %1758 = vmatpush1.bf16.msra.mxu0 %v327
  %1759 = vmatprep.subr.bf16.mxu0 %v332
  %1760 = vmatpush1.bf16.msra.mxu0 %v331
  %1761 = vmatprep.subr.bf16.mxu0 %v336
  %1762 = vmatpush1.bf16.msra.mxu0 %v335
  %1763 = vmatprep.subr.bf16.mxu0 %v340
  %1764 = vmatpush1.bf16.msra.mxu0 %v339
  %1765 = vmatprep.subr.bf16.mxu0 %v344
  %1766 = vmatpush1.bf16.msra.mxu0 %v343
  %1767 = vmatprep.subr.bf16.mxu0 %v348
  %1768 = vmatpush1.bf16.msra.mxu0 %v347
  %1769 = vmatprep.subr.bf16.mxu0 %v352
  %1770 = vmatpush1.bf16.msra.mxu0 %v351
  %1771 = vmatprep.subr.bf16.mxu0 %v356
  %1772 = vmatpush1.bf16.msra.mxu0 %v355
  %1773 = vmatprep.subr.bf16.mxu0 %v360
  %1774 = vmatpush1.bf16.msra.mxu0 %v359
  %1775 = vmatprep.subr.bf16.mxu0 %v364
  %1776 = vmatpush1.bf16.msra.mxu0 %v363
  %1777 = vmatprep.mubr.bf16.mxu0 %v1593
  %1778 = vmatmul.mubr.bf16.gmra.mrb[0].mxu0 %v1703
  %v1779 = vpop.f32.mrb[0].mxu0
  %v1780 = vadd.f32 %v100, %v1779
  %v1781 = vpop.f32.mrb[0].mxu0
  %v1782 = vadd.f32 %v104, %v1781
  %v1783 = vpop.f32.mrb[0].mxu0
  %v1784 = vpop.f32.mrb[0].mxu0
  %1785 = vdwg.mxu0
  %v1786 = vxor.u32 %v1739, 2147483648
  %v1787 = vmul.f32 %v1786, 1.442695
  %v1788 = vpow.pop %v1787
  %v1789 = vadd.f32 %v1788, 1.0
  %v1790 = vrcp.pop %v1789
  %v1791 = vmul.f32 1.0, %v1790
  %v1792 = vxor.u32 %v1741, 2147483648
  %v1793 = vmul.f32 %v1792, 1.442695
  %v1794 = vpow.pop %v1793
  %v1795 = vadd.f32 %v1794, 1.0
  %v1796 = vrcp.pop %v1795
  %v1797 = vmul.f32 1.0, %v1796
  %v1798 = vtanh.pop %v1780
  %v1799 = vxor.u32 %v1782, 2147483648
  %v1800 = vmul.f32 %v1799, 1.442695
  %v1801 = vpow.pop %v1800
  %v1802 = vadd.f32 %v1801, 1.0
  %v1803 = vrcp.pop %v1802
  %v1804 = vmul.f32 1.0, %v1803
  %v1805 = vmul.f32 %v1797, %v1590
  %v1806 = vmul.f32 %v1791, %v1798
  %v1807 = vadd.f32 %v1805, %v1806
  %v1808 = vtanh.pop %v1807
  %v1809 = vmul.f32 %v1804, %v1808
  %v1810 = vpack.c.bf16 %v1809, %v1809
  %v1811 = vpack.c.bf16 %v1700, %v1700
  %1812 = vmatprep.subr.bf16.mxu0 %v817
  %1813 = vmatpush1.bf16.msra.mxu0 %v816
  %1814 = vmatprep.subr.bf16.mxu0 %v821
  %1815 = vmatpush1.bf16.msra.mxu0 %v820
  %1816 = vmatprep.subr.bf16.mxu0 %v825
  %1817 = vmatpush1.bf16.msra.mxu0 %v824
  %1818 = vmatprep.subr.bf16.mxu0 %v829
  %1819 = vmatpush1.bf16.msra.mxu0 %v828
  %1820 = vmatprep.subr.bf16.mxu0 %v833
  %1821 = vmatpush1.bf16.msra.mxu0 %v832
  %1822 = vmatprep.subr.bf16.mxu0 %v837
  %1823 = vmatpush1.bf16.msra.mxu0 %v836
  %1824 = vmatprep.subr.bf16.mxu0 %v841
  %1825 = vmatpush1.bf16.msra.mxu0 %v840
  %1826 = vmatprep.subr.bf16.mxu0 %v845
  %1827 = vmatpush1.bf16.msra.mxu0 %v844
  %1828 = vmatprep.subr.bf16.mxu0 %v849
  %1829 = vmatpush1.bf16.msra.mxu0 %v848
  %1830 = vmatprep.subr.bf16.mxu0 %v853
  %1831 = vmatpush1.bf16.msra.mxu0 %v852
  %1832 = vmatprep.subr.bf16.mxu0 %v857
  %1833 = vmatpush1.bf16.msra.mxu0 %v856
  %1834 = vmatprep.subr.bf16.mxu0 %v861
  %1835 = vmatpush1.bf16.msra.mxu0 %v860
  %1836 = vmatprep.subr.bf16.mxu0 %v865
  %1837 = vmatpush1.bf16.msra.mxu0 %v864
  %1838 = vmatprep.subr.bf16.mxu0 %v869
  %1839 = vmatpush1.bf16.msra.mxu0 %v868
  %1840 = vmatprep.subr.bf16.mxu0 %v873
  %1841 = vmatpush1.bf16.msra.mxu0 %v872
  %1842 = vmatprep.subr.bf16.mxu0 %v877
  %1843 = vmatpush1.bf16.msra.mxu0 %v876
  %1844 = vmatprep.mubr.bf16.mxu0 %v1811
  %1845 = vmatmul.mubr.bf16.gmra.mrb[0].mxu0 %v1810
  %v1846 = vpop.f32.mrb[0].mxu0
  %v1847 = vadd.f32 %v607, %v1846
  %v1848 = vpop.f32.mrb[0].mxu0
  %v1849 = vadd.f32 %v611, %v1848
  %v1850 = vpop.f32.mrb[0].mxu0
  %v1851 = vpop.f32.mrb[0].mxu0
  %1852 = vdwg.mxu0
  %1853 = vmatprep.subr.bf16.mxu0 %v819
  %1854 = vmatpush1.bf16.msra.mxu0 %v818
  %1855 = vmatprep.subr.bf16.mxu0 %v823
  %1856 = vmatpush1.bf16.msra.mxu0 %v822
  %1857 = vmatprep.subr.bf16.mxu0 %v827
  %1858 = vmatpush1.bf16.msra.mxu0 %v826
  %1859 = vmatprep.subr.bf16.mxu0 %v831
  %1860 = vmatpush1.bf16.msra.mxu0 %v830
  %1861 = vmatprep.subr.bf16.mxu0 %v835
  %1862 = vmatpush1.bf16.msra.mxu0 %v834
  %1863 = vmatprep.subr.bf16.mxu0 %v839
  %1864 = vmatpush1.bf16.msra.mxu0 %v838
  %1865 = vmatprep.subr.bf16.mxu0 %v843
  %1866 = vmatpush1.bf16.msra.mxu0 %v842
  %1867 = vmatprep.subr.bf16.mxu0 %v847
  %1868 = vmatpush1.bf16.msra.mxu0 %v846
  %1869 = vmatprep.subr.bf16.mxu0 %v851
  %1870 = vmatpush1.bf16.msra.mxu0 %v850
  %1871 = vmatprep.subr.bf16.mxu0 %v855
  %1872 = vmatpush1.bf16.msra.mxu0 %v854
  %1873 = vmatprep.subr.bf16.mxu0 %v859
  %1874 = vmatpush1.bf16.msra.mxu0 %v858
  %1875 = vmatprep.subr.bf16.mxu0 %v863
  %1876 = vmatpush1.bf16.msra.mxu0 %v862
  %1877 = vmatprep.subr.bf16.mxu0 %v867
  %1878 = vmatpush1.bf16.msra.mxu0 %v866
  %1879 = vmatprep.subr.bf16.mxu0 %v871
  %1880 = vmatpush1.bf16.msra.mxu0 %v870
  %1881 = vmatprep.subr.bf16.mxu0 %v875
  %1882 = vmatpush1.bf16.msra.mxu0 %v874
  %1883 = vmatprep.subr.bf16.mxu0 %v879
  %1884 = vmatpush1.bf16.msra.mxu0 %v878
  %1885 = vmatprep.mubr.bf16.mxu0 %v1811
  %1886 = vmatmul.mubr.bf16.gmra.mrb[0].mxu0 %v1810
  %v1887 = vpop.f32.mrb[0].mxu0
  %v1888 = vadd.f32 %v615, %v1887
  %v1889 = vpop.f32.mrb[0].mxu0
  %v1890 = vadd.f32 %v619, %v1889
  %v1891 = vpop.f32.mrb[0].mxu0
  %v1892 = vpop.f32.mrb[0].mxu0
  %1893 = vdwg.mxu0
  %v1894 = vxor.u32 %v1847, 2147483648
  %v1895 = vmul.f32 %v1894, 1.442695
  %v1896 = vpow.pop %v1895
  %v1897 = vadd.f32 %v1896, 1.0
  %v1898 = vrcp.pop %v1897
  %v1899 = vmul.f32 1.0, %v1898
  %v1900 = vxor.u32 %v1849, 2147483648
  %v1901 = vmul.f32 %v1900, 1.442695
  %v1902 = vpow.pop %v1901
  %v1903 = vadd.f32 %v1902, 1.0
  %v1904 = vrcp.pop %v1903
  %v1905 = vmul.f32 1.0, %v1904
  %v1906 = vtanh.pop %v1888
  %v1907 = vxor.u32 %v1890, 2147483648
  %v1908 = vmul.f32 %v1907, 1.442695
  %v1909 = vpow.pop %v1908
  %v1910 = vadd.f32 %v1909, 1.0
  %v1911 = vrcp.pop %v1910
  %v1912 = vmul.f32 1.0, %v1911
  %v1913 = vmul.f32 %v1905, %v1698
  %v1914 = vmul.f32 %v1899, %v1906
  %v1915 = vadd.f32 %v1913, %v1914
  %v1916 = vtanh.pop %v1915
  %v1917 = vmul.f32 %v1912, %v1916
  %s1918 = scalar_lea.vmem %s0, 10
  %v1919 = vld [vmem:[%s1918] sm:$0x3]
  %v1920 = vpack.c.bf16 %v1919, %v1919
  %1921 = vmatprep.subr.bf16.mxu0 %v302
  %1922 = vmatpush1.bf16.msra.mxu0 %v301
  %1923 = vmatprep.subr.bf16.mxu0 %v306
  %1924 = vmatpush1.bf16.msra.mxu0 %v305
  %1925 = vmatprep.subr.bf16.mxu0 %v310
  %1926 = vmatpush1.bf16.msra.mxu0 %v309
  %1927 = vmatprep.subr.bf16.mxu0 %v314
  %1928 = vmatpush1.bf16.msra.mxu0 %v313
  %1929 = vmatprep.subr.bf16.mxu0 %v318
  %1930 = vmatpush1.bf16.msra.mxu0 %v317
  %1931 = vmatprep.subr.bf16.mxu0 %v322
  %1932 = vmatpush1.bf16.msra.mxu0 %v321
  %1933 = vmatprep.subr.bf16.mxu0 %v326
  %1934 = vmatpush1.bf16.msra.mxu0 %v325
  %1935 = vmatprep.subr.bf16.mxu0 %v330
  %1936 = vmatpush1.bf16.msra.mxu0 %v329
  %1937 = vmatprep.subr.bf16.mxu0 %v334
  %1938 = vmatpush1.bf16.msra.mxu0 %v333
  %1939 = vmatprep.subr.bf16.mxu0 %v338
  %1940 = vmatpush1.bf16.msra.mxu0 %v337
  %1941 = vmatprep.subr.bf16.mxu0 %v342
  %1942 = vmatpush1.bf16.msra.mxu0 %v341
  %1943 = vmatprep.subr.bf16.mxu0 %v346
  %1944 = vmatpush1.bf16.msra.mxu0 %v345
  %1945 = vmatprep.subr.bf16.mxu0 %v350
  %1946 = vmatpush1.bf16.msra.mxu0 %v349
  %1947 = vmatprep.subr.bf16.mxu0 %v354
  %1948 = vmatpush1.bf16.msra.mxu0 %v353
  %1949 = vmatprep.subr.bf16.mxu0 %v358
  %1950 = vmatpush1.bf16.msra.mxu0 %v357
  %1951 = vmatprep.subr.bf16.mxu0 %v362
  %1952 = vmatpush1.bf16.msra.mxu0 %v361
  %1953 = vmatprep.mubr.bf16.mxu0 %v1810
  %1954 = vmatmul.mubr.bf16.gmra.mrb[0].mxu0 %v1920
  %v1955 = vpop.f32.mrb[0].mxu0
  %v1956 = vadd.f32 %v92, %v1955
  %v1957 = vpop.f32.mrb[0].mxu0
  %v1958 = vadd.f32 %v96, %v1957
  %v1959 = vpop.f32.mrb[0].mxu0
  %v1960 = vpop.f32.mrb[0].mxu0
  %1961 = vdwg.mxu0
  %1962 = vmatprep.subr.bf16.mxu0 %v304
  %1963 = vmatpush1.bf16.msra.mxu0 %v303
  %1964 = vmatprep.subr.bf16.mxu0 %v308
  %1965 = vmatpush1.bf16.msra.mxu0 %v307
  %1966 = vmatprep.subr.bf16.mxu0 %v312
  %1967 = vmatpush1.bf16.msra.mxu0 %v311
  %1968 = vmatprep.subr.bf16.mxu0 %v316
  %1969 = vmatpush1.bf16.msra.mxu0 %v315
  %1970 = vmatprep.subr.bf16.mxu0 %v320
  %1971 = vmatpush1.bf16.msra.mxu0 %v319
  %1972 = vmatprep.subr.bf16.mxu0 %v324
  %1973 = vmatpush1.bf16.msra.mxu0 %v323
  %1974 = vmatprep.subr.bf16.mxu0 %v328
  %1975 = vmatpush1.bf16.msra.mxu0 %v327
  %1976 = vmatprep.subr.bf16.mxu0 %v332
  %1977 = vmatpush1.bf16.msra.mxu0 %v331
  %1978 = vmatprep.subr.bf16.mxu0 %v336
  %1979 = vmatpush1.bf16.msra.mxu0 %v335
  %1980 = vmatprep.subr.bf16.mxu0 %v340
  %1981 = vmatpush1.bf16.msra.mxu0 %v339
  %1982 = vmatprep.subr.bf16.mxu0 %v344
  %1983 = vmatpush1.bf16.msra.mxu0 %v343
  %1984 = vmatprep.subr.bf16.mxu0 %v348
  %1985 = vmatpush1.bf16.msra.mxu0 %v347
  %1986 = vmatprep.subr.bf16.mxu0 %v352
  %1987 = vmatpush1.bf16.msra.mxu0 %v351
  %1988 = vmatprep.subr.bf16.mxu0 %v356
  %1989 = vmatpush1.bf16.msra.mxu0 %v355
  %1990 = vmatprep.subr.bf16.mxu0 %v360
  %1991 = vmatpush1.bf16.msra.mxu0 %v359
  %1992 = vmatprep.subr.bf16.mxu0 %v364
  %1993 = vmatpush1.bf16.msra.mxu0 %v363
  %1994 = vmatprep.mubr.bf16.mxu0 %v1810
  %1995 = vmatmul.mubr.bf16.gmra.mrb[0].mxu0 %v1920
  %v1996 = vpop.f32.mrb[0].mxu0
  %v1997 = vadd.f32 %v100, %v1996
  %v1998 = vpop.f32.mrb[0].mxu0
  %v1999 = vadd.f32 %v104, %v1998
  %v2000 = vpop.f32.mrb[0].mxu0
  %v2001 = vpop.f32.mrb[0].mxu0
  %2002 = vdwg.mxu0
  %v2003 = vxor.u32 %v1956, 2147483648
  %v2004 = vmul.f32 %v2003, 1.442695
  %v2005 = vpow.pop %v2004
  %v2006 = vadd.f32 %v2005, 1.0
  %v2007 = vrcp.pop %v2006
  %v2008 = vmul.f32 1.0, %v2007
  %v2009 = vxor.u32 %v1958, 2147483648
  %v2010 = vmul.f32 %v2009, 1.442695
  %v2011 = vpow.pop %v2010
  %v2012 = vadd.f32 %v2011, 1.0
  %v2013 = vrcp.pop %v2012
  %v2014 = vmul.f32 1.0, %v2013
  %v2015 = vtanh.pop %v1997
  %v2016 = vxor.u32 %v1999, 2147483648
  %v2017 = vmul.f32 %v2016, 1.442695
  %v2018 = vpow.pop %v2017
  %v2019 = vadd.f32 %v2018, 1.0
  %v2020 = vrcp.pop %v2019
  %v2021 = vmul.f32 1.0, %v2020
  %v2022 = vmul.f32 %v2014, %v1807
  %v2023 = vmul.f32 %v2008, %v2015
  %v2024 = vadd.f32 %v2022, %v2023
  %v2025 = vtanh.pop %v2024
  %v2026 = vmul.f32 %v2021, %v2025
  %v2027 = vpack.c.bf16 %v2026, %v2026
  %v2028 = vpack.c.bf16 %v1917, %v1917
  %2029 = vmatprep.subr.bf16.mxu0 %v817
  %2030 = vmatpush1.bf16.msra.mxu0 %v816
  %2031 = vmatprep.subr.bf16.mxu0 %v821
  %2032 = vmatpush1.bf16.msra.mxu0 %v820
  %2033 = vmatprep.subr.bf16.mxu0 %v825
  %2034 = vmatpush1.bf16.msra.mxu0 %v824
  %2035 = vmatprep.subr.bf16.mxu0 %v829
  %2036 = vmatpush1.bf16.msra.mxu0 %v828
  %2037 = vmatprep.subr.bf16.mxu0 %v833
  %2038 = vmatpush1.bf16.msra.mxu0 %v832
  %2039 = vmatprep.subr.bf16.mxu0 %v837
  %2040 = vmatpush1.bf16.msra.mxu0 %v836
  %2041 = vmatprep.subr.bf16.mxu0 %v841
  %2042 = vmatpush1.bf16.msra.mxu0 %v840
  %2043 = vmatprep.subr.bf16.mxu0 %v845
  %2044 = vmatpush1.bf16.msra.mxu0 %v844
  %2045 = vmatprep.subr.bf16.mxu0 %v849
  %2046 = vmatpush1.bf16.msra.mxu0 %v848
  %2047 = vmatprep.subr.bf16.mxu0 %v853
  %2048 = vmatpush1.bf16.msra.mxu0 %v852
  %2049 = vmatprep.subr.bf16.mxu0 %v857
  %2050 = vmatpush1.bf16.msra.mxu0 %v856
  %2051 = vmatprep.subr.bf16.mxu0 %v861
  %2052 = vmatpush1.bf16.msra.mxu0 %v860
  %2053 = vmatprep.subr.bf16.mxu0 %v865
  %2054 = vmatpush1.bf16.msra.mxu0 %v864
  %2055 = vmatprep.subr.bf16.mxu0 %v869
  %2056 = vmatpush1.bf16.msra.mxu0 %v868
  %2057 = vmatprep.subr.bf16.mxu0 %v873
  %2058 = vmatpush1.bf16.msra.mxu0 %v872
  %2059 = vmatprep.subr.bf16.mxu0 %v877
  %2060 = vmatpush1.bf16.msra.mxu0 %v876
  %2061 = vmatprep.mubr.bf16.mxu0 %v2028
  %2062 = vmatmul.mubr.bf16.gmra.mrb[0].mxu0 %v2027
  %v2063 = vpop.f32.mrb[0].mxu0
  %v2064 = vadd.f32 %v607, %v2063
  %v2065 = vpop.f32.mrb[0].mxu0
  %v2066 = vadd.f32 %v611, %v2065
  %v2067 = vpop.f32.mrb[0].mxu0
  %v2068 = vpop.f32.mrb[0].mxu0
  %2069 = vdwg.mxu0
  %2070 = vmatprep.subr.bf16.mxu0 %v819
  %2071 = vmatpush1.bf16.msra.mxu0 %v818
  %2072 = vmatprep.subr.bf16.mxu0 %v823
  %2073 = vmatpush1.bf16.msra.mxu0 %v822
  %2074 = vmatprep.subr.bf16.mxu0 %v827
  %2075 = vmatpush1.bf16.msra.mxu0 %v826
  %2076 = vmatprep.subr.bf16.mxu0 %v831
  %2077 = vmatpush1.bf16.msra.mxu0 %v830
  %2078 = vmatprep.subr.bf16.mxu0 %v835
  %2079 = vmatpush1.bf16.msra.mxu0 %v834
  %2080 = vmatprep.subr.bf16.mxu0 %v839
  %2081 = vmatpush1.bf16.msra.mxu0 %v838
  %2082 = vmatprep.subr.bf16.mxu0 %v843
  %2083 = vmatpush1.bf16.msra.mxu0 %v842
  %2084 = vmatprep.subr.bf16.mxu0 %v847
  %2085 = vmatpush1.bf16.msra.mxu0 %v846
  %2086 = vmatprep.subr.bf16.mxu0 %v851
  %2087 = vmatpush1.bf16.msra.mxu0 %v850
  %2088 = vmatprep.subr.bf16.mxu0 %v855
  %2089 = vmatpush1.bf16.msra.mxu0 %v854
  %2090 = vmatprep.subr.bf16.mxu0 %v859
  %2091 = vmatpush1.bf16.msra.mxu0 %v858
  %2092 = vmatprep.subr.bf16.mxu0 %v863
  %2093 = vmatpush1.bf16.msra.mxu0 %v862
  %2094 = vmatprep.subr.bf16.mxu0 %v867
  %2095 = vmatpush1.bf16.msra.mxu0 %v866
  %2096 = vmatprep.subr.bf16.mxu0 %v871
  %2097 = vmatpush1.bf16.msra.mxu0 %v870
  %2098 = vmatprep.subr.bf16.mxu0 %v875
  %2099 = vmatpush1.bf16.msra.mxu0 %v874
  %2100 = vmatprep.subr.bf16.mxu0 %v879
  %2101 = vmatpush1.bf16.msra.mxu0 %v878
  %2102 = vmatprep.mubr.bf16.mxu0 %v2028
  %2103 = vmatmul.mubr.bf16.gmra.mrb[0].mxu0 %v2027
  %v2104 = vpop.f32.mrb[0].mxu0
  %v2105 = vadd.f32 %v615, %v2104
  %v2106 = vpop.f32.mrb[0].mxu0
  %v2107 = vadd.f32 %v619, %v2106
  %v2108 = vpop.f32.mrb[0].mxu0
  %v2109 = vpop.f32.mrb[0].mxu0
  %2110 = vdwg.mxu0
  %v2111 = vxor.u32 %v2064, 2147483648
  %v2112 = vmul.f32 %v2111, 1.442695
  %v2113 = vpow.pop %v2112
  %v2114 = vadd.f32 %v2113, 1.0
  %v2115 = vrcp.pop %v2114
  %v2116 = vmul.f32 1.0, %v2115
  %v2117 = vxor.u32 %v2066, 2147483648
  %v2118 = vmul.f32 %v2117, 1.442695
  %v2119 = vpow.pop %v2118
  %v2120 = vadd.f32 %v2119, 1.0
  %v2121 = vrcp.pop %v2120
  %v2122 = vmul.f32 1.0, %v2121
  %v2123 = vtanh.pop %v2105
  %v2124 = vxor.u32 %v2107, 2147483648
  %v2125 = vmul.f32 %v2124, 1.442695
  %v2126 = vpow.pop %v2125
  %v2127 = vadd.f32 %v2126, 1.0
  %v2128 = vrcp.pop %v2127
  %v2129 = vmul.f32 1.0, %v2128
  %v2130 = vmul.f32 %v2122, %v1915
  %v2131 = vmul.f32 %v2116, %v2123
  %v2132 = vadd.f32 %v2130, %v2131
  %v2133 = vtanh.pop %v2132
  %v2134 = vmul.f32 %v2129, %v2133
  %s2135 = scalar_lea.vmem %s0, 12
  %v2136 = vld [vmem:[%s2135] sm:$0x3]
  %v2137 = vpack.c.bf16 %v2136, %v2136
  %2138 = vmatprep.subr.bf16.mxu0 %v302
  %2139 = vmatpush1.bf16.msra.mxu0 %v301
  %2140 = vmatprep.subr.bf16.mxu0 %v306
  %2141 = vmatpush1.bf16.msra.mxu0 %v305
  %2142 = vmatprep.subr.bf16.mxu0 %v310
  %2143 = vmatpush1.bf16.msra.mxu0 %v309
  %2144 = vmatprep.subr.bf16.mxu0 %v314
  %2145 = vmatpush1.bf16.msra.mxu0 %v313
  %2146 = vmatprep.subr.bf16.mxu0 %v318
  %2147 = vmatpush1.bf16.msra.mxu0 %v317
  %2148 = vmatprep.subr.bf16.mxu0 %v322
  %2149 = vmatpush1.bf16.msra.mxu0 %v321
  %2150 = vmatprep.subr.bf16.mxu0 %v326
  %2151 = vmatpush1.bf16.msra.mxu0 %v325
  %2152 = vmatprep.subr.bf16.mxu0 %v330
  %2153 = vmatpush1.bf16.msra.mxu0 %v329
  %2154 = vmatprep.subr.bf16.mxu0 %v334
  %2155 = vmatpush1.bf16.msra.mxu0 %v333
  %2156 = vmatprep.subr.bf16.mxu0 %v338
  %2157 = vmatpush1.bf16.msra.mxu0 %v337
  %2158 = vmatprep.subr.bf16.mxu0 %v342
  %2159 = vmatpush1.bf16.msra.mxu0 %v341
  %2160 = vmatprep.subr.bf16.mxu0 %v346
  %2161 = vmatpush1.bf16.msra.mxu0 %v345
  %2162 = vmatprep.subr.bf16.mxu0 %v350
  %2163 = vmatpush1.bf16.msra.mxu0 %v349
  %2164 = vmatprep.subr.bf16.mxu0 %v354
  %2165 = vmatpush1.bf16.msra.mxu0 %v353
  %2166 = vmatprep.subr.bf16.mxu0 %v358
  %2167 = vmatpush1.bf16.msra.mxu0 %v357
  %2168 = vmatprep.subr.bf16.mxu0 %v362
  %2169 = vmatpush1.bf16.msra.mxu0 %v361
  %2170 = vmatprep.mubr.bf16.mxu0 %v2027
  %2171 = vmatmul.mubr.bf16.gmra.mrb[0].mxu0 %v2137
  %v2172 = vpop.f32.mrb[0].mxu0
  %v2173 = vadd.f32 %v92, %v2172
  %v2174 = vpop.f32.mrb[0].mxu0
  %v2175 = vadd.f32 %v96, %v2174
  %v2176 = vpop.f32.mrb[0].mxu0
  %v2177 = vpop.f32.mrb[0].mxu0
  %2178 = vdwg.mxu0
  %2179 = vmatprep.subr.bf16.mxu0 %v304
  %2180 = vmatpush1.bf16.msra.mxu0 %v303
  %2181 = vmatprep.subr.bf16.mxu0 %v308
  %2182 = vmatpush1.bf16.msra.mxu0 %v307
  %2183 = vmatprep.subr.bf16.mxu0 %v312
  %2184 = vmatpush1.bf16.msra.mxu0 %v311
  %2185 = vmatprep.subr.bf16.mxu0 %v316
  %2186 = vmatpush1.bf16.msra.mxu0 %v315
  %2187 = vmatprep.subr.bf16.mxu0 %v320
  %2188 = vmatpush1.bf16.msra.mxu0 %v319
  %2189 = vmatprep.subr.bf16.mxu0 %v324
  %2190 = vmatpush1.bf16.msra.mxu0 %v323
  %2191 = vmatprep.subr.bf16.mxu0 %v328
  %2192 = vmatpush1.bf16.msra.mxu0 %v327
  %2193 = vmatprep.subr.bf16.mxu0 %v332
  %2194 = vmatpush1.bf16.msra.mxu0 %v331
  %2195 = vmatprep.subr.bf16.mxu0 %v336
  %2196 = vmatpush1.bf16.msra.mxu0 %v335
  %2197 = vmatprep.subr.bf16.mxu0 %v340
  %2198 = vmatpush1.bf16.msra.mxu0 %v339
  %2199 = vmatprep.subr.bf16.mxu0 %v344
  %2200 = vmatpush1.bf16.msra.mxu0 %v343
  %2201 = vmatprep.subr.bf16.mxu0 %v348
  %2202 = vmatpush1.bf16.msra.mxu0 %v347
  %2203 = vmatprep.subr.bf16.mxu0 %v352
  %2204 = vmatpush1.bf16.msra.mxu0 %v351
  %2205 = vmatprep.subr.bf16.mxu0 %v356
  %2206 = vmatpush1.bf16.msra.mxu0 %v355
  %2207 = vmatprep.subr.bf16.mxu0 %v360
  %2208 = vmatpush1.bf16.msra.mxu0 %v359
  %2209 = vmatprep.subr.bf16.mxu0 %v364
  %2210 = vmatpush1.bf16.msra.mxu0 %v363
  %2211 = vmatprep.mubr.bf16.mxu0 %v2027
  %2212 = vmatmul.mubr.bf16.gmra.mrb[0].mxu0 %v2137
  %v2213 = vpop.f32.mrb[0].mxu0
  %v2214 = vadd.f32 %v100, %v2213
  %v2215 = vpop.f32.mrb[0].mxu0
  %v2216 = vadd.f32 %v104, %v2215
  %v2217 = vpop.f32.mrb[0].mxu0
  %v2218 = vpop.f32.mrb[0].mxu0
  %2219 = vdwg.mxu0
  %v2220 = vxor.u32 %v2173, 2147483648
  %v2221 = vmul.f32 %v2220, 1.442695
  %v2222 = vpow.pop %v2221
  %v2223 = vadd.f32 %v2222, 1.0
  %v2224 = vrcp.pop %v2223
  %v2225 = vmul.f32 1.0, %v2224
  %v2226 = vxor.u32 %v2175, 2147483648
  %v2227 = vmul.f32 %v2226, 1.442695
  %v2228 = vpow.pop %v2227
  %v2229 = vadd.f32 %v2228, 1.0
  %v2230 = vrcp.pop %v2229
  %v2231 = vmul.f32 1.0, %v2230
  %v2232 = vtanh.pop %v2214
  %v2233 = vxor.u32 %v2216, 2147483648
  %v2234 = vmul.f32 %v2233, 1.442695
  %v2235 = vpow.pop %v2234
  %v2236 = vadd.f32 %v2235, 1.0
  %v2237 = vrcp.pop %v2236
  %v2238 = vmul.f32 1.0, %v2237
  %v2239 = vmul.f32 %v2231, %v2024
  %v2240 = vmul.f32 %v2225, %v2232
  %v2241 = vadd.f32 %v2239, %v2240
  %v2242 = vtanh.pop %v2241
  %v2243 = vmul.f32 %v2238, %v2242
  %v2244 = vpack.c.bf16 %v2243, %v2243
  %v2245 = vpack.c.bf16 %v2134, %v2134
  %2246 = vmatprep.subr.bf16.mxu0 %v817
  %2247 = vmatpush1.bf16.msra.mxu0 %v816
  %2248 = vmatprep.subr.bf16.mxu0 %v821
  %2249 = vmatpush1.bf16.msra.mxu0 %v820
  %2250 = vmatprep.subr.bf16.mxu0 %v825
  %2251 = vmatpush1.bf16.msra.mxu0 %v824
  %2252 = vmatprep.subr.bf16.mxu0 %v829
  %2253 = vmatpush1.bf16.msra.mxu0 %v828
  %2254 = vmatprep.subr.bf16.mxu0 %v833
  %2255 = vmatpush1.bf16.msra.mxu0 %v832
  %2256 = vmatprep.subr.bf16.mxu0 %v837
  %2257 = vmatpush1.bf16.msra.mxu0 %v836
  %2258 = vmatprep.subr.bf16.mxu0 %v841
  %2259 = vmatpush1.bf16.msra.mxu0 %v840
  %2260 = vmatprep.subr.bf16.mxu0 %v845
  %2261 = vmatpush1.bf16.msra.mxu0 %v844
  %2262 = vmatprep.subr.bf16.mxu0 %v849
  %2263 = vmatpush1.bf16.msra.mxu0 %v848
  %2264 = vmatprep.subr.bf16.mxu0 %v853
  %2265 = vmatpush1.bf16.msra.mxu0 %v852
  %2266 = vmatprep.subr.bf16.mxu0 %v857
  %2267 = vmatpush1.bf16.msra.mxu0 %v856
  %2268 = vmatprep.subr.bf16.mxu0 %v861
  %2269 = vmatpush1.bf16.msra.mxu0 %v860
  %2270 = vmatprep.subr.bf16.mxu0 %v865
  %2271 = vmatpush1.bf16.msra.mxu0 %v864
  %2272 = vmatprep.subr.bf16.mxu0 %v869
  %2273 = vmatpush1.bf16.msra.mxu0 %v868
  %2274 = vmatprep.subr.bf16.mxu0 %v873
  %2275 = vmatpush1.bf16.msra.mxu0 %v872
  %2276 = vmatprep.subr.bf16.mxu0 %v877
  %2277 = vmatpush1.bf16.msra.mxu0 %v876
  %2278 = vmatprep.mubr.bf16.mxu0 %v2245
  %2279 = vmatmul.mubr.bf16.gmra.mrb[0].mxu0 %v2244
  %v2280 = vpop.f32.mrb[0].mxu0
  %v2281 = vadd.f32 %v607, %v2280
  %v2282 = vpop.f32.mrb[0].mxu0
  %v2283 = vadd.f32 %v611, %v2282
  %v2284 = vpop.f32.mrb[0].mxu0
  %v2285 = vpop.f32.mrb[0].mxu0
  %2286 = vdwg.mxu0
  %2287 = vmatprep.subr.bf16.mxu0 %v819
  %2288 = vmatpush1.bf16.msra.mxu0 %v818
  %2289 = vmatprep.subr.bf16.mxu0 %v823
  %2290 = vmatpush1.bf16.msra.mxu0 %v822
  %2291 = vmatprep.subr.bf16.mxu0 %v827
  %2292 = vmatpush1.bf16.msra.mxu0 %v826
  %2293 = vmatprep.subr.bf16.mxu0 %v831
  %2294 = vmatpush1.bf16.msra.mxu0 %v830
  %2295 = vmatprep.subr.bf16.mxu0 %v835
  %2296 = vmatpush1.bf16.msra.mxu0 %v834
  %2297 = vmatprep.subr.bf16.mxu0 %v839
  %2298 = vmatpush1.bf16.msra.mxu0 %v838
  %2299 = vmatprep.subr.bf16.mxu0 %v843
  %2300 = vmatpush1.bf16.msra.mxu0 %v842
  %2301 = vmatprep.subr.bf16.mxu0 %v847
  %2302 = vmatpush1.bf16.msra.mxu0 %v846
  %2303 = vmatprep.subr.bf16.mxu0 %v851
  %2304 = vmatpush1.bf16.msra.mxu0 %v850
  %2305 = vmatprep.subr.bf16.mxu0 %v855
  %2306 = vmatpush1.bf16.msra.mxu0 %v854
  %2307 = vmatprep.subr.bf16.mxu0 %v859
  %2308 = vmatpush1.bf16.msra.mxu0 %v858
  %2309 = vmatprep.subr.bf16.mxu0 %v863
  %2310 = vmatpush1.bf16.msra.mxu0 %v862
  %2311 = vmatprep.subr.bf16.mxu0 %v867
  %2312 = vmatpush1.bf16.msra.mxu0 %v866
  %2313 = vmatprep.subr.bf16.mxu0 %v871
  %2314 = vmatpush1.bf16.msra.mxu0 %v870
  %2315 = vmatprep.subr.bf16.mxu0 %v875
  %2316 = vmatpush1.bf16.msra.mxu0 %v874
  %2317 = vmatprep.subr.bf16.mxu0 %v879
  %2318 = vmatpush1.bf16.msra.mxu0 %v878
  %2319 = vmatprep.mubr.bf16.mxu0 %v2245
  %2320 = vmatmul.mubr.bf16.gmra.mrb[0].mxu0 %v2244
  %v2321 = vpop.f32.mrb[0].mxu0
  %v2322 = vadd.f32 %v615, %v2321
  %v2323 = vpop.f32.mrb[0].mxu0
  %v2324 = vadd.f32 %v619, %v2323
  %v2325 = vpop.f32.mrb[0].mxu0
  %v2326 = vpop.f32.mrb[0].mxu0
  %2327 = vdwg.mxu0
  %v2328 = vxor.u32 %v2281, 2147483648
  %v2329 = vmul.f32 %v2328, 1.442695
  %v2330 = vpow.pop %v2329
  %v2331 = vadd.f32 %v2330, 1.0
  %v2332 = vrcp.pop %v2331
  %v2333 = vmul.f32 1.0, %v2332
  %v2334 = vxor.u32 %v2283, 2147483648
  %v2335 = vmul.f32 %v2334, 1.442695
  %v2336 = vpow.pop %v2335
  %v2337 = vadd.f32 %v2336, 1.0
  %v2338 = vrcp.pop %v2337
  %v2339 = vmul.f32 1.0, %v2338
  %v2340 = vtanh.pop %v2322
  %v2341 = vxor.u32 %v2324, 2147483648
  %v2342 = vmul.f32 %v2341, 1.442695
  %v2343 = vpow.pop %v2342
  %v2344 = vadd.f32 %v2343, 1.0
  %v2345 = vrcp.pop %v2344
  %v2346 = vmul.f32 1.0, %v2345
  %v2347 = vmul.f32 %v2339, %v2132
  %v2348 = vmul.f32 %v2333, %v2340
  %v2349 = vadd.f32 %v2347, %v2348
  %v2350 = vtanh.pop %v2349
  %v2351 = vmul.f32 %v2346, %v2350
  %s2352 = scalar_lea.vmem %s0, 14
  %v2353 = vld [vmem:[%s2352] sm:$0x3]
  %v2354 = vpack.c.bf16 %v2353, %v2353
  %2355 = vmatprep.subr.bf16.mxu0 %v302
  %2356 = vmatpush1.bf16.msra.mxu0 %v301
  %2357 = vmatprep.subr.bf16.mxu0 %v306
  %2358 = vmatpush1.bf16.msra.mxu0 %v305
  %2359 = vmatprep.subr.bf16.mxu0 %v310
  %2360 = vmatpush1.bf16.msra.mxu0 %v309
  %2361 = vmatprep.subr.bf16.mxu0 %v314
  %2362 = vmatpush1.bf16.msra.mxu0 %v313
  %2363 = vmatprep.subr.bf16.mxu0 %v318
  %2364 = vmatpush1.bf16.msra.mxu0 %v317
  %2365 = vmatprep.subr.bf16.mxu0 %v322
  %2366 = vmatpush1.bf16.msra.mxu0 %v321
  %2367 = vmatprep.subr.bf16.mxu0 %v326
  %2368 = vmatpush1.bf16.msra.mxu0 %v325
  %2369 = vmatprep.subr.bf16.mxu0 %v330
  %2370 = vmatpush1.bf16.msra.mxu0 %v329
  %2371 = vmatprep.subr.bf16.mxu0 %v334
  %2372 = vmatpush1.bf16.msra.mxu0 %v333
  %2373 = vmatprep.subr.bf16.mxu0 %v338
  %2374 = vmatpush1.bf16.msra.mxu0 %v337
  %2375 = vmatprep.subr.bf16.mxu0 %v342
  %2376 = vmatpush1.bf16.msra.mxu0 %v341
  %2377 = vmatprep.subr.bf16.mxu0 %v346
  %2378 = vmatpush1.bf16.msra.mxu0 %v345
  %2379 = vmatprep.subr.bf16.mxu0 %v350
  %2380 = vmatpush1.bf16.msra.mxu0 %v349
  %2381 = vmatprep.subr.bf16.mxu0 %v354
  %2382 = vmatpush1.bf16.msra.mxu0 %v353
  %2383 = vmatprep.subr.bf16.mxu0 %v358
  %2384 = vmatpush1.bf16.msra.mxu0 %v357
  %2385 = vmatprep.subr.bf16.mxu0 %v362
  %2386 = vmatpush1.bf16.msra.mxu0 %v361
  %2387 = vmatprep.mubr.bf16.mxu0 %v2244
  %2388 = vmatmul.mubr.bf16.gmra.mrb[0].mxu0 %v2354
  %v2389 = vpop.f32.mrb[0].mxu0
  %v2390 = vadd.f32 %v92, %v2389
  %v2391 = vpop.f32.mrb[0].mxu0
  %v2392 = vadd.f32 %v96, %v2391
  %v2393 = vpop.f32.mrb[0].mxu0
  %v2394 = vpop.f32.mrb[0].mxu0
  %2395 = vdwg.mxu0
  %2396 = vmatprep.subr.bf16.mxu0 %v304
  %2397 = vmatpush1.bf16.msra.mxu0 %v303
  %2398 = vmatprep.subr.bf16.mxu0 %v308
  %2399 = vmatpush1.bf16.msra.mxu0 %v307
  %2400 = vmatprep.subr.bf16.mxu0 %v312
  %2401 = vmatpush1.bf16.msra.mxu0 %v311
  %2402 = vmatprep.subr.bf16.mxu0 %v316
  %2403 = vmatpush1.bf16.msra.mxu0 %v315
  %2404 = vmatprep.subr.bf16.mxu0 %v320
  %2405 = vmatpush1.bf16.msra.mxu0 %v319
  %2406 = vmatprep.subr.bf16.mxu0 %v324
  %2407 = vmatpush1.bf16.msra.mxu0 %v323
  %2408 = vmatprep.subr.bf16.mxu0 %v328
  %2409 = vmatpush1.bf16.msra.mxu0 %v327
  %2410 = vmatprep.subr.bf16.mxu0 %v332
  %2411 = vmatpush1.bf16.msra.mxu0 %v331
  %2412 = vmatprep.subr.bf16.mxu0 %v336
  %2413 = vmatpush1.bf16.msra.mxu0 %v335
  %2414 = vmatprep.subr.bf16.mxu0 %v340
  %2415 = vmatpush1.bf16.msra.mxu0 %v339
  %2416 = vmatprep.subr.bf16.mxu0 %v344
  %2417 = vmatpush1.bf16.msra.mxu0 %v343
  %2418 = vmatprep.subr.bf16.mxu0 %v348
  %2419 = vmatpush1.bf16.msra.mxu0 %v347
  %2420 = vmatprep.subr.bf16.mxu0 %v352
  %2421 = vmatpush1.bf16.msra.mxu0 %v351
  %2422 = vmatprep.subr.bf16.mxu0 %v356
  %2423 = vmatpush1.bf16.msra.mxu0 %v355
  %2424 = vmatprep.subr.bf16.mxu0 %v360
  %2425 = vmatpush1.bf16.msra.mxu0 %v359
  %2426 = vmatprep.subr.bf16.mxu0 %v364
  %2427 = vmatpush1.bf16.msra.mxu0 %v363
  %2428 = vmatprep.mubr.bf16.mxu0 %v2244
  %2429 = vmatmul.mubr.bf16.gmra.mrb[0].mxu0 %v2354
  %v2430 = vpop.f32.mrb[0].mxu0
  %v2431 = vadd.f32 %v100, %v2430
  %v2432 = vpop.f32.mrb[0].mxu0
  %v2433 = vadd.f32 %v104, %v2432
  %v2434 = vpop.f32.mrb[0].mxu0
  %v2435 = vpop.f32.mrb[0].mxu0
  %2436 = vdwg.mxu0
  %v2437 = vxor.u32 %v2390, 2147483648
  %v2438 = vmul.f32 %v2437, 1.442695
  %v2439 = vpow.pop %v2438
  %v2440 = vadd.f32 %v2439, 1.0
  %v2441 = vrcp.pop %v2440
  %v2442 = vmul.f32 1.0, %v2441
  %v2443 = vxor.u32 %v2392, 2147483648
  %v2444 = vmul.f32 %v2443, 1.442695
  %v2445 = vpow.pop %v2444
  %v2446 = vadd.f32 %v2445, 1.0
  %v2447 = vrcp.pop %v2446
  %v2448 = vmul.f32 1.0, %v2447
  %v2449 = vtanh.pop %v2431
  %v2450 = vxor.u32 %v2433, 2147483648
  %v2451 = vmul.f32 %v2450, 1.442695
  %v2452 = vpow.pop %v2451
  %v2453 = vadd.f32 %v2452, 1.0
  %v2454 = vrcp.pop %v2453
  %v2455 = vmul.f32 1.0, %v2454
  %v2456 = vmul.f32 %v2448, %v2241
  %v2457 = vmul.f32 %v2442, %v2449
  %v2458 = vadd.f32 %v2456, %v2457
  %v2459 = vtanh.pop %v2458
  %v2460 = vmul.f32 %v2455, %v2459
  %v2461 = vpack.c.bf16 %v2460, %v2460
  %v2462 = vpack.c.bf16 %v2351, %v2351
  %2463 = vmatprep.subr.bf16.mxu0 %v817
  %2464 = vmatpush1.bf16.msra.mxu0 %v816
  %2465 = vmatprep.subr.bf16.mxu0 %v821
  %2466 = vmatpush1.bf16.msra.mxu0 %v820
  %2467 = vmatprep.subr.bf16.mxu0 %v825
  %2468 = vmatpush1.bf16.msra.mxu0 %v824
  %2469 = vmatprep.subr.bf16.mxu0 %v829
  %2470 = vmatpush1.bf16.msra.mxu0 %v828
  %2471 = vmatprep.subr.bf16.mxu0 %v833
  %2472 = vmatpush1.bf16.msra.mxu0 %v832
  %2473 = vmatprep.subr.bf16.mxu0 %v837
  %2474 = vmatpush1.bf16.msra.mxu0 %v836
  %2475 = vmatprep.subr.bf16.mxu0 %v841
  %2476 = vmatpush1.bf16.msra.mxu0 %v840
  %2477 = vmatprep.subr.bf16.mxu0 %v845
  %2478 = vmatpush1.bf16.msra.mxu0 %v844
  %2479 = vmatprep.subr.bf16.mxu0 %v849
  %2480 = vmatpush1.bf16.msra.mxu0 %v848
  %2481 = vmatprep.subr.bf16.mxu0 %v853
  %2482 = vmatpush1.bf16.msra.mxu0 %v852
  %2483 = vmatprep.subr.bf16.mxu0 %v857
  %2484 = vmatpush1.bf16.msra.mxu0 %v856
  %2485 = vmatprep.subr.bf16.mxu0 %v861
  %2486 = vmatpush1.bf16.msra.mxu0 %v860
  %2487 = vmatprep.subr.bf16.mxu0 %v865
  %2488 = vmatpush1.bf16.msra.mxu0 %v864
  %2489 = vmatprep.subr.bf16.mxu0 %v869
  %2490 = vmatpush1.bf16.msra.mxu0 %v868
  %2491 = vmatprep.subr.bf16.mxu0 %v873
  %2492 = vmatpush1.bf16.msra.mxu0 %v872
  %2493 = vmatprep.subr.bf16.mxu0 %v877
  %2494 = vmatpush1.bf16.msra.mxu0 %v876
  %2495 = vmatprep.mubr.bf16.mxu0 %v2462
  %2496 = vmatmul.mubr.bf16.gmra.mrb[0].mxu0 %v2461
  %v2497 = vpop.f32.mrb[0].mxu0
  %v2498 = vadd.f32 %v607, %v2497
  %v2499 = vpop.f32.mrb[0].mxu0
  %v2500 = vadd.f32 %v611, %v2499
  %v2501 = vpop.f32.mrb[0].mxu0
  %v2502 = vpop.f32.mrb[0].mxu0
  %2503 = vdwg.mxu0
  %2504 = vmatprep.subr.bf16.mxu0 %v819
  %2505 = vmatpush1.bf16.msra.mxu0 %v818
  %2506 = vmatprep.subr.bf16.mxu0 %v823
  %2507 = vmatpush1.bf16.msra.mxu0 %v822
  %2508 = vmatprep.subr.bf16.mxu0 %v827
  %2509 = vmatpush1.bf16.msra.mxu0 %v826
  %2510 = vmatprep.subr.bf16.mxu0 %v831
  %2511 = vmatpush1.bf16.msra.mxu0 %v830
  %2512 = vmatprep.subr.bf16.mxu0 %v835
  %2513 = vmatpush1.bf16.msra.mxu0 %v834
  %2514 = vmatprep.subr.bf16.mxu0 %v839
  %2515 = vmatpush1.bf16.msra.mxu0 %v838
  %2516 = vmatprep.subr.bf16.mxu0 %v843
  %2517 = vmatpush1.bf16.msra.mxu0 %v842
  %2518 = vmatprep.subr.bf16.mxu0 %v847
  %2519 = vmatpush1.bf16.msra.mxu0 %v846
  %2520 = vmatprep.subr.bf16.mxu0 %v851
  %2521 = vmatpush1.bf16.msra.mxu0 %v850
  %2522 = vmatprep.subr.bf16.mxu0 %v855
  %2523 = vmatpush1.bf16.msra.mxu0 %v854
  %2524 = vmatprep.subr.bf16.mxu0 %v859
  %2525 = vmatpush1.bf16.msra.mxu0 %v858
  %2526 = vmatprep.subr.bf16.mxu0 %v863
  %2527 = vmatpush1.bf16.msra.mxu0 %v862
  %2528 = vmatprep.subr.bf16.mxu0 %v867
  %2529 = vmatpush1.bf16.msra.mxu0 %v866
  %2530 = vmatprep.subr.bf16.mxu0 %v871
  %2531 = vmatpush1.bf16.msra.mxu0 %v870
  %2532 = vmatprep.subr.bf16.mxu0 %v875
  %2533 = vmatpush1.bf16.msra.mxu0 %v874
  %2534 = vmatprep.subr.bf16.mxu0 %v879
  %2535 = vmatpush1.bf16.msra.mxu0 %v878
  %2536 = vmatprep.mubr.bf16.mxu0 %v2462
  %2537 = vmatmul.mubr.bf16.gmra.mrb[0].mxu0 %v2461
  %v2538 = vpop.f32.mrb[0].mxu0
  %v2539 = vadd.f32 %v615, %v2538
  %v2540 = vpop.f32.mrb[0].mxu0
  %v2541 = vadd.f32 %v619, %v2540
  %v2542 = vpop.f32.mrb[0].mxu0
  %v2543 = vpop.f32.mrb[0].mxu0
  %2544 = vdwg.mxu0
  %v2545 = vxor.u32 %v2498, 2147483648
  %v2546 = vmul.f32 %v2545, 1.442695
  %v2547 = vpow.pop %v2546
  %v2548 = vadd.f32 %v2547, 1.0
  %v2549 = vrcp.pop %v2548
  %v2550 = vmul.f32 1.0, %v2549
  %v2551 = vxor.u32 %v2500, 2147483648
  %v2552 = vmul.f32 %v2551, 1.442695
  %v2553 = vpow.pop %v2552
  %v2554 = vadd.f32 %v2553, 1.0
  %v2555 = vrcp.pop %v2554
  %v2556 = vmul.f32 1.0, %v2555
  %v2557 = vtanh.pop %v2539
  %v2558 = vxor.u32 %v2541, 2147483648
  %v2559 = vmul.f32 %v2558, 1.442695
  %v2560 = vpow.pop %v2559
  %v2561 = vadd.f32 %v2560, 1.0
  %v2562 = vrcp.pop %v2561
  %v2563 = vmul.f32 1.0, %v2562
  %v2564 = vmul.f32 %v2556, %v2349
  %v2565 = vmul.f32 %v2550, %v2557
  %v2566 = vadd.f32 %v2564, %v2565
  %v2567 = vtanh.pop %v2566
  %v2568 = vmul.f32 %v2563, %v2567
  %v2569 = vld [vmem:[%s4] sm:$0x1]
  %v2570 = vld [vmem:[%s3] sm:$0xff]
  %v2571 = vld [vmem:[%s3 + $0x8] sm:$0xff]
  %v2572 = vld [vmem:[%s3 + $0x10] sm:$0xff]
  %v2573 = vld [vmem:[%s3 + $0x18] sm:$0xff]
  %v2574 = vld [vmem:[%s3 + $0x20] sm:$0xff]
  %v2575 = vld [vmem:[%s3 + $0x28] sm:$0xff]
  %v2576 = vld [vmem:[%s3 + $0x30] sm:$0xff]
  %v2577 = vld [vmem:[%s3 + $0x38] sm:$0xff]
  %v2578 = vld [vmem:[%s3 + $0x40] sm:$0xff]
  %v2579 = vld [vmem:[%s3 + $0x48] sm:$0xff]
  %v2580 = vld [vmem:[%s3 + $0x50] sm:$0xff]
  %v2581 = vld [vmem:[%s3 + $0x58] sm:$0xff]
  %v2582 = vld [vmem:[%s3 + $0x60] sm:$0xff]
  %v2583 = vld [vmem:[%s3 + $0x68] sm:$0xff]
  %v2584 = vld [vmem:[%s3 + $0x70] sm:$0xff]
  %v2585 = vld [vmem:[%s3 + $0x78] sm:$0xff]
  %2586 = vmatprep.subr.mxu0 0.0
  %2587 = vmatpush1.msra.mxu0 %v2570
  %2588 = vmatprep.subr.mxu0 0.0
  %2589 = vmatpush1.msra.mxu0 %v2571
  %2590 = vmatprep.subr.mxu0 0.0
  %2591 = vmatpush1.msra.mxu0 %v2572
  %2592 = vmatprep.subr.mxu0 0.0
  %2593 = vmatpush1.msra.mxu0 %v2573
  %2594 = vmatprep.subr.mxu0 0.0
  %2595 = vmatpush1.msra.mxu0 %v2574
  %2596 = vmatprep.subr.mxu0 0.0
  %2597 = vmatpush1.msra.mxu0 %v2575
  %2598 = vmatprep.subr.mxu0 0.0
  %2599 = vmatpush1.msra.mxu0 %v2576
  %2600 = vmatprep.subr.mxu0 0.0
  %2601 = vmatpush1.msra.mxu0 %v2577
  %2602 = vmatprep.subr.mxu0 0.0
  %2603 = vmatpush1.msra.mxu0 %v2578
  %2604 = vmatprep.subr.mxu0 0.0
  %2605 = vmatpush1.msra.mxu0 %v2579
  %2606 = vmatprep.subr.mxu0 0.0
  %2607 = vmatpush1.msra.mxu0 %v2580
  %2608 = vmatprep.subr.mxu0 0.0
  %2609 = vmatpush1.msra.mxu0 %v2581
  %2610 = vmatprep.subr.mxu0 0.0
  %2611 = vmatpush1.msra.mxu0 %v2582
  %2612 = vmatprep.subr.mxu0 0.0
  %2613 = vmatpush1.msra.mxu0 %v2583
  %2614 = vmatprep.subr.mxu0 0.0
  %2615 = vmatpush1.msra.mxu0 %v2584
  %2616 = vmatprep.subr.mxu0 0.0
  %2617 = vmatpush1.msra.mxu0 %v2585
  %2618 = vmatprep.subr.mxu0 0.0
  %2619 = vmatpush1.msra.mxu0 0.0
  %2620 = vmatprep.subr.mxu0 0.0
  %2621 = vmatpush1.msra.mxu0 0.0
  %2622 = vmatprep.subr.mxu0 0.0
  %2623 = vmatpush1.msra.mxu0 0.0
  %2624 = vmatprep.subr.mxu0 0.0
  %2625 = vmatpush1.msra.mxu0 0.0
  %2626 = vmatprep.subr.mxu0 0.0
  %2627 = vmatpush1.msra.mxu0 0.0
  %2628 = vmatprep.subr.mxu0 0.0
  %2629 = vmatpush1.msra.mxu0 0.0
  %2630 = vmatprep.subr.mxu0 0.0
  %2631 = vmatpush1.msra.mxu0 0.0
  %2632 = vmatprep.subr.mxu0 0.0
  %2633 = vmatpush1.msra.mxu0 0.0
  %2634 = vmatprep.subr.mxu0 0.0
  %2635 = vmatpush1.msra.mxu0 0.0
  %2636 = vmatprep.subr.mxu0 0.0
  %2637 = vmatpush1.msra.mxu0 0.0
  %2638 = vmatprep.subr.mxu0 0.0
  %2639 = vmatpush1.msra.mxu0 0.0
  %2640 = vmatprep.subr.mxu0 0.0
  %2641 = vmatpush1.msra.mxu0 0.0
  %2642 = vmatprep.subr.mxu0 0.0
  %2643 = vmatpush1.msra.mxu0 0.0
  %2644 = vmatprep.subr.mxu0 0.0
  %2645 = vmatpush1.msra.mxu0 0.0
  %2646 = vmatprep.subr.mxu0 0.0
  %2647 = vmatpush1.msra.mxu0 0.0
  %2648 = vmatprep.subr.mxu0 0.0
  %2649 = vmatpush1.msra.mxu0 0.0
  %2650 = vmatprep.mubr.f32.mxu0 0.0
  %2651 = vmatmul.mubr.f32.gmra.mrb[0].mxu0 %v2460
  %v2652 = vpop.f32.mrb[0].mxu0
  %v2653 = vadd.f32 0.0, %v2652
  %v2654 = vpop.f32.mrb[0].mxu0
  %2655 = vdwg.mxu0
  %v2656 = vadd.f32 %v2569, %v2653
  %s2657 = scalar_lea.vmem %s3, 128
  %v2658 = vld [vmem:[%s2657] sm:$0xff]
  %v2659 = vld [vmem:[%s2657 + $0x8] sm:$0xff]
  %v2660 = vld [vmem:[%s2657 + $0x10] sm:$0xff]
  %v2661 = vld [vmem:[%s2657 + $0x18] sm:$0xff]
  %v2662 = vld [vmem:[%s2657 + $0x20] sm:$0xff]
  %v2663 = vld [vmem:[%s2657 + $0x28] sm:$0xff]
  %v2664 = vld [vmem:[%s2657 + $0x30] sm:$0xff]
  %v2665 = vld [vmem:[%s2657 + $0x38] sm:$0xff]
  %v2666 = vld [vmem:[%s2657 + $0x40] sm:$0xff]
  %v2667 = vld [vmem:[%s2657 + $0x48] sm:$0xff]
  %v2668 = vld [vmem:[%s2657 + $0x50] sm:$0xff]
  %v2669 = vld [vmem:[%s2657 + $0x58] sm:$0xff]
  %v2670 = vld [vmem:[%s2657 + $0x60] sm:$0xff]
  %v2671 = vld [vmem:[%s2657 + $0x68] sm:$0xff]
  %v2672 = vld [vmem:[%s2657 + $0x70] sm:$0xff]
  %v2673 = vld [vmem:[%s2657 + $0x78] sm:$0xff]
  %v2675 = vrot.slane %v2460, 1
  %2677 = vmatprep.subr.mxu0 0.0
  %2678 = vmatpush1.msra.mxu0 %v2658
  %2679 = vmatprep.subr.mxu0 0.0
  %2680 = vmatpush1.msra.mxu0 %v2659
  %2681 = vmatprep.subr.mxu0 0.0
  %2682 = vmatpush1.msra.mxu0 %v2660
  %2683 = vmatprep.subr.mxu0 0.0
  %2684 = vmatpush1.msra.mxu0 %v2661
  %2685 = vmatprep.subr.mxu0 0.0
  %2686 = vmatpush1.msra.mxu0 %v2662
  %2687 = vmatprep.subr.mxu0 0.0
  %2688 = vmatpush1.msra.mxu0 %v2663
  %2689 = vmatprep.subr.mxu0 0.0
  %2690 = vmatpush1.msra.mxu0 %v2664
  %2691 = vmatprep.subr.mxu0 0.0
  %2692 = vmatpush1.msra.mxu0 %v2665
  %2693 = vmatprep.subr.mxu0 0.0
  %2694 = vmatpush1.msra.mxu0 %v2666
  %2695 = vmatprep.subr.mxu0 0.0
  %2696 = vmatpush1.msra.mxu0 %v2667
  %2697 = vmatprep.subr.mxu0 0.0
  %2698 = vmatpush1.msra.mxu0 %v2668
  %2699 = vmatprep.subr.mxu0 0.0
  %2700 = vmatpush1.msra.mxu0 %v2669
  %2701 = vmatprep.subr.mxu0 0.0
  %2702 = vmatpush1.msra.mxu0 %v2670
  %2703 = vmatprep.subr.mxu0 0.0
  %2704 = vmatpush1.msra.mxu0 %v2671
  %2705 = vmatprep.subr.mxu0 0.0
  %2706 = vmatpush1.msra.mxu0 %v2672
  %2707 = vmatprep.subr.mxu0 0.0
  %2708 = vmatpush1.msra.mxu0 %v2673
  %2709 = vmatprep.subr.mxu0 0.0
  %2710 = vmatpush1.msra.mxu0 0.0
  %2711 = vmatprep.subr.mxu0 0.0
  %2712 = vmatpush1.msra.mxu0 0.0
  %2713 = vmatprep.subr.mxu0 0.0
  %2714 = vmatpush1.msra.mxu0 0.0
  %2715 = vmatprep.subr.mxu0 0.0
  %2716 = vmatpush1.msra.mxu0 0.0
  %2717 = vmatprep.subr.mxu0 0.0
  %2718 = vmatpush1.msra.mxu0 0.0
  %2719 = vmatprep.subr.mxu0 0.0
  %2720 = vmatpush1.msra.mxu0 0.0
  %2721 = vmatprep.subr.mxu0 0.0
  %2722 = vmatpush1.msra.mxu0 0.0
  %2723 = vmatprep.subr.mxu0 0.0
  %2724 = vmatpush1.msra.mxu0 0.0
  %2725 = vmatprep.subr.mxu0 0.0
  %2726 = vmatpush1.msra.mxu0 0.0
  %2727 = vmatprep.subr.mxu0 0.0
  %2728 = vmatpush1.msra.mxu0 0.0
  %2729 = vmatprep.subr.mxu0 0.0
  %2730 = vmatpush1.msra.mxu0 0.0
  %2731 = vmatprep.subr.mxu0 0.0
  %2732 = vmatpush1.msra.mxu0 0.0
  %2733 = vmatprep.subr.mxu0 0.0
  %2734 = vmatpush1.msra.mxu0 0.0
  %2735 = vmatprep.subr.mxu0 0.0
  %2736 = vmatpush1.msra.mxu0 0.0
  %2737 = vmatprep.subr.mxu0 0.0
  %2738 = vmatpush1.msra.mxu0 0.0
  %2739 = vmatprep.subr.mxu0 0.0
  %2740 = vmatpush1.msra.mxu0 0.0
  %2741 = vmatprep.mubr.f32.mxu0 0.0
  %2742 = vmatmul.mubr.f32.gmra.mrb[0].mxu0 %v2675
  %v2743 = vpop.f32.mrb[0].mxu0
  %v2744 = vadd.f32 0.0, %v2743
  %v2745 = vpop.f32.mrb[0].mxu0
  %2746 = vdwg.mxu0
  %v2747 = vadd.f32 %v2656, %v2744
  %s2748 = scalar_lea.vmem %s3, 256
  %v2749 = vld [vmem:[%s2748] sm:$0xff]
  %v2750 = vld [vmem:[%s2748 + $0x8] sm:$0xff]
  %v2751 = vld [vmem:[%s2748 + $0x10] sm:$0xff]
  %v2752 = vld [vmem:[%s2748 + $0x18] sm:$0xff]
  %v2753 = vld [vmem:[%s2748 + $0x20] sm:$0xff]
  %v2754 = vld [vmem:[%s2748 + $0x28] sm:$0xff]
  %v2755 = vld [vmem:[%s2748 + $0x30] sm:$0xff]
  %v2756 = vld [vmem:[%s2748 + $0x38] sm:$0xff]
  %v2757 = vld [vmem:[%s2748 + $0x40] sm:$0xff]
  %v2758 = vld [vmem:[%s2748 + $0x48] sm:$0xff]
  %v2759 = vld [vmem:[%s2748 + $0x50] sm:$0xff]
  %v2760 = vld [vmem:[%s2748 + $0x58] sm:$0xff]
  %v2761 = vld [vmem:[%s2748 + $0x60] sm:$0xff]
  %v2762 = vld [vmem:[%s2748 + $0x68] sm:$0xff]
  %v2763 = vld [vmem:[%s2748 + $0x70] sm:$0xff]
  %v2764 = vld [vmem:[%s2748 + $0x78] sm:$0xff]
  %2765 = vmatprep.subr.mxu0 0.0
  %2766 = vmatpush1.msra.mxu0 %v2749
  %2767 = vmatprep.subr.mxu0 0.0
  %2768 = vmatpush1.msra.mxu0 %v2750
  %2769 = vmatprep.subr.mxu0 0.0
  %2770 = vmatpush1.msra.mxu0 %v2751
  %2771 = vmatprep.subr.mxu0 0.0
  %2772 = vmatpush1.msra.mxu0 %v2752
  %2773 = vmatprep.subr.mxu0 0.0
  %2774 = vmatpush1.msra.mxu0 %v2753
  %2775 = vmatprep.subr.mxu0 0.0
  %2776 = vmatpush1.msra.mxu0 %v2754
  %2777 = vmatprep.subr.mxu0 0.0
  %2778 = vmatpush1.msra.mxu0 %v2755
  %2779 = vmatprep.subr.mxu0 0.0
  %2780 = vmatpush1.msra.mxu0 %v2756
  %2781 = vmatprep.subr.mxu0 0.0
  %2782 = vmatpush1.msra.mxu0 %v2757
  %2783 = vmatprep.subr.mxu0 0.0
  %2784 = vmatpush1.msra.mxu0 %v2758
  %2785 = vmatprep.subr.mxu0 0.0
  %2786 = vmatpush1.msra.mxu0 %v2759
  %2787 = vmatprep.subr.mxu0 0.0
  %2788 = vmatpush1.msra.mxu0 %v2760
  %2789 = vmatprep.subr.mxu0 0.0
  %2790 = vmatpush1.msra.mxu0 %v2761
  %2791 = vmatprep.subr.mxu0 0.0
  %2792 = vmatpush1.msra.mxu0 %v2762
  %2793 = vmatprep.subr.mxu0 0.0
  %2794 = vmatpush1.msra.mxu0 %v2763
  %2795 = vmatprep.subr.mxu0 0.0
  %2796 = vmatpush1.msra.mxu0 %v2764
  %2797 = vmatprep.subr.mxu0 0.0
  %2798 = vmatpush1.msra.mxu0 0.0
  %2799 = vmatprep.subr.mxu0 0.0
  %2800 = vmatpush1.msra.mxu0 0.0
  %2801 = vmatprep.subr.mxu0 0.0
  %2802 = vmatpush1.msra.mxu0 0.0
  %2803 = vmatprep.subr.mxu0 0.0
  %2804 = vmatpush1.msra.mxu0 0.0
  %2805 = vmatprep.subr.mxu0 0.0
  %2806 = vmatpush1.msra.mxu0 0.0
  %2807 = vmatprep.subr.mxu0 0.0
  %2808 = vmatpush1.msra.mxu0 0.0
  %2809 = vmatprep.subr.mxu0 0.0
  %2810 = vmatpush1.msra.mxu0 0.0
  %2811 = vmatprep.subr.mxu0 0.0
  %2812 = vmatpush1.msra.mxu0 0.0
  %2813 = vmatprep.subr.mxu0 0.0
  %2814 = vmatpush1.msra.mxu0 0.0
  %2815 = vmatprep.subr.mxu0 0.0
  %2816 = vmatpush1.msra.mxu0 0.0
  %2817 = vmatprep.subr.mxu0 0.0
  %2818 = vmatpush1.msra.mxu0 0.0
  %2819 = vmatprep.subr.mxu0 0.0
  %2820 = vmatpush1.msra.mxu0 0.0
  %2821 = vmatprep.subr.mxu0 0.0
  %2822 = vmatpush1.msra.mxu0 0.0
  %2823 = vmatprep.subr.mxu0 0.0
  %2824 = vmatpush1.msra.mxu0 0.0
  %2825 = vmatprep.subr.mxu0 0.0
  %2826 = vmatpush1.msra.mxu0 0.0
  %2827 = vmatprep.subr.mxu0 0.0
  %2828 = vmatpush1.msra.mxu0 0.0
  %2829 = vmatprep.mubr.f32.mxu0 0.0
  %2830 = vmatmul.mubr.f32.gmra.mrb[0].mxu0 %v2568
  %v2831 = vpop.f32.mrb[0].mxu0
  %v2832 = vadd.f32 0.0, %v2831
  %v2833 = vpop.f32.mrb[0].mxu0
  %2834 = vdwg.mxu0
  %v2835 = vadd.f32 %v2569, %v2832
  %s2836 = scalar_lea.vmem %s3, 384
  %v2837 = vld [vmem:[%s2836] sm:$0xff]
  %v2838 = vld [vmem:[%s2836 + $0x8] sm:$0xff]
  %v2839 = vld [vmem:[%s2836 + $0x10] sm:$0xff]
  %v2840 = vld [vmem:[%s2836 + $0x18] sm:$0xff]
  %v2841 = vld [vmem:[%s2836 + $0x20] sm:$0xff]
  %v2842 = vld [vmem:[%s2836 + $0x28] sm:$0xff]
  %v2843 = vld [vmem:[%s2836 + $0x30] sm:$0xff]
  %v2844 = vld [vmem:[%s2836 + $0x38] sm:$0xff]
  %v2845 = vld [vmem:[%s2836 + $0x40] sm:$0xff]
  %v2846 = vld [vmem:[%s2836 + $0x48] sm:$0xff]
  %v2847 = vld [vmem:[%s2836 + $0x50] sm:$0xff]
  %v2848 = vld [vmem:[%s2836 + $0x58] sm:$0xff]
  %v2849 = vld [vmem:[%s2836 + $0x60] sm:$0xff]
  %v2850 = vld [vmem:[%s2836 + $0x68] sm:$0xff]
  %v2851 = vld [vmem:[%s2836 + $0x70] sm:$0xff]
  %v2852 = vld [vmem:[%s2836 + $0x78] sm:$0xff]
  %v2854 = vrot.slane %v2568, 1
  %2856 = vmatprep.subr.mxu0 0.0
  %2857 = vmatpush1.msra.mxu0 %v2837
  %2858 = vmatprep.subr.mxu0 0.0
  %2859 = vmatpush1.msra.mxu0 %v2838
  %2860 = vmatprep.subr.mxu0 0.0
  %2861 = vmatpush1.msra.mxu0 %v2839
  %2862 = vmatprep.subr.mxu0 0.0
  %2863 = vmatpush1.msra.mxu0 %v2840
  %2864 = vmatprep.subr.mxu0 0.0
  %2865 = vmatpush1.msra.mxu0 %v2841
  %2866 = vmatprep.subr.mxu0 0.0
  %2867 = vmatpush1.msra.mxu0 %v2842
  %2868 = vmatprep.subr.mxu0 0.0
  %2869 = vmatpush1.msra.mxu0 %v2843
  %2870 = vmatprep.subr.mxu0 0.0
  %2871 = vmatpush1.msra.mxu0 %v2844
  %2872 = vmatprep.subr.mxu0 0.0
  %2873 = vmatpush1.msra.mxu0 %v2845
  %2874 = vmatprep.subr.mxu0 0.0
  %2875 = vmatpush1.msra.mxu0 %v2846
  %2876 = vmatprep.subr.mxu0 0.0
  %2877 = vmatpush1.msra.mxu0 %v2847
  %2878 = vmatprep.subr.mxu0 0.0
  %2879 = vmatpush1.msra.mxu0 %v2848
  %2880 = vmatprep.subr.mxu0 0.0
  %2881 = vmatpush1.msra.mxu0 %v2849
  %2882 = vmatprep.subr.mxu0 0.0
  %2883 = vmatpush1.msra.mxu0 %v2850
  %2884 = vmatprep.subr.mxu0 0.0
  %2885 = vmatpush1.msra.mxu0 %v2851
  %2886 = vmatprep.subr.mxu0 0.0
  %2887 = vmatpush1.msra.mxu0 %v2852
  %2888 = vmatprep.subr.mxu0 0.0
  %2889 = vmatpush1.msra.mxu0 0.0
  %2890 = vmatprep.subr.mxu0 0.0
  %2891 = vmatpush1.msra.mxu0 0.0
  %2892 = vmatprep.subr.mxu0 0.0
  %2893 = vmatpush1.msra.mxu0 0.0
  %2894 = vmatprep.subr.mxu0 0.0
  %2895 = vmatpush1.msra.mxu0 0.0
  %2896 = vmatprep.subr.mxu0 0.0
  %2897 = vmatpush1.msra.mxu0 0.0
  %2898 = vmatprep.subr.mxu0 0.0
  %2899 = vmatpush1.msra.mxu0 0.0
  %2900 = vmatprep.subr.mxu0 0.0
  %2901 = vmatpush1.msra.mxu0 0.0
  %2902 = vmatprep.subr.mxu0 0.0
  %2903 = vmatpush1.msra.mxu0 0.0
  %2904 = vmatprep.subr.mxu0 0.0
  %2905 = vmatpush1.msra.mxu0 0.0
  %2906 = vmatprep.subr.mxu0 0.0
  %2907 = vmatpush1.msra.mxu0 0.0
  %2908 = vmatprep.subr.mxu0 0.0
  %2909 = vmatpush1.msra.mxu0 0.0
  %2910 = vmatprep.subr.mxu0 0.0
  %2911 = vmatpush1.msra.mxu0 0.0
  %2912 = vmatprep.subr.mxu0 0.0
  %2913 = vmatpush1.msra.mxu0 0.0
  %2914 = vmatprep.subr.mxu0 0.0
  %2915 = vmatpush1.msra.mxu0 0.0
  %2916 = vmatprep.subr.mxu0 0.0
  %2917 = vmatpush1.msra.mxu0 0.0
  %2918 = vmatprep.subr.mxu0 0.0
  %2919 = vmatpush1.msra.mxu0 0.0
  %2920 = vmatprep.mubr.f32.mxu0 0.0
  %2921 = vmatmul.mubr.f32.gmra.mrb[0].mxu0 %v2854
  %v2922 = vpop.f32.mrb[0].mxu0
  %v2923 = vadd.f32 0.0, %v2922
  %v2924 = vpop.f32.mrb[0].mxu0
  %2925 = vdwg.mxu0
  %v2926 = vadd.f32 %v2835, %v2923
  %v2928 = vlaneseq
  %v2929 = vshrl.u32 %v2928, 7
  %v2930 = vsub.s32 0, %v2929
  %v2931 = vrot.slane %v2926, %v2930
  %vm2933 = vcmask 1040384
  %v2934 = vsel %vm2933, %v2747, %v2931
  %2935 = vst [vmem:[%s5] sm:$0x3] %v2934
  // Predicated region
  $region22: #{a_call__.1} parent=0 // pred_check
    _
  $region23: #{a_call__.1} parent=0 // pred_check_branch
    %2937 = sbr.rel (0) target = $region25
  $region24: #{a_call__.1} parent=0 // pred_region
    _
  $region25: #{a_call__.1} parent=0 // pred_fallthru
    _
  // Predicated region
  $region26: #{a_call__.1} parent=0 // pred_check
    _
  $region27: #{a_call__.1} parent=0 // pred_check_branch
    %2939 = sbr.rel (0) target = $region29
  $region28: #{a_call__.1} parent=0 // pred_region
    _
  $region29: #{a_call__.1} parent=0 // pred_fallthru
    _

</llo_original>
